<compile_context>
chip_gen: v7x
topology: tpu7x:2x2x1
jax: 0.10.0
libtpu: 0.0.40
codegen_flags: <defaults>
</compile_context>

<pallas_src>
import functools

import jax
import jax.numpy as jnp
import numpy as np
from jax.experimental import pallas as pl
from jax.experimental.pallas import tpu as pltpu


def _round_up(x, m):
    return (x + m - 1) // m * m


# ----------------------------- Pallas kernels ------------------------------ #

def _taps_matmul(xpar_ref, w_ref, *, stride, th, wo, hs):
    """Accumulate the 9 shifted matmuls of a 3x3 conv for one (batch, row-tile).

    xpar_ref: (stride^2 * hs, ws, Kin)  parity-decomposed padded image (resident per batch)
    w_ref:    (9, Kin, CoutP)           BN-scale-folded per-tap weights
    returns   (th*wo, CoutP) f32 accumulator
    """
    kin = xpar_ref.shape[-1]
    coutp = w_ref.shape[-1]
    m = th * wo
    oh0 = pl.program_id(1) * th                              # first output row of this tile
    acc = jnp.zeros((m, coutp), jnp.float32)
    for i in range(3):
        for j in range(3):
            pq = (i % stride) * stride + (j % stride)        # which parity sub-image
            r0 = pq * hs + i // stride                       # static row base within xpar
            patch = xpar_ref[pl.ds(r0 + oh0, th), pl.ds(j // stride, wo), :]
            acc = acc + jnp.dot(patch.reshape(m, kin), w_ref[i * 3 + j],
                                preferred_element_type=jnp.float32)
    return acc


def _conv3x3_bn_kernel(xpar_ref, w_ref, b_ref, o_ref, *, stride, th, wo, hs, relu):
    acc = _taps_matmul(xpar_ref, w_ref, stride=stride, th=th, wo=wo, hs=hs)
    out = acc + b_ref[...]
    if relu:
        out = jnp.maximum(out, 0.0)
    o_ref[...] = out.astype(o_ref.dtype)


def _conv3x3_bn_res_kernel(xpar_ref, w_ref, b_ref, xs_ref, wds_ref, o_ref, *,
                           stride, th, wo, hs, relu):
    acc = _taps_matmul(xpar_ref, w_ref, stride=stride, th=th, wo=wo, hs=hs)
    # fused shortcut: 1x1 downsample conv (BN folded) or identity matrix
    acc = acc + jnp.dot(xs_ref[...], wds_ref[...], preferred_element_type=jnp.float32)
    out = acc + b_ref[...]
    if relu:
        out = jnp.maximum(out, 0.0)
    o_ref[...] = out.astype(o_ref.dtype)


# ------------------------------ pallas_call glue ---------------------------- #

def _pick_row_tile(ho, wo, tm_target):
    """Largest divisor th of ho with th*wo <= tm_target and th*wo % 8 == 0."""
    for th in range(ho, 0, -1):
        if ho % th == 0 and th * wo <= tm_target and (th * wo) % 8 == 0:
            return th
    return ho  # full-extent block (equals array dim -> always a legal block shape)


def conv3x3_bn_act(xpar, w_taps, bias, residual=None, *, stride, n, ho, wo, hs,
                   relu=True, out_dtype=jnp.bfloat16, tm_target=512):
    """Fused 3x3 conv + BN (+ fused shortcut matmul) (+ ReLU).

    xpar:   (N, stride^2*hs, ws, Kin)  bf16 parity-decomposed padded NHWC input
    w_taps: (9, Kin, CoutP)            bf16, BN scale folded
    bias:   (1, CoutP)                 f32 (includes the shortcut's BN bias if residual)
    residual: None or (xs, wds) with xs (N, Ho*Wo, KinRes) bf16, wds (KinRes, CoutP) bf16
    returns (N, Ho*Wo, CoutP) in out_dtype
    """
    pp_hs, ws, kin = xpar.shape[1], xpar.shape[2], xpar.shape[3]
    coutp = w_taps.shape[-1]
    assert w_taps.shape == (9, kin, coutp)
    assert pp_hs == stride * stride * hs

    th = _pick_row_tile(ho, wo, tm_target)
    tm = th * wo
    grid = (n, ho // th)

    in_specs = [
        # full parity-decomposed image of batch b; same block across row tiles -> stays resident
        pl.BlockSpec((None, pp_hs, ws, kin), lambda b, t: (b, 0, 0, 0)),
        pl.BlockSpec((9, kin, coutp), lambda b, t: (0, 0, 0)),      # resident weights
        pl.BlockSpec((1, coutp), lambda b, t: (0, 0)),              # folded bias
    ]
    operands = [xpar, w_taps, bias]

    if residual is not None:
        xs, wds = residual
        kres = xs.shape[-1]
        in_specs += [
            pl.BlockSpec((None, tm, kres), lambda b, t: (b, t, 0)),
            pl.BlockSpec((kres, coutp), lambda b, t: (0, 0)),
        ]
        operands += [xs, wds]
        kernel = functools.partial(_conv3x3_bn_res_kernel, stride=stride, th=th,
                                   wo=wo, hs=hs, relu=relu)
    else:
        kernel = functools.partial(_conv3x3_bn_kernel, stride=stride, th=th,
                                   wo=wo, hs=hs, relu=relu)

    return pl.pallas_call(
        kernel,
        out_shape=jax.ShapeDtypeStruct((n, ho * wo, coutp), out_dtype),
        grid=grid,
        in_specs=in_specs,
        out_specs=pl.BlockSpec((None, tm, coutp), lambda b, t: (b, t, 0)),  # lane-dense stores
        compiler_params=pltpu.CompilerParams(
            dimension_semantics=("parallel", "parallel"),
            vmem_limit_bytes=32 * 1024 * 1024,   # safe on v5e/v6e/v7x; tiny shapes here
        ),
    )(*operands)


# ------------------------------- host helpers ------------------------------- #

def _prep_conv3x3_input(x_nhwc, stride, kin_pad):
    """Spatial pad (conv pad=1), zero-pad channels to kin_pad, and space-to-depth by
    `stride` so the kernel only needs unstrided slices.
    Returns xpar (N, stride^2*hs, ws, kin_pad) bf16 and (ho, wo, hs, ws)."""
    n, h, w, c = x_nhwc.shape
    s = stride
    ho = (h - 1) // s + 1
    wo = (w - 1) // s + 1
    hs = ho + 2 // s
    ws = wo + 2 // s
    xpad = jnp.pad(x_nhwc, ((0, 0), (1, s * hs - h - 1), (1, s * ws - w - 1),
                            (0, kin_pad - c)))
    xpar = xpad.reshape(n, hs, s, ws, s, kin_pad)
    xpar = jnp.transpose(xpar, (0, 2, 4, 1, 3, 5))       # (N, p, q, hs, ws, C)
    xpar = xpar.reshape(n, s * s * hs, ws, kin_pad)      # parity pq = p*s + q, hs rows each
    return xpar.astype(jnp.bfloat16), ho, wo, hs, ws


def _fold_bn(gamma, beta, mean, var, eps=1e-5):
    scale = gamma / jnp.sqrt(var + eps)
    bias = beta - mean * scale
    return scale.astype(jnp.float32), bias.astype(jnp.float32)


def _conv3x3_weights(w_oihw, scale, kin_pad, cout_pad):
    """torch [Cout,Cin,3,3] -> (9, kin_pad, cout_pad) bf16 with BN scale folded in."""
    cout, cin, kh, kw = w_oihw.shape
    w = jnp.transpose(w_oihw, (2, 3, 1, 0)).reshape(kh * kw, cin, cout)
    w = w * scale[None, None, :]
    w = jnp.pad(w, ((0, 0), (0, kin_pad - cin), (0, cout_pad - cout)))
    return w.astype(jnp.bfloat16)


def _conv1x1_weight(w_oihw, scale, kin_pad, cout_pad):
    cout, cin = w_oihw.shape[:2]
    w = jnp.transpose(w_oihw[:, :, 0, 0], (1, 0)) * scale[None, :]
    w = jnp.pad(w, ((0, kin_pad - cin), (0, cout_pad - cout)))
    return w.astype(jnp.bfloat16)


def _pad_bias(b, cout_pad):
    return jnp.pad(b, (0, cout_pad - b.shape[0]))[None, :].astype(jnp.float32)


# ------------------------------ ResNetBlock fwd ------------------------------ #

def resnet_block_forward(x_nchw, params, *, stride, tm_target=512):
    cin = x_nchw.shape[1]
    cout = params["w1"].shape[0]
    cinp = _round_up(cin, 8)         # sublane-friendly contraction dim
    coutp = _round_up(cout, 128)     # lane-dense outputs / full MXU N dim

    x = jnp.transpose(x_nchw, (0, 2, 3, 1)).astype(jnp.float32)   # NHWC
    n = x.shape[0]

    # ---- conv1 (3x3, stride) + bn1 + relu ---------------------------------- #
    s1, b1 = _fold_bn(params["g1"], params["be1"], params["m1"], params["v1"])
    w1 = _conv3x3_weights(params["w1"], s1, cinp, coutp)
    xpar1, ho, wo, hs1, _ = _prep_conv3x3_input(x, stride, cinp)
    y1 = conv3x3_bn_act(xpar1, w1, _pad_bias(b1, coutp), stride=stride, n=n,
                        ho=ho, wo=wo, hs=hs1, relu=True,
                        out_dtype=jnp.bfloat16, tm_target=tm_target)

    # ---- shortcut operands (fused into conv2's kernel) ---------------------- #
    xs = x[:, ::stride, ::stride, :][:, :ho, :wo, :]
    xs = jnp.pad(xs, ((0, 0), (0, 0), (0, 0), (0, cinp - cin)))
    xs = xs.reshape(n, ho * wo, cinp).astype(jnp.bfloat16)
    if stride != 1 or cin != cout:
        sds, bds = _fold_bn(params["gds"], params["beds"], params["mds"], params["vds"])
        wds = _conv1x1_weight(params["wds"], sds, cinp, coutp)
        bres = bds
    else:
        # identity shortcut: residual matmul with an identity matrix, zero bias
        wds = jnp.pad(jnp.eye(cin, dtype=jnp.float32),
                      ((0, cinp - cin), (0, coutp - cin))).astype(jnp.bfloat16)
        bres = jnp.zeros((cout,), jnp.float32)

    # ---- conv2 (3x3, stride 1) + bn2 + shortcut + relu ---------------------- #
    s2, b2 = _fold_bn(params["g2"], params["be2"], params["m2"], params["v2"])
    w2 = _conv3x3_weights(params["w2"], s2, coutp, coutp)
    y1_img = y1.reshape(n, ho, wo, coutp)
    xpar2, ho2, wo2, hs2, _ = _prep_conv3x3_input(y1_img, 1, coutp)
    bias2 = _pad_bias(b2, coutp) + _pad_bias(bres, coutp)   # both biases are pre-ReLU linear
    out = conv3x3_bn_act(xpar2, w2, bias2, residual=(xs, wds), stride=1, n=n,
                         ho=ho2, wo=wo2, hs=hs2, relu=True,
                         out_dtype=jnp.float32, tm_target=tm_target)

    out = out.reshape(n, ho, wo, coutp)[:, :, :, :cout]
    return jnp.transpose(out, (0, 3, 1, 2))                 # back to NCHW


# ------------------------------ pure-JAX reference --------------------------- #

def reference_forward(x_nchw, params, *, stride):
    def conv(x, w, s, pad):
        return jax.lax.conv_general_dilated(
            x, w, (s, s), ((pad, pad), (pad, pad)),
            dimension_numbers=("NCHW", "OIHW", "NCHW"))

    def bn(x, g, b, m, v, eps=1e-5):
        sc = g / jnp.sqrt(v + eps)
        bi = b - m * sc
        return x * sc[None, :, None, None] + bi[None, :, None, None]

    out = jax.nn.relu(bn(conv(x_nchw, params["w1"], stride, 1),
                         params["g1"], params["be1"], params["m1"], params["v1"]))
    out = bn(conv(out, params["w2"], 1, 1),
             params["g2"], params["be2"], params["m2"], params["v2"])
    if "wds" in params:
        res = bn(conv(x_nchw, params["wds"], stride, 0),
                 params["gds"], params["beds"], params["mds"], params["vds"])
    else:
        res = x_nchw
    return jax.nn.relu(out + res)


# ----------------------------------- main ------------------------------------ #

def _make_params(key, cin, cout, with_downsample):
    ks = jax.random.split(key, 16)
    p = dict(
        w1=0.1 * jax.random.normal(ks[0], (cout, cin, 3, 3), jnp.float32),
        g1=1.0 + 0.1 * jax.random.normal(ks[1], (cout,), jnp.float32),
        be1=0.1 * jax.random.normal(ks[2], (cout,), jnp.float32),
        m1=0.1 * jax.random.normal(ks[3], (cout,), jnp.float32),
        v1=jax.random.uniform(ks[4], (cout,), jnp.float32, 0.5, 1.5),
        w2=0.1 * jax.random.normal(ks[5], (cout, cout, 3, 3), jnp.float32),
        g2=1.0 + 0.1 * jax.random.normal(ks[6], (cout,), jnp.float32),
        be2=0.1 * jax.random.normal(ks[7], (cout,), jnp.float32),
        m2=0.1 * jax.random.normal(ks[8], (cout,), jnp.float32),
        v2=jax.random.uniform(ks[9], (cout,), jnp.float32, 0.5, 1.5),
    )
    if with_downsample:
        p.update(
            wds=0.1 * jax.random.normal(ks[10], (cout, cin, 1, 1), jnp.float32),
            gds=1.0 + 0.1 * jax.random.normal(ks[11], (cout,), jnp.float32),
            beds=0.1 * jax.random.normal(ks[12], (cout,), jnp.float32),
            mds=0.1 * jax.random.normal(ks[13], (cout,), jnp.float32),
            vds=jax.random.uniform(ks[14], (cout,), jnp.float32, 0.5, 1.5),
        )
    return p


if __name__ == "__main__":
    k_a, k_b, k_xa, k_xb = jax.random.split(jax.random.PRNGKey(0), 4)

    # Tolerances: bf16 activations/weights with f32 accumulation (deliberate choice).
    ATOL = RTOL = 3e-2

    # Config A: stride-2 downsample block (Cin=4 -> Cout=8), 2 x 4 x 16 x 16 input.
    N, Cin, H, W, Cout, stride = 2, 4, 16, 16, 8, 2
    params_a = _make_params(k_a, Cin, Cout, with_downsample=True)
    x_a = jax.random.normal(k_xa, (N, Cin, H, W), jnp.float32)     # NCHW, like PyTorch
    fwd_a = jax.jit(functools.partial(resnet_block_forward, stride=stride))
    out_a = jax.block_until_ready(fwd_a(x_a, params_a))
    ref_a = jax.block_until_ready(reference_forward(x_a, params_a, stride=stride))
    assert out_a.shape == (N, Cout, H // stride, W // stride), out_a.shape
    np.testing.assert_allclose(np.asarray(out_a), np.asarray(ref_a), atol=ATOL, rtol=RTOL)

    # Config B: stride-1 identity-shortcut block (Cin = Cout = 8), 2 x 8 x 16 x 16 input.
    params_b = _make_params(k_b, 8, 8, with_downsample=False)
    x_b = jax.random.normal(k_xb, (2, 8, 16, 16), jnp.float32)
    fwd_b = jax.jit(functools.partial(resnet_block_forward, stride=1))
    out_b = jax.block_until_ready(fwd_b(x_b, params_b))
    ref_b = jax.block_until_ready(reference_forward(x_b, params_b, stride=1))
    assert out_b.shape == (2, 8, 16, 16), out_b.shape
    np.testing.assert_allclose(np.asarray(out_b), np.asarray(ref_b), atol=ATOL, rtol=RTOL)

    print("KERNEL_OK")
</pallas_src>

<mosaic_0001>
module attributes {stable_mosaic.version = 11 : i64} {
  func.func @_conv3x3_bn_kernel(%arg0: i32, %arg1: i32, %arg2: memref<1x36x9x8xbf16, #tpu.memory_space<vmem>>, %arg3: memref<9x8x128xbf16, #tpu.memory_space<vmem>>, %arg4: memref<1x128xf32, #tpu.memory_space<vmem>>, %arg5: memref<1x64x128xbf16, #tpu.memory_space<vmem>>) attributes {dimension_semantics = [#tpu.dimension_semantics<parallel>, #tpu.dimension_semantics<parallel>], iteration_bounds = array<i64: 2, 1>, scalar_prefetch = 0 : i64, scratch_operands = 0 : i64, tpu.core_type = #tpu.core_type<tc>, window_params = [{transform_indices = @transform_0, window_bounds = array<i64: 1, 36, 9, 8>}, {pipeline_mode = #tpu.pipeline_mode<synchronous>, transform_indices = @transform_1, window_bounds = array<i64: 9, 8, 128>}, {pipeline_mode = #tpu.pipeline_mode<synchronous>, transform_indices = @transform_2, window_bounds = array<i64: 1, 128>}, {transform_indices = @transform_3, window_bounds = array<i64: 1, 64, 128>}]} {
    %c8_i32 = arith.constant 8 : i32
    %0 = arith.muli %arg1, %c8_i32 : i32
    %cst = arith.constant 0.000000e+00 : f32
    %1 = vector.broadcast %cst : f32 to vector<64x128xf32>
    %c0_i32 = arith.constant 0 : i32
    %2 = arith.addi %c0_i32, %0 : i32
    %c0 = arith.constant 0 : index
    %3 = arith.index_cast %2 : i32 to index
    %c0_0 = arith.constant 0 : index
    %c0_1 = arith.constant 0 : index
    %4 = vector.load %arg2[%c0, %3, %c0_0, %c0_1] : memref<1x36x9x8xbf16, #tpu.memory_space<vmem>>, vector<1x8x8x8xbf16>
    %5 = vector.shape_cast %4 : vector<1x8x8x8xbf16> to vector<8x8x8xbf16>
    %6 = vector.shape_cast %5 : vector<8x8x8xbf16> to vector<64x8xbf16>
    %c0_2 = arith.constant 0 : index
    %c0_3 = arith.constant 0 : index
    %c0_4 = arith.constant 0 : index
    %7 = vector.load %arg3[%c0_2, %c0_3, %c0_4] : memref<9x8x128xbf16, #tpu.memory_space<vmem>>, vector<1x8x128xbf16>
    %8 = vector.shape_cast %7 : vector<1x8x128xbf16> to vector<8x128xbf16>
    %cst_5 = arith.constant dense<0.000000e+00> : vector<64x128xf32>
    %9 = tpu.matmul %6, %8, %cst_5 {dimension_numbers = #tpu.dot_dimension_numbers<[1], [0], [0], [1], [0, 0, 1, 1], [], []>} : vector<64x8xbf16>, vector<8x128xbf16>, vector<64x128xf32> -> vector<64x128xf32>
    %10 = arith.addf %1, %9 : vector<64x128xf32>
    %c9_i32 = arith.constant 9 : i32
    %11 = arith.addi %c9_i32, %0 : i32
    %c0_6 = arith.constant 0 : index
    %12 = arith.index_cast %11 : i32 to index
    %c0_7 = arith.constant 0 : index
    %c0_8 = arith.constant 0 : index
    %13 = vector.load %arg2[%c0_6, %12, %c0_7, %c0_8] : memref<1x36x9x8xbf16, #tpu.memory_space<vmem>>, vector<1x8x8x8xbf16>
    %14 = vector.shape_cast %13 : vector<1x8x8x8xbf16> to vector<8x8x8xbf16>
    %15 = vector.shape_cast %14 : vector<8x8x8xbf16> to vector<64x8xbf16>
    %c1 = arith.constant 1 : index
    %c0_9 = arith.constant 0 : index
    %c0_10 = arith.constant 0 : index
    %16 = vector.load %arg3[%c1, %c0_9, %c0_10] : memref<9x8x128xbf16, #tpu.memory_space<vmem>>, vector<1x8x128xbf16>
    %17 = vector.shape_cast %16 : vector<1x8x128xbf16> to vector<8x128xbf16>
    %cst_11 = arith.constant dense<0.000000e+00> : vector<64x128xf32>
    %18 = tpu.matmul %15, %17, %cst_11 {dimension_numbers = #tpu.dot_dimension_numbers<[1], [0], [0], [1], [0, 0, 1, 1], [], []>} : vector<64x8xbf16>, vector<8x128xbf16>, vector<64x128xf32> -> vector<64x128xf32>
    %19 = arith.addf %10, %18 : vector<64x128xf32>
    %c0_i32_12 = arith.constant 0 : i32
    %20 = arith.addi %c0_i32_12, %0 : i32
    %c0_13 = arith.constant 0 : index
    %21 = arith.index_cast %20 : i32 to index
    %c1_14 = arith.constant 1 : index
    %c0_15 = arith.constant 0 : index
    %22 = vector.load %arg2[%c0_13, %21, %c1_14, %c0_15] : memref<1x36x9x8xbf16, #tpu.memory_space<vmem>>, vector<1x8x8x8xbf16>
    %23 = vector.shape_cast %22 : vector<1x8x8x8xbf16> to vector<8x8x8xbf16>
    %24 = vector.shape_cast %23 : vector<8x8x8xbf16> to vector<64x8xbf16>
    %c2 = arith.constant 2 : index
    %c0_16 = arith.constant 0 : index
    %c0_17 = arith.constant 0 : index
    %25 = vector.load %arg3[%c2, %c0_16, %c0_17] : memref<9x8x128xbf16, #tpu.memory_space<vmem>>, vector<1x8x128xbf16>
    %26 = vector.shape_cast %25 : vector<1x8x128xbf16> to vector<8x128xbf16>
    %cst_18 = arith.constant dense<0.000000e+00> : vector<64x128xf32>
    %27 = tpu.matmul %24, %26, %cst_18 {dimension_numbers = #tpu.dot_dimension_numbers<[1], [0], [0], [1], [0, 0, 1, 1], [], []>} : vector<64x8xbf16>, vector<8x128xbf16>, vector<64x128xf32> -> vector<64x128xf32>
    %28 = arith.addf %19, %27 : vector<64x128xf32>
    %c18_i32 = arith.constant 18 : i32
    %29 = arith.addi %c18_i32, %0 : i32
    %c0_19 = arith.constant 0 : index
    %30 = arith.index_cast %29 : i32 to index
    %c0_20 = arith.constant 0 : index
    %c0_21 = arith.constant 0 : index
    %31 = vector.load %arg2[%c0_19, %30, %c0_20, %c0_21] : memref<1x36x9x8xbf16, #tpu.memory_space<vmem>>, vector<1x8x8x8xbf16>
    %32 = vector.shape_cast %31 : vector<1x8x8x8xbf16> to vector<8x8x8xbf16>
    %33 = vector.shape_cast %32 : vector<8x8x8xbf16> to vector<64x8xbf16>
    %c3 = arith.constant 3 : index
    %c0_22 = arith.constant 0 : index
    %c0_23 = arith.constant 0 : index
    %34 = vector.load %arg3[%c3, %c0_22, %c0_23] : memref<9x8x128xbf16, #tpu.memory_space<vmem>>, vector<1x8x128xbf16>
    %35 = vector.shape_cast %34 : vector<1x8x128xbf16> to vector<8x128xbf16>
    %cst_24 = arith.constant dense<0.000000e+00> : vector<64x128xf32>
    %36 = tpu.matmul %33, %35, %cst_24 {dimension_numbers = #tpu.dot_dimension_numbers<[1], [0], [0], [1], [0, 0, 1, 1], [], []>} : vector<64x8xbf16>, vector<8x128xbf16>, vector<64x128xf32> -> vector<64x128xf32>
    %37 = arith.addf %28, %36 : vector<64x128xf32>
    %c27_i32 = arith.constant 27 : i32
    %38 = arith.addi %c27_i32, %0 : i32
    %c0_25 = arith.constant 0 : index
    %39 = arith.index_cast %38 : i32 to index
    %c0_26 = arith.constant 0 : index
    %c0_27 = arith.constant 0 : index
    %40 = vector.load %arg2[%c0_25, %39, %c0_26, %c0_27] : memref<1x36x9x8xbf16, #tpu.memory_space<vmem>>, vector<1x8x8x8xbf16>
    %41 = vector.shape_cast %40 : vector<1x8x8x8xbf16> to vector<8x8x8xbf16>
    %42 = vector.shape_cast %41 : vector<8x8x8xbf16> to vector<64x8xbf16>
    %c4 = arith.constant 4 : index
    %c0_28 = arith.constant 0 : index
    %c0_29 = arith.constant 0 : index
    %43 = vector.load %arg3[%c4, %c0_28, %c0_29] : memref<9x8x128xbf16, #tpu.memory_space<vmem>>, vector<1x8x128xbf16>
    %44 = vector.shape_cast %43 : vector<1x8x128xbf16> to vector<8x128xbf16>
    %cst_30 = arith.constant dense<0.000000e+00> : vector<64x128xf32>
    %45 = tpu.matmul %42, %44, %cst_30 {dimension_numbers = #tpu.dot_dimension_numbers<[1], [0], [0], [1], [0, 0, 1, 1], [], []>} : vector<64x8xbf16>, vector<8x128xbf16>, vector<64x128xf32> -> vector<64x128xf32>
    %46 = arith.addf %37, %45 : vector<64x128xf32>
    %c18_i32_31 = arith.constant 18 : i32
    %47 = arith.addi %c18_i32_31, %0 : i32
    %c0_32 = arith.constant 0 : index
    %48 = arith.index_cast %47 : i32 to index
    %c1_33 = arith.constant 1 : index
    %c0_34 = arith.constant 0 : index
    %49 = vector.load %arg2[%c0_32, %48, %c1_33, %c0_34] : memref<1x36x9x8xbf16, #tpu.memory_space<vmem>>, vector<1x8x8x8xbf16>
    %50 = vector.shape_cast %49 : vector<1x8x8x8xbf16> to vector<8x8x8xbf16>
    %51 = vector.shape_cast %50 : vector<8x8x8xbf16> to vector<64x8xbf16>
    %c5 = arith.constant 5 : index
    %c0_35 = arith.constant 0 : index
    %c0_36 = arith.constant 0 : index
    %52 = vector.load %arg3[%c5, %c0_35, %c0_36] : memref<9x8x128xbf16, #tpu.memory_space<vmem>>, vector<1x8x128xbf16>
    %53 = vector.shape_cast %52 : vector<1x8x128xbf16> to vector<8x128xbf16>
    %cst_37 = arith.constant dense<0.000000e+00> : vector<64x128xf32>
    %54 = tpu.matmul %51, %53, %cst_37 {dimension_numbers = #tpu.dot_dimension_numbers<[1], [0], [0], [1], [0, 0, 1, 1], [], []>} : vector<64x8xbf16>, vector<8x128xbf16>, vector<64x128xf32> -> vector<64x128xf32>
    %55 = arith.addf %46, %54 : vector<64x128xf32>
    %c1_i32 = arith.constant 1 : i32
    %56 = arith.addi %c1_i32, %0 : i32
    %c0_38 = arith.constant 0 : index
    %57 = arith.index_cast %56 : i32 to index
    %c0_39 = arith.constant 0 : index
    %c0_40 = arith.constant 0 : index
    %58 = vector.load %arg2[%c0_38, %57, %c0_39, %c0_40] : memref<1x36x9x8xbf16, #tpu.memory_space<vmem>>, vector<1x8x8x8xbf16>
    %59 = vector.shape_cast %58 : vector<1x8x8x8xbf16> to vector<8x8x8xbf16>
    %60 = vector.shape_cast %59 : vector<8x8x8xbf16> to vector<64x8xbf16>
    %c6 = arith.constant 6 : index
    %c0_41 = arith.constant 0 : index
    %c0_42 = arith.constant 0 : index
    %61 = vector.load %arg3[%c6, %c0_41, %c0_42] : memref<9x8x128xbf16, #tpu.memory_space<vmem>>, vector<1x8x128xbf16>
    %62 = vector.shape_cast %61 : vector<1x8x128xbf16> to vector<8x128xbf16>
    %cst_43 = arith.constant dense<0.000000e+00> : vector<64x128xf32>
    %63 = tpu.matmul %60, %62, %cst_43 {dimension_numbers = #tpu.dot_dimension_numbers<[1], [0], [0], [1], [0, 0, 1, 1], [], []>} : vector<64x8xbf16>, vector<8x128xbf16>, vector<64x128xf32> -> vector<64x128xf32>
    %64 = arith.addf %55, %63 : vector<64x128xf32>
    %c10_i32 = arith.constant 10 : i32
    %65 = arith.addi %c10_i32, %0 : i32
    %c0_44 = arith.constant 0 : index
    %66 = arith.index_cast %65 : i32 to index
    %c0_45 = arith.constant 0 : index
    %c0_46 = arith.constant 0 : index
    %67 = vector.load %arg2[%c0_44, %66, %c0_45, %c0_46] : memref<1x36x9x8xbf16, #tpu.memory_space<vmem>>, vector<1x8x8x8xbf16>
    %68 = vector.shape_cast %67 : vector<1x8x8x8xbf16> to vector<8x8x8xbf16>
    %69 = vector.shape_cast %68 : vector<8x8x8xbf16> to vector<64x8xbf16>
    %c7 = arith.constant 7 : index
    %c0_47 = arith.constant 0 : index
    %c0_48 = arith.constant 0 : index
    %70 = vector.load %arg3[%c7, %c0_47, %c0_48] : memref<9x8x128xbf16, #tpu.memory_space<vmem>>, vector<1x8x128xbf16>
    %71 = vector.shape_cast %70 : vector<1x8x128xbf16> to vector<8x128xbf16>
    %cst_49 = arith.constant dense<0.000000e+00> : vector<64x128xf32>
    %72 = tpu.matmul %69, %71, %cst_49 {dimension_numbers = #tpu.dot_dimension_numbers<[1], [0], [0], [1], [0, 0, 1, 1], [], []>} : vector<64x8xbf16>, vector<8x128xbf16>, vector<64x128xf32> -> vector<64x128xf32>
    %73 = arith.addf %64, %72 : vector<64x128xf32>
    %c1_i32_50 = arith.constant 1 : i32
    %74 = arith.addi %c1_i32_50, %0 : i32
    %c0_51 = arith.constant 0 : index
    %75 = arith.index_cast %74 : i32 to index
    %c1_52 = arith.constant 1 : index
    %c0_53 = arith.constant 0 : index
    %76 = vector.load %arg2[%c0_51, %75, %c1_52, %c0_53] : memref<1x36x9x8xbf16, #tpu.memory_space<vmem>>, vector<1x8x8x8xbf16>
    %77 = vector.shape_cast %76 : vector<1x8x8x8xbf16> to vector<8x8x8xbf16>
    %78 = vector.shape_cast %77 : vector<8x8x8xbf16> to vector<64x8xbf16>
    %c8 = arith.constant 8 : index
    %c0_54 = arith.constant 0 : index
    %c0_55 = arith.constant 0 : index
    %79 = vector.load %arg3[%c8, %c0_54, %c0_55] : memref<9x8x128xbf16, #tpu.memory_space<vmem>>, vector<1x8x128xbf16>
    %80 = vector.shape_cast %79 : vector<1x8x128xbf16> to vector<8x128xbf16>
    %cst_56 = arith.constant dense<0.000000e+00> : vector<64x128xf32>
    %81 = tpu.matmul %78, %80, %cst_56 {dimension_numbers = #tpu.dot_dimension_numbers<[1], [0], [0], [1], [0, 0, 1, 1], [], []>} : vector<64x8xbf16>, vector<8x128xbf16>, vector<64x128xf32> -> vector<64x128xf32>
    %82 = arith.addf %73, %81 : vector<64x128xf32>
    %c0_57 = arith.constant 0 : index
    %c0_58 = arith.constant 0 : index
    %83 = vector.load %arg4[%c0_57, %c0_58] : memref<1x128xf32, #tpu.memory_space<vmem>>, vector<1x128xf32>
    %84 = vector.broadcast %83 : vector<1x128xf32> to vector<64x128xf32>
    %85 = arith.addf %82, %84 : vector<64x128xf32>
    %cst_59 = arith.constant 0.000000e+00 : f32
    %86 = vector.broadcast %cst_59 : f32 to vector<64x128xf32>
    %87 = arith.maximumf %85, %86 : vector<64x128xf32>
    %88 = arith.truncf %87 : vector<64x128xf32> to vector<64x128xbf16>
    %c0_60 = arith.constant 0 : index
    %c0_61 = arith.constant 0 : index
    %c0_62 = arith.constant 0 : index
    %89 = vector.load %arg5[%c0_60, %c0_61, %c0_62] : memref<1x64x128xbf16, #tpu.memory_space<vmem>>, vector<1x64x128xbf16>
    %90 = vector.shape_cast %89 : vector<1x64x128xbf16> to vector<64x128xbf16>
    %91 = vector.shape_cast %88 : vector<64x128xbf16> to vector<1x64x128xbf16>
    tpu.vector_store %arg5[%c0_60, %c0_61, %c0_62], %91 {strides = array<i32>} : memref<1x64x128xbf16, #tpu.memory_space<vmem>>, vector<1x64x128xbf16>,
    return
  }
  func.func @transform_0(%arg0: i32, %arg1: i32) -> (i32, i32, i32, i32) {
    %c0_i32 = arith.constant 0 : i32
    %c0_i32_0 = arith.constant 0 : i32
    %c0_i32_1 = arith.constant 0 : i32
    %c0_i32_2 = arith.constant 0 : i32
    return %arg0, %c0_i32, %c0_i32_0, %c0_i32_1 : i32, i32, i32, i32
  }
  func.func @transform_1(%arg0: i32, %arg1: i32) -> (i32, i32, i32) {
    %c0_i32 = arith.constant 0 : i32
    %c0_i32_0 = arith.constant 0 : i32
    %c0_i32_1 = arith.constant 0 : i32
    %c0_i32_2 = arith.constant 0 : i32
    return %c0_i32, %c0_i32_0, %c0_i32_1 : i32, i32, i32
  }
  func.func @transform_2(%arg0: i32, %arg1: i32) -> (i32, i32) {
    %c0_i32 = arith.constant 0 : i32
    %c0_i32_0 = arith.constant 0 : i32
    %c0_i32_1 = arith.constant 0 : i32
    return %c0_i32, %c0_i32_0 : i32, i32
  }
  func.func @transform_3(%arg0: i32, %arg1: i32) -> (i32, i32, i32) {
    %c0_i32 = arith.constant 0 : i32
    %c0_i32_0 = arith.constant 0 : i32
    return %arg0, %arg1, %c0_i32 : i32, i32, i32
  }
}

module attributes {stable_mosaic.version = 11 : i64} {
  func.func @_conv3x3_bn_res_kernel(%arg0: i32, %arg1: i32, %arg2: memref<1x10x10x128xbf16, #tpu.memory_space<vmem>>, %arg3: memref<9x128x128xbf16, #tpu.memory_space<vmem>>, %arg4: memref<1x128xf32, #tpu.memory_space<vmem>>, %arg5: memref<1x64x8xbf16, #tpu.memory_space<vmem>>, %arg6: memref<8x128xbf16, #tpu.memory_space<vmem>>, %arg7: memref<1x64x128xf32, #tpu.memory_space<vmem>>) attributes {dimension_semantics = [#tpu.dimension_semantics<parallel>, #tpu.dimension_semantics<parallel>], iteration_bounds = array<i64: 2, 1>, scalar_prefetch = 0 : i64, scratch_operands = 0 : i64, tpu.core_type = #tpu.core_type<tc>, window_params = [{transform_indices = @transform_0, window_bounds = array<i64: 1, 10, 10, 128>}, {pipeline_mode = #tpu.pipeline_mode<synchronous>, transform_indices = @transform_1, window_bounds = array<i64: 9, 128, 128>}, {pipeline_mode = #tpu.pipeline_mode<synchronous>, transform_indices = @transform_2, window_bounds = array<i64: 1, 128>}, {transform_indices = @transform_3, window_bounds = array<i64: 1, 64, 8>}, {pipeline_mode = #tpu.pipeline_mode<synchronous>, transform_indices = @transform_4, window_bounds = array<i64: 8, 128>}, {transform_indices = @transform_5, window_bounds = array<i64: 1, 64, 128>}]} {
    %c8_i32 = arith.constant 8 : i32
    %0 = arith.muli %arg1, %c8_i32 : i32
    %cst = arith.constant 0.000000e+00 : f32
    %1 = vector.broadcast %cst : f32 to vector<64x128xf32>
    %c0_i32 = arith.constant 0 : i32
    %2 = arith.addi %c0_i32, %0 : i32
    %c0 = arith.constant 0 : index
    %3 = arith.index_cast %2 : i32 to index
    %c0_0 = arith.constant 0 : index
    %c0_1 = arith.constant 0 : index
    %4 = vector.load %arg2[%c0, %3, %c0_0, %c0_1] : memref<1x10x10x128xbf16, #tpu.memory_space<vmem>>, vector<1x8x8x128xbf16>
    %5 = vector.shape_cast %4 : vector<1x8x8x128xbf16> to vector<8x8x128xbf16>
    %6 = vector.shape_cast %5 : vector<8x8x128xbf16> to vector<64x128xbf16>
    %c0_2 = arith.constant 0 : index
    %c0_3 = arith.constant 0 : index
    %c0_4 = arith.constant 0 : index
    %7 = vector.load %arg3[%c0_2, %c0_3, %c0_4] : memref<9x128x128xbf16, #tpu.memory_space<vmem>>, vector<1x128x128xbf16>
    %8 = vector.shape_cast %7 : vector<1x128x128xbf16> to vector<128x128xbf16>
    %cst_5 = arith.constant dense<0.000000e+00> : vector<64x128xf32>
    %9 = tpu.matmul %6, %8, %cst_5 {dimension_numbers = #tpu.dot_dimension_numbers<[1], [0], [0], [1], [0, 0, 1, 1], [], []>} : vector<64x128xbf16>, vector<128x128xbf16>, vector<64x128xf32> -> vector<64x128xf32>
    %10 = arith.addf %1, %9 : vector<64x128xf32>
    %c0_i32_6 = arith.constant 0 : i32
    %11 = arith.addi %c0_i32_6, %0 : i32
    %c0_7 = arith.constant 0 : index
    %12 = arith.index_cast %11 : i32 to index
    %c1 = arith.constant 1 : index
    %c0_8 = arith.constant 0 : index
    %13 = vector.load %arg2[%c0_7, %12, %c1, %c0_8] : memref<1x10x10x128xbf16, #tpu.memory_space<vmem>>, vector<1x8x8x128xbf16>
    %14 = vector.shape_cast %13 : vector<1x8x8x128xbf16> to vector<8x8x128xbf16>
    %15 = vector.shape_cast %14 : vector<8x8x128xbf16> to vector<64x128xbf16>
    %c1_9 = arith.constant 1 : index
    %c0_10 = arith.constant 0 : index
    %c0_11 = arith.constant 0 : index
    %16 = vector.load %arg3[%c1_9, %c0_10, %c0_11] : memref<9x128x128xbf16, #tpu.memory_space<vmem>>, vector<1x128x128xbf16>
    %17 = vector.shape_cast %16 : vector<1x128x128xbf16> to vector<128x128xbf16>
    %cst_12 = arith.constant dense<0.000000e+00> : vector<64x128xf32>
    %18 = tpu.matmul %15, %17, %cst_12 {dimension_numbers = #tpu.dot_dimension_numbers<[1], [0], [0], [1], [0, 0, 1, 1], [], []>} : vector<64x128xbf16>, vector<128x128xbf16>, vector<64x128xf32> -> vector<64x128xf32>
    %19 = arith.addf %10, %18 : vector<64x128xf32>
    %c0_i32_13 = arith.constant 0 : i32
    %20 = arith.addi %c0_i32_13, %0 : i32
    %c0_14 = arith.constant 0 : index
    %21 = arith.index_cast %20 : i32 to index
    %c2 = arith.constant 2 : index
    %c0_15 = arith.constant 0 : index
    %22 = vector.load %arg2[%c0_14, %21, %c2, %c0_15] : memref<1x10x10x128xbf16, #tpu.memory_space<vmem>>, vector<1x8x8x128xbf16>
    %23 = vector.shape_cast %22 : vector<1x8x8x128xbf16> to vector<8x8x128xbf16>
    %24 = vector.shape_cast %23 : vector<8x8x128xbf16> to vector<64x128xbf16>
    %c2_16 = arith.constant 2 : index
    %c0_17 = arith.constant 0 : index
    %c0_18 = arith.constant 0 : index
    %25 = vector.load %arg3[%c2_16, %c0_17, %c0_18] : memref<9x128x128xbf16, #tpu.memory_space<vmem>>, vector<1x128x128xbf16>
    %26 = vector.shape_cast %25 : vector<1x128x128xbf16> to vector<128x128xbf16>
    %cst_19 = arith.constant dense<0.000000e+00> : vector<64x128xf32>
    %27 = tpu.matmul %24, %26, %cst_19 {dimension_numbers = #tpu.dot_dimension_numbers<[1], [0], [0], [1], [0, 0, 1, 1], [], []>} : vector<64x128xbf16>, vector<128x128xbf16>, vector<64x128xf32> -> vector<64x128xf32>
    %28 = arith.addf %19, %27 : vector<64x128xf32>
    %c1_i32 = arith.constant 1 : i32
    %29 = arith.addi %c1_i32, %0 : i32
    %c0_20 = arith.constant 0 : index
    %30 = arith.index_cast %29 : i32 to index
    %c0_21 = arith.constant 0 : index
    %c0_22 = arith.constant 0 : index
    %31 = vector.load %arg2[%c0_20, %30, %c0_21, %c0_22] : memref<1x10x10x128xbf16, #tpu.memory_space<vmem>>, vector<1x8x8x128xbf16>
    %32 = vector.shape_cast %31 : vector<1x8x8x128xbf16> to vector<8x8x128xbf16>
    %33 = vector.shape_cast %32 : vector<8x8x128xbf16> to vector<64x128xbf16>
    %c3 = arith.constant 3 : index
    %c0_23 = arith.constant 0 : index
    %c0_24 = arith.constant 0 : index
    %34 = vector.load %arg3[%c3, %c0_23, %c0_24] : memref<9x128x128xbf16, #tpu.memory_space<vmem>>, vector<1x128x128xbf16>
    %35 = vector.shape_cast %34 : vector<1x128x128xbf16> to vector<128x128xbf16>
    %cst_25 = arith.constant dense<0.000000e+00> : vector<64x128xf32>
    %36 = tpu.matmul %33, %35, %cst_25 {dimension_numbers = #tpu.dot_dimension_numbers<[1], [0], [0], [1], [0, 0, 1, 1], [], []>} : vector<64x128xbf16>, vector<128x128xbf16>, vector<64x128xf32> -> vector<64x128xf32>
    %37 = arith.addf %28, %36 : vector<64x128xf32>
    %c1_i32_26 = arith.constant 1 : i32
    %38 = arith.addi %c1_i32_26, %0 : i32
    %c0_27 = arith.constant 0 : index
    %39 = arith.index_cast %38 : i32 to index
    %c1_28 = arith.constant 1 : index
    %c0_29 = arith.constant 0 : index
    %40 = vector.load %arg2[%c0_27, %39, %c1_28, %c0_29] : memref<1x10x10x128xbf16, #tpu.memory_space<vmem>>, vector<1x8x8x128xbf16>
    %41 = vector.shape_cast %40 : vector<1x8x8x128xbf16> to vector<8x8x128xbf16>
    %42 = vector.shape_cast %41 : vector<8x8x128xbf16> to vector<64x128xbf16>
    %c4 = arith.constant 4 : index
    %c0_30 = arith.constant 0 : index
    %c0_31 = arith.constant 0 : index
    %43 = vector.load %arg3[%c4, %c0_30, %c0_31] : memref<9x128x128xbf16, #tpu.memory_space<vmem>>, vector<1x128x128xbf16>
    %44 = vector.shape_cast %43 : vector<1x128x128xbf16> to vector<128x128xbf16>
    %cst_32 = arith.constant dense<0.000000e+00> : vector<64x128xf32>
    %45 = tpu.matmul %42, %44, %cst_32 {dimension_numbers = #tpu.dot_dimension_numbers<[1], [0], [0], [1], [0, 0, 1, 1], [], []>} : vector<64x128xbf16>, vector<128x128xbf16>, vector<64x128xf32> -> vector<64x128xf32>
    %46 = arith.addf %37, %45 : vector<64x128xf32>
    %c1_i32_33 = arith.constant 1 : i32
    %47 = arith.addi %c1_i32_33, %0 : i32
    %c0_34 = arith.constant 0 : index
    %48 = arith.index_cast %47 : i32 to index
    %c2_35 = arith.constant 2 : index
    %c0_36 = arith.constant 0 : index
    %49 = vector.load %arg2[%c0_34, %48, %c2_35, %c0_36] : memref<1x10x10x128xbf16, #tpu.memory_space<vmem>>, vector<1x8x8x128xbf16>
    %50 = vector.shape_cast %49 : vector<1x8x8x128xbf16> to vector<8x8x128xbf16>
    %51 = vector.shape_cast %50 : vector<8x8x128xbf16> to vector<64x128xbf16>
    %c5 = arith.constant 5 : index
    %c0_37 = arith.constant 0 : index
    %c0_38 = arith.constant 0 : index
    %52 = vector.load %arg3[%c5, %c0_37, %c0_38] : memref<9x128x128xbf16, #tpu.memory_space<vmem>>, vector<1x128x128xbf16>
    %53 = vector.shape_cast %52 : vector<1x128x128xbf16> to vector<128x128xbf16>
    %cst_39 = arith.constant dense<0.000000e+00> : vector<64x128xf32>
    %54 = tpu.matmul %51, %53, %cst_39 {dimension_numbers = #tpu.dot_dimension_numbers<[1], [0], [0], [1], [0, 0, 1, 1], [], []>} : vector<64x128xbf16>, vector<128x128xbf16>, vector<64x128xf32> -> vector<64x128xf32>
    %55 = arith.addf %46, %54 : vector<64x128xf32>
    %c2_i32 = arith.constant 2 : i32
    %56 = arith.addi %c2_i32, %0 : i32
    %c0_40 = arith.constant 0 : index
    %57 = arith.index_cast %56 : i32 to index
    %c0_41 = arith.constant 0 : index
    %c0_42 = arith.constant 0 : index
    %58 = vector.load %arg2[%c0_40, %57, %c0_41, %c0_42] : memref<1x10x10x128xbf16, #tpu.memory_space<vmem>>, vector<1x8x8x128xbf16>
    %59 = vector.shape_cast %58 : vector<1x8x8x128xbf16> to vector<8x8x128xbf16>
    %60 = vector.shape_cast %59 : vector<8x8x128xbf16> to vector<64x128xbf16>
    %c6 = arith.constant 6 : index
    %c0_43 = arith.constant 0 : index
    %c0_44 = arith.constant 0 : index
    %61 = vector.load %arg3[%c6, %c0_43, %c0_44] : memref<9x128x128xbf16, #tpu.memory_space<vmem>>, vector<1x128x128xbf16>
    %62 = vector.shape_cast %61 : vector<1x128x128xbf16> to vector<128x128xbf16>
    %cst_45 = arith.constant dense<0.000000e+00> : vector<64x128xf32>
    %63 = tpu.matmul %60, %62, %cst_45 {dimension_numbers = #tpu.dot_dimension_numbers<[1], [0], [0], [1], [0, 0, 1, 1], [], []>} : vector<64x128xbf16>, vector<128x128xbf16>, vector<64x128xf32> -> vector<64x128xf32>
    %64 = arith.addf %55, %63 : vector<64x128xf32>
    %c2_i32_46 = arith.constant 2 : i32
    %65 = arith.addi %c2_i32_46, %0 : i32
    %c0_47 = arith.constant 0 : index
    %66 = arith.index_cast %65 : i32 to index
    %c1_48 = arith.constant 1 : index
    %c0_49 = arith.constant 0 : index
    %67 = vector.load %arg2[%c0_47, %66, %c1_48, %c0_49] : memref<1x10x10x128xbf16, #tpu.memory_space<vmem>>, vector<1x8x8x128xbf16>
    %68 = vector.shape_cast %67 : vector<1x8x8x128xbf16> to vector<8x8x128xbf16>
    %69 = vector.shape_cast %68 : vector<8x8x128xbf16> to vector<64x128xbf16>
    %c7 = arith.constant 7 : index
    %c0_50 = arith.constant 0 : index
    %c0_51 = arith.constant 0 : index
    %70 = vector.load %arg3[%c7, %c0_50, %c0_51] : memref<9x128x128xbf16, #tpu.memory_space<vmem>>, vector<1x128x128xbf16>
    %71 = vector.shape_cast %70 : vector<1x128x128xbf16> to vector<128x128xbf16>
    %cst_52 = arith.constant dense<0.000000e+00> : vector<64x128xf32>
    %72 = tpu.matmul %69, %71, %cst_52 {dimension_numbers = #tpu.dot_dimension_numbers<[1], [0], [0], [1], [0, 0, 1, 1], [], []>} : vector<64x128xbf16>, vector<128x128xbf16>, vector<64x128xf32> -> vector<64x128xf32>
    %73 = arith.addf %64, %72 : vector<64x128xf32>
    %c2_i32_53 = arith.constant 2 : i32
    %74 = arith.addi %c2_i32_53, %0 : i32
    %c0_54 = arith.constant 0 : index
    %75 = arith.index_cast %74 : i32 to index
    %c2_55 = arith.constant 2 : index
    %c0_56 = arith.constant 0 : index
    %76 = vector.load %arg2[%c0_54, %75, %c2_55, %c0_56] : memref<1x10x10x128xbf16, #tpu.memory_space<vmem>>, vector<1x8x8x128xbf16>
    %77 = vector.shape_cast %76 : vector<1x8x8x128xbf16> to vector<8x8x128xbf16>
    %78 = vector.shape_cast %77 : vector<8x8x128xbf16> to vector<64x128xbf16>
    %c8 = arith.constant 8 : index
    %c0_57 = arith.constant 0 : index
    %c0_58 = arith.constant 0 : index
    %79 = vector.load %arg3[%c8, %c0_57, %c0_58] : memref<9x128x128xbf16, #tpu.memory_space<vmem>>, vector<1x128x128xbf16>
    %80 = vector.shape_cast %79 : vector<1x128x128xbf16> to vector<128x128xbf16>
    %cst_59 = arith.constant dense<0.000000e+00> : vector<64x128xf32>
    %81 = tpu.matmul %78, %80, %cst_59 {dimension_numbers = #tpu.dot_dimension_numbers<[1], [0], [0], [1], [0, 0, 1, 1], [], []>} : vector<64x128xbf16>, vector<128x128xbf16>, vector<64x128xf32> -> vector<64x128xf32>
    %82 = arith.addf %73, %81 : vector<64x128xf32>
    %c0_60 = arith.constant 0 : index
    %c0_61 = arith.constant 0 : index
    %c0_62 = arith.constant 0 : index
    %83 = vector.load %arg5[%c0_60, %c0_61, %c0_62] : memref<1x64x8xbf16, #tpu.memory_space<vmem>>, vector<1x64x8xbf16>
    %84 = vector.shape_cast %83 : vector<1x64x8xbf16> to vector<64x8xbf16>
    %c0_63 = arith.constant 0 : index
    %c0_64 = arith.constant 0 : index
    %85 = vector.load %arg6[%c0_63, %c0_64] : memref<8x128xbf16, #tpu.memory_space<vmem>>, vector<8x128xbf16>
    %cst_65 = arith.constant dense<0.000000e+00> : vector<64x128xf32>
    %86 = tpu.matmul %84, %85, %cst_65 {dimension_numbers = #tpu.dot_dimension_numbers<[1], [0], [0], [1], [0, 0, 1, 1], [], []>} : vector<64x8xbf16>, vector<8x128xbf16>, vector<64x128xf32> -> vector<64x128xf32>
    %87 = arith.addf %82, %86 : vector<64x128xf32>
    %c0_66 = arith.constant 0 : index
    %c0_67 = arith.constant 0 : index
    %88 = vector.load %arg4[%c0_66, %c0_67] : memref<1x128xf32, #tpu.memory_space<vmem>>, vector<1x128xf32>
    %89 = vector.broadcast %88 : vector<1x128xf32> to vector<64x128xf32>
    %90 = arith.addf %87, %89 : vector<64x128xf32>
    %cst_68 = arith.constant 0.000000e+00 : f32
    %91 = vector.broadcast %cst_68 : f32 to vector<64x128xf32>
    %92 = arith.maximumf %90, %91 : vector<64x128xf32>
    %c0_69 = arith.constant 0 : index
    %c0_70 = arith.constant 0 : index
    %c0_71 = arith.constant 0 : index
    %93 = vector.load %arg7[%c0_69, %c0_70, %c0_71] : memref<1x64x128xf32, #tpu.memory_space<vmem>>, vector<1x64x128xf32>
    %94 = vector.shape_cast %93 : vector<1x64x128xf32> to vector<64x128xf32>
    %95 = vector.shape_cast %92 : vector<64x128xf32> to vector<1x64x128xf32>
    tpu.vector_store %arg7[%c0_69, %c0_70, %c0_71], %95 {strides = array<i32>} : memref<1x64x128xf32, #tpu.memory_space<vmem>>, vector<1x64x128xf32>,
    return
  }
  func.func @transform_0(%arg0: i32, %arg1: i32) -> (i32, i32, i32, i32) {
    %c0_i32 = arith.constant 0 : i32
    %c0_i32_0 = arith.constant 0 : i32
    %c0_i32_1 = arith.constant 0 : i32
    %c0_i32_2 = arith.constant 0 : i32
    return %arg0, %c0_i32, %c0_i32_0, %c0_i32_1 : i32, i32, i32, i32
  }
  func.func @transform_1(%arg0: i32, %arg1: i32) -> (i32, i32, i32) {
    %c0_i32 = arith.constant 0 : i32
    %c0_i32_0 = arith.constant 0 : i32
    %c0_i32_1 = arith.constant 0 : i32
    %c0_i32_2 = arith.constant 0 : i32
    return %c0_i32, %c0_i32_0, %c0_i32_1 : i32, i32, i32
  }
  func.func @transform_2(%arg0: i32, %arg1: i32) -> (i32, i32) {
    %c0_i32 = arith.constant 0 : i32
    %c0_i32_0 = arith.constant 0 : i32
    %c0_i32_1 = arith.constant 0 : i32
    return %c0_i32, %c0_i32_0 : i32, i32
  }
  func.func @transform_3(%arg0: i32, %arg1: i32) -> (i32, i32, i32) {
    %c0_i32 = arith.constant 0 : i32
    %c0_i32_0 = arith.constant 0 : i32
    return %arg0, %arg1, %c0_i32 : i32, i32, i32
  }
  func.func @transform_4(%arg0: i32, %arg1: i32) -> (i32, i32) {
    %c0_i32 = arith.constant 0 : i32
    %c0_i32_0 = arith.constant 0 : i32
    %c0_i32_1 = arith.constant 0 : i32
    return %c0_i32, %c0_i32_0 : i32, i32
  }
  func.func @transform_5(%arg0: i32, %arg1: i32) -> (i32, i32, i32) {
    %c0_i32 = arith.constant 0 : i32
    %c0_i32_0 = arith.constant 0 : i32
    return %arg0, %arg1, %c0_i32 : i32, i32, i32
  }
}

</mosaic_0001>

<llo_original>
// kernel: resnet_block_forward.2
$region0: #{resnet_block_forward.2}
  #allocation0 [shape = 'u32[]', space=smem, size = 0x4, offset = 0x4, fixed_abs, tag = 'smem constant byte address 0x4 - core index']
  #allocation1 [shape = 'u32[144,128]{1,0:T(1,128)}', space=vmem, size = 0x12000, scoped, tag = 'internal scratch']
  %s0 = inlined_call_operand.vmem [shape: bf16[2,36,9,8], index: 0, kind: input, shape index: {}]
  %s1 = inlined_call_operand.vmem [shape: bf16[9,8,128], index: 1, kind: input, shape index: {}]
  %s2 = inlined_call_operand.vmem [shape: f32[1,128], index: 2, kind: input, shape index: {}]
  %s3 = inlined_call_operand.vmem [shape: bf16[2,64,128], index: 3, kind: output, shape index: {}]
  %s4 = sld [smem:[#allocation0]]
  $region45: #{resnet_block_forward.2} parent=0
    _
  %s6 = ssub.s32 1, %s4
  %s7 = scalar_select 0, %s6, %s4
  loop: start=0, step=1, limit=4
  $region2: #{resnet_block_forward.2} parent=0 // loop_pre_header
    _
  $region3: #{resnet_block_forward.2} parent=0 // loop_header
    %s9 = sphi 0, %s13
    %p10 = scmp.ge.s32.totalorder %s9, 4
    %s16 = sphi 0, %s28
    %s17 = sphi 0, %s24
    %s18 = sphi 0, %s16
    %s19 = sphi 0, %s17
    %s20 = sphi 0, %s18
    %s21 = sphi 0, %s19
    %s31 = sphi 0, %s33
    %s34 = sphi 0, %s31
    %s35 = sphi 0, %s34
    %s51 = sphi 0, %s35
    %s55 = sphi 0, %s55
    %s57 = sphi 0, %s55
    %s58 = sphi 0, %s57
    %s72 = sphi 0, %s58
    %s76 = sphi 0, %s76
    %s78 = sphi 0, %s76
    %s79 = sphi 0, %s78
    %s93 = sphi 0, %s79
    %s101 = sphi 0, %s103
    %s104 = sphi 0, %s101
    %s105 = sphi 0, %s104
    %s121 = sphi 0, %s105
  $region4: #{resnet_block_forward.2} parent=0 // loop_header_branch
    %12 = sbr.rel (%p10) target = $region8
  $region5: #{resnet_block_forward.2} parent=0 // loop_body
    %s14 = ssub.s32 %s9, 1
    %s15 = ssub.s32 %s9, 2
    %s22 = sadd.s32 1, %s17
    %p23 = scmp.ge.s32.totalorder %s22, 1
    %s24 = scalar_select %p23, 0, %s22
    %s25 = sadd.s32 1, %s16
    %s26 = scalar_select %p23, %s25, %s16
    %p27 = scmp.ge.s32.totalorder %s26, 2
    %s28 = scalar_select %p27, 0, %s26
    %s29 = ssub.s32 %s16, %s28
    %p30 = scmp.eq.s32.totalorder %s29, 0
    %s32 = sadd.s32 %s31, 1
    %s33 = scalar_select %p30, %s31, %s32
    %p36 = pneg %p30
    %p37 = scmp.eq.s32.totalorder %s9, 1
    %p38 = por %p36, %p37
    %p39 = scmp.ne.s32.totalorder %s31, %s34
    %p40 = scmp.eq.s32.totalorder %s9, 0
    %p41 = por %p39, %p40
    %p42 = scmp.ne.s32.totalorder %s31, %s34
    %p43 = scmp.eq.s32.totalorder %s14, 1
    %p44 = por %p42, %p43
    %p45 = scmp.ne.s32.totalorder %s34, %s35
    %p46 = scmp.eq.s32.totalorder %s14, 0
    %p47 = por %p45, %p46
    %p48 = scmp.ne.s32.totalorder %s34, %s35
    %p49 = scmp.eq.s32.totalorder %s15, 1
    %p50 = por %p48, %p49
    %p52 = scmp.ne.s32.totalorder %s35, %s51
    %p53 = scmp.eq.s32.totalorder %s15, 0
    %p54 = por %p52, %p53
    %s56 = sadd.s32 %s55, 1
    %p59 = scmp.eq.s32.totalorder %s9, 1
    %p60 = scmp.ne.s32.totalorder %s55, %s57
    %p61 = scmp.eq.s32.totalorder %s9, 0
    %p62 = por %p60, %p61
    %p63 = scmp.ne.s32.totalorder %s55, %s57
    %p64 = scmp.eq.s32.totalorder %s14, 1
    %p65 = por %p63, %p64
    %p66 = scmp.ne.s32.totalorder %s57, %s58
    %p67 = scmp.eq.s32.totalorder %s14, 0
    %p68 = por %p66, %p67
    %p69 = scmp.ne.s32.totalorder %s57, %s58
    %p70 = scmp.eq.s32.totalorder %s15, 1
    %p71 = por %p69, %p70
    %p73 = scmp.ne.s32.totalorder %s58, %s72
    %p74 = scmp.eq.s32.totalorder %s15, 0
    %p75 = por %p73, %p74
    %s77 = sadd.s32 %s76, 1
    %p80 = scmp.eq.s32.totalorder %s9, 1
    %p81 = scmp.ne.s32.totalorder %s76, %s78
    %p82 = scmp.eq.s32.totalorder %s9, 0
    %p83 = por %p81, %p82
    %p84 = scmp.ne.s32.totalorder %s76, %s78
    %p85 = scmp.eq.s32.totalorder %s14, 1
    %p86 = por %p84, %p85
    %p87 = scmp.ne.s32.totalorder %s78, %s79
    %p88 = scmp.eq.s32.totalorder %s14, 0
    %p89 = por %p87, %p88
    %p90 = scmp.ne.s32.totalorder %s78, %s79
    %p91 = scmp.eq.s32.totalorder %s15, 1
    %p92 = por %p90, %p91
    %p94 = scmp.ne.s32.totalorder %s79, %s93
    %p95 = scmp.eq.s32.totalorder %s15, 0
    %p96 = por %p94, %p95
    %s97 = ssub.s32 %s16, %s28
    %s98 = ssub.s32 %s17, %s24
    %s99 = sor.u32 %s97, %s98
    %p100 = scmp.eq.s32.totalorder %s99, 0
    %s102 = sadd.s32 %s101, 1
    %s103 = scalar_select %p100, %s101, %s102
    %p106 = pneg %p100
    %p107 = scmp.eq.s32.totalorder %s9, 1
    %p108 = por %p106, %p107
    %p109 = scmp.ne.s32.totalorder %s101, %s104
    %p110 = scmp.eq.s32.totalorder %s9, 0
    %p111 = por %p109, %p110
    %p112 = scmp.ne.s32.totalorder %s101, %s104
    %p113 = scmp.eq.s32.totalorder %s14, 1
    %p114 = por %p112, %p113
    %p115 = scmp.ne.s32.totalorder %s104, %s105
    %p116 = scmp.eq.s32.totalorder %s14, 0
    %p117 = por %p115, %p116
    %p118 = scmp.ne.s32.totalorder %s104, %s105
    %p119 = scmp.eq.s32.totalorder %s15, 1
    %p120 = por %p118, %p119
    %p122 = scmp.ne.s32.totalorder %s105, %s121
    %p123 = scmp.eq.s32.totalorder %s15, 0
    %p124 = por %p122, %p123
    %p125 = scmp.le.s32.totalorder 1, %s9
    %p126 = scmp.lt.s32.totalorder %s9, 3
    %p127 = pnand %p125, %p126
    %p128 = pneg %p127
    // Predicated region
    $region9: #{resnet_block_forward.2} parent=5 // pred_check
      _
    $region10: #{resnet_block_forward.2} parent=5 // pred_check_branch
      %130 = sbr.rel (%p127) target = $region12
    $region11: #{resnet_block_forward.2} parent=5 // pred_region
      %s131 = ssub.s32 %s9, 1
      // Predicated region
      $region13: #{resnet_block_forward.2} parent=11 // pred_check
        %p132 = pneg %p68
      $region14: #{resnet_block_forward.2} parent=11 // pred_check_branch
        %134 = sbr.rel (%p132) target = $region16
      $region15: #{resnet_block_forward.2} parent=11 // pred_region
        _
      $region16: #{resnet_block_forward.2} parent=11 // pred_fallthru
        _
      // Predicated region
      $region17: #{resnet_block_forward.2} parent=11 // pred_check
        %p135 = pneg %p89
      $region18: #{resnet_block_forward.2} parent=11 // pred_check_branch
        %137 = sbr.rel (%p135) target = $region20
      $region19: #{resnet_block_forward.2} parent=11 // pred_region
        _
      $region20: #{resnet_block_forward.2} parent=11 // pred_fallthru
        _
    $region12: #{resnet_block_forward.2} parent=5 // pred_fallthru
      _
    %p138 = scmp.lt.s32.totalorder %s9, 2
    // Predicated region
    $region21: #{resnet_block_forward.2} parent=5 // pred_check
      %p139 = pneg %p138
    $region22: #{resnet_block_forward.2} parent=5 // pred_check_branch
      %141 = sbr.rel (%p139) target = $region24
    $region23: #{resnet_block_forward.2} parent=5 // pred_region
      // Predicated region
      $region25: #{resnet_block_forward.2} parent=23 // pred_check
        %p142 = pneg %p41
      $region26: #{resnet_block_forward.2} parent=23 // pred_check_branch
        %144 = sbr.rel (%p142) target = $region28
      $region27: #{resnet_block_forward.2} parent=23 // pred_region
        %p145 = scmp.lt.s32.totalorder %s16, 1
        %s146 = scalar_select %p145, %s16, 1
        %s147 = smul.addr %s146, 72
        %s148 = smul.addr %s147, 4
        %s149 = scalar_lea.vmem %s0, %s148
      $region28: #{resnet_block_forward.2} parent=23 // pred_fallthru
        _
    $region24: #{resnet_block_forward.2} parent=5 // pred_fallthru
      _
    %p150 = scmp.le.s32.totalorder 1, %s9
    %p151 = scmp.lt.s32.totalorder %s9, 3
    %p152 = pnand %p150, %p151
    %p153 = pneg %p152
    // Predicated region
    $region29: #{resnet_block_forward.2} parent=5 // pred_check
      _
    $region30: #{resnet_block_forward.2} parent=5 // pred_check_branch
      %155 = sbr.rel (%p152) target = $region32
    $region31: #{resnet_block_forward.2} parent=5 // pred_region
      %s156 = ssub.s32 %s9, 1
      %p157 = scmp.lt.s32.totalorder %s18, 1
      %s158 = scalar_select %p157, %s18, 1
      %s159 = smul.addr %s158, 72
      %s160 = smul.addr %s159, 4
      %s161 = scalar_lea.vmem %s0, %s160
      %p162 = pneg %p47
      %p163 = pneg %p44
      %p164 = pneg %p68
      %p165 = pneg %p65
      %p166 = pneg %p89
      %p167 = pneg %p86
      %p168 = pneg %p117
      %p169 = pneg %p114
      %s170 = smul.u32 8, %s19
      %p171 = scmp.lt.s32.totalorder %s18, 1
      %s172 = scalar_select %p171, %s18, 1
      %p173 = scmp.lt.s32.totalorder %s170, 7
      %s174 = scalar_select %p173, %s170, 7
      %s175 = smul.addr %s172, 8
      %s176 = sadd.s32 %s174, %s175
      %s177 = smul.addr %s176, 4
      %s178 = scalar_lea.vmem %s3, %s177
      %p179 = scmp.lt.s32.totalorder %s18, 1
      %s180 = scalar_select %p179, %s18, 1
      %s181 = smul.addr %s180, 72
      %s182 = smul.addr %s181, 4
      %s183 = scalar_lea.vmem %s0, %s182
      %s184 = smul.u32 8, %s19
      %p185 = scmp.lt.s32.totalorder %s18, 1
      %s186 = scalar_select %p185, %s18, 1
      %p187 = scmp.lt.s32.totalorder %s184, 7
      %s188 = scalar_select %p187, %s184, 7
      %s189 = smul.addr %s186, 8
      %s190 = sadd.s32 %s188, %s189
      %s191 = smul.addr %s190, 4
      %s192 = scalar_lea.vmem %s3, %s191
      %s193 = smul.u32 8, %s19
      %s195 = smul.u32 %s19, 8
      %s196 = smul.u32 %s195, 2
      %s197 = smul.addr %s196, 4
      %s198 = scalar_lea.vmem %s183, %s197
      %v199 = vld [vmem:[%s198] sm:$0xf]
      %v200 = vld [vmem:[%s198 + $0x8] sm:$0xf]
      %v201 = vld [vmem:[%s198 + $0x10] sm:$0xf]
      %v202 = vld [vmem:[%s198 + $0x18] sm:$0xf]
      %v203 = vld [vmem:[%s198 + $0x20] sm:$0xf]
      %v204 = vld [vmem:[%s198 + $0x28] sm:$0xf]
      %v205 = vld [vmem:[%s198 + $0x30] sm:$0xf]
      %v206 = vld [vmem:[%s198 + $0x38] sm:$0xf]
      %v207 = vld [vmem:[%s1] sm:$0xf]
      %s208 = sadd.s32 %s195, 9
      %s209 = smul.u32 %s208, 2
      %s210 = smul.addr %s209, 4
      %s211 = scalar_lea.vmem %s183, %s210
      %v212 = vld [vmem:[%s211] sm:$0xf]
      %v213 = vld [vmem:[%s211 + $0x8] sm:$0xf]
      %v214 = vld [vmem:[%s211 + $0x10] sm:$0xf]
      %v215 = vld [vmem:[%s211 + $0x18] sm:$0xf]
      %v216 = vld [vmem:[%s211 + $0x20] sm:$0xf]
      %v217 = vld [vmem:[%s211 + $0x28] sm:$0xf]
      %v218 = vld [vmem:[%s211 + $0x30] sm:$0xf]
      %v219 = vld [vmem:[%s211 + $0x38] sm:$0xf]
      %s220 = scalar_lea.vmem %s1, 4
      %v221 = vld [vmem:[%s220] sm:$0xf]
      %v230 = vunpack.c.l.b16 %v212
      %v231 = vunpack.c.l.b16 %v213
      %v232 = vunpack.c.l.b16 %v214
      %v233 = vunpack.c.l.b16 %v215
      %v234 = vunpack.c.l.b16 %v216
      %v235 = vunpack.c.l.b16 %v217
      %v236 = vunpack.c.l.b16 %v218
      %v237 = vunpack.c.l.b16 %v219
      %v238 = vpack.c.b16 %v231, %v230
      %v239 = vpack.c.b16 %v233, %v232
      %v240 = vpack.c.b16 %v235, %v234
      %v241 = vpack.c.b16 %v237, %v236
      %vm242 = vcmask 64512
      %v244 = vsel %vm242, %v238, 0
      %v247 = vsel %vm242, %v239, 0
      %v250 = vsel %vm242, %v240, 0
      %v253 = vsel %vm242, %v241, 0
      %vm255 = vcmask 1043456
      %v257 = vsel %vm255, %v221, 0
      %259 = vmatprep.subr.bf16.mxu0 0
      %260 = vmatpush1.bf16.msra.mxu0 %v257
      %261 = vmatprep.subr.bf16.mxu0 0
      %262 = vmatpush1.bf16.msra.mxu0 0
      %263 = vmatprep.subr.bf16.mxu0 0
      %264 = vmatpush1.bf16.msra.mxu0 0
      %265 = vmatprep.subr.bf16.mxu0 0
      %266 = vmatpush1.bf16.msra.mxu0 0
      %267 = vmatprep.subr.bf16.mxu0 0
      %268 = vmatpush1.bf16.msra.mxu0 0
      %269 = vmatprep.subr.bf16.mxu0 0
      %270 = vmatpush1.bf16.msra.mxu0 0
      %271 = vmatprep.subr.bf16.mxu0 0
      %272 = vmatpush1.bf16.msra.mxu0 0
      %273 = vmatprep.subr.bf16.mxu0 0
      %274 = vmatpush1.bf16.msra.mxu0 0
      %275 = vmatprep.subr.bf16.mxu0 0
      %276 = vmatpush1.bf16.msra.mxu0 0
      %277 = vmatprep.subr.bf16.mxu0 0
      %278 = vmatpush1.bf16.msra.mxu0 0
      %279 = vmatprep.subr.bf16.mxu0 0
      %280 = vmatpush1.bf16.msra.mxu0 0
      %281 = vmatprep.subr.bf16.mxu0 0
      %282 = vmatpush1.bf16.msra.mxu0 0
      %283 = vmatprep.subr.bf16.mxu0 0
      %284 = vmatpush1.bf16.msra.mxu0 0
      %285 = vmatprep.subr.bf16.mxu0 0
      %286 = vmatpush1.bf16.msra.mxu0 0
      %287 = vmatprep.subr.bf16.mxu0 0
      %288 = vmatpush1.bf16.msra.mxu0 0
      %289 = vmatprep.subr.bf16.mxu0 0
      %290 = vmatpush1.bf16.msra.mxu0 0
      %291 = vmatprep.mubr.bf16.mxu0 0
      %292 = vmatmul.mubr.bf16.gmra.mrb[0].mxu0 %v244
      %v293 = vpop.f32.mrb[0].mxu0
      %v294 = vadd.f32 0.0, %v293
      %v295 = vpop.f32.mrb[0].mxu0
      %v296 = vpop.f32.mrb[0].mxu0
      %v297 = vadd.f32 0.0, %v296
      %v298 = vpop.f32.mrb[0].mxu0
      %299 = vmatprep.mubr.bf16.mxu0 0
      %300 = vmatmul.mubr.bf16.gmra.mrb[0].mxu0 %v247
      %v301 = vpop.f32.mrb[0].mxu0
      %v302 = vadd.f32 0.0, %v301
      %v303 = vpop.f32.mrb[0].mxu0
      %v304 = vpop.f32.mrb[0].mxu0
      %v305 = vadd.f32 0.0, %v304
      %v306 = vpop.f32.mrb[0].mxu0
      %307 = vmatprep.mubr.bf16.mxu0 0
      %308 = vmatmul.mubr.bf16.gmra.mrb[0].mxu0 %v250
      %v309 = vpop.f32.mrb[0].mxu0
      %v310 = vadd.f32 0.0, %v309
      %v311 = vpop.f32.mrb[0].mxu0
      %v312 = vpop.f32.mrb[0].mxu0
      %v313 = vadd.f32 0.0, %v312
      %v314 = vpop.f32.mrb[0].mxu0
      %315 = vmatprep.mubr.bf16.mxu0 0
      %316 = vmatmul.mubr.bf16.gmra.mrb[0].mxu0 %v253
      %v317 = vpop.f32.mrb[0].mxu0
      %v318 = vadd.f32 0.0, %v317
      %v319 = vpop.f32.mrb[0].mxu0
      %v320 = vpop.f32.mrb[0].mxu0
      %v321 = vadd.f32 0.0, %v320
      %v322 = vpop.f32.mrb[0].mxu0
      %323 = vdwg.mxu0
      %v332 = vunpack.c.l.b16 %v199
      %v333 = vunpack.c.l.b16 %v200
      %v334 = vunpack.c.l.b16 %v201
      %v335 = vunpack.c.l.b16 %v202
      %v336 = vunpack.c.l.b16 %v203
      %v337 = vunpack.c.l.b16 %v204
      %v338 = vunpack.c.l.b16 %v205
      %v339 = vunpack.c.l.b16 %v206
      %v340 = vpack.c.b16 %v333, %v332
      %v341 = vpack.c.b16 %v335, %v334
      %v342 = vpack.c.b16 %v337, %v336
      %v343 = vpack.c.b16 %v339, %v338
      %v345 = vsel %vm242, %v340, 0
      %v348 = vsel %vm242, %v341, 0
      %v351 = vsel %vm242, %v342, 0
      %v354 = vsel %vm242, %v343, 0
      %v357 = vsel %vm255, %v207, 0
      %359 = vmatprep.subr.bf16.mxu0 0
      %360 = vmatpush1.bf16.msra.mxu0 %v357
      %361 = vmatprep.subr.bf16.mxu0 0
      %362 = vmatpush1.bf16.msra.mxu0 0
      %363 = vmatprep.subr.bf16.mxu0 0
      %364 = vmatpush1.bf16.msra.mxu0 0
      %365 = vmatprep.subr.bf16.mxu0 0
      %366 = vmatpush1.bf16.msra.mxu0 0
      %367 = vmatprep.subr.bf16.mxu0 0
      %368 = vmatpush1.bf16.msra.mxu0 0
      %369 = vmatprep.subr.bf16.mxu0 0
      %370 = vmatpush1.bf16.msra.mxu0 0
      %371 = vmatprep.subr.bf16.mxu0 0
      %372 = vmatpush1.bf16.msra.mxu0 0
      %373 = vmatprep.subr.bf16.mxu0 0
      %374 = vmatpush1.bf16.msra.mxu0 0
      %375 = vmatprep.subr.bf16.mxu0 0
      %376 = vmatpush1.bf16.msra.mxu0 0
      %377 = vmatprep.subr.bf16.mxu0 0
      %378 = vmatpush1.bf16.msra.mxu0 0
      %379 = vmatprep.subr.bf16.mxu0 0
      %380 = vmatpush1.bf16.msra.mxu0 0
      %381 = vmatprep.subr.bf16.mxu0 0
      %382 = vmatpush1.bf16.msra.mxu0 0
      %383 = vmatprep.subr.bf16.mxu0 0
      %384 = vmatpush1.bf16.msra.mxu0 0
      %385 = vmatprep.subr.bf16.mxu0 0
      %386 = vmatpush1.bf16.msra.mxu0 0
      %387 = vmatprep.subr.bf16.mxu0 0
      %388 = vmatpush1.bf16.msra.mxu0 0
      %389 = vmatprep.subr.bf16.mxu0 0
      %390 = vmatpush1.bf16.msra.mxu0 0
      %391 = vmatprep.mubr.bf16.mxu0 0
      %392 = vmatmul.mubr.bf16.gmra.mrb[0].mxu0 %v345
      %v393 = vpop.f32.mrb[0].mxu0
      %v394 = vadd.f32 %v294, %v393
      %v395 = vpop.f32.mrb[0].mxu0
      %v396 = vpop.f32.mrb[0].mxu0
      %v397 = vadd.f32 %v297, %v396
      %v398 = vpop.f32.mrb[0].mxu0
      %399 = vmatprep.mubr.bf16.mxu0 0
      %400 = vmatmul.mubr.bf16.gmra.mrb[0].mxu0 %v348
      %v401 = vpop.f32.mrb[0].mxu0
      %v402 = vadd.f32 %v302, %v401
      %v403 = vpop.f32.mrb[0].mxu0
      %v404 = vpop.f32.mrb[0].mxu0
      %v405 = vadd.f32 %v305, %v404
      %v406 = vpop.f32.mrb[0].mxu0
      %407 = vmatprep.mubr.bf16.mxu0 0
      %408 = vmatmul.mubr.bf16.gmra.mrb[0].mxu0 %v351
      %v409 = vpop.f32.mrb[0].mxu0
      %v410 = vadd.f32 %v310, %v409
      %v411 = vpop.f32.mrb[0].mxu0
      %v412 = vpop.f32.mrb[0].mxu0
      %v413 = vadd.f32 %v313, %v412
      %v414 = vpop.f32.mrb[0].mxu0
      %415 = vmatprep.mubr.bf16.mxu0 0
      %416 = vmatmul.mubr.bf16.gmra.mrb[0].mxu0 %v354
      %v417 = vpop.f32.mrb[0].mxu0
      %v418 = vadd.f32 %v318, %v417
      %v419 = vpop.f32.mrb[0].mxu0
      %v420 = vpop.f32.mrb[0].mxu0
      %v421 = vadd.f32 %v321, %v420
      %v422 = vpop.f32.mrb[0].mxu0
      %423 = vdwg.mxu0
      %v424 = vld [vmem:[%s198] sm:$0xf]
      %v425 = vld [vmem:[%s198 + $0x4] sm:$0x1]
      %v426 = vld [vmem:[%s198 + $0x8] sm:$0xf]
      %v427 = vld [vmem:[%s198 + $0xc] sm:$0x1]
      %v428 = vld [vmem:[%s198 + $0x10] sm:$0xf]
      %v429 = vld [vmem:[%s198 + $0x14] sm:$0x1]
      %v430 = vld [vmem:[%s198 + $0x18] sm:$0xf]
      %v431 = vld [vmem:[%s198 + $0x1c] sm:$0x1]
      %v432 = vld [vmem:[%s198 + $0x20] sm:$0xf]
      %v433 = vld [vmem:[%s198 + $0x24] sm:$0x1]
      %v434 = vld [vmem:[%s198 + $0x28] sm:$0xf]
      %v435 = vld [vmem:[%s198 + $0x2c] sm:$0x1]
      %v436 = vld [vmem:[%s198 + $0x30] sm:$0xf]
      %v437 = vld [vmem:[%s198 + $0x34] sm:$0x1]
      %v438 = vld [vmem:[%s198 + $0x38] sm:$0xf]
      %v439 = vld [vmem:[%s198 + $0x3c] sm:$0x1]
      %vm440 = vsmask.f32 3328
      %vm441 = vsmask.f32 7440
      %vm442 = vmor %vm440, %vm441
      %v444 = vshrl.u32 %v424, 16
      %v446 = vrot.slane %v444, 4
      %v447 = vshll.u32 %v424, 16
      %v449 = vrot.slane %v447, 5
      %v450 = vor.u32 %v446, %v449
      %v451 = vrot.slane %v450, 4
      %v453 = vshll.u32 %v425, 16
      %v455 = vrot.slane %v453, 5
      %v456 = vsel %vm442, %v451, %v455
      %v458 = vshrl.u32 %v426, 16
      %v460 = vrot.slane %v458, 4
      %v461 = vshll.u32 %v426, 16
      %v463 = vrot.slane %v461, 5
      %v464 = vor.u32 %v460, %v463
      %v465 = vrot.slane %v464, 4
      %v467 = vshll.u32 %v427, 16
      %v469 = vrot.slane %v467, 5
      %v470 = vsel %vm442, %v465, %v469
      %v472 = vshrl.u32 %v428, 16
      %v474 = vrot.slane %v472, 4
      %v475 = vshll.u32 %v428, 16
      %v477 = vrot.slane %v475, 5
      %v478 = vor.u32 %v474, %v477
      %v479 = vrot.slane %v478, 4
      %v481 = vshll.u32 %v429, 16
      %v483 = vrot.slane %v481, 5
      %v484 = vsel %vm442, %v479, %v483
      %v486 = vshrl.u32 %v430, 16
      %v488 = vrot.slane %v486, 4
      %v489 = vshll.u32 %v430, 16
      %v491 = vrot.slane %v489, 5
      %v492 = vor.u32 %v488, %v491
      %v493 = vrot.slane %v492, 4
      %v495 = vshll.u32 %v431, 16
      %v497 = vrot.slane %v495, 5
      %v498 = vsel %vm442, %v493, %v497
      %v500 = vshrl.u32 %v432, 16
      %v502 = vrot.slane %v500, 4
      %v503 = vshll.u32 %v432, 16
      %v505 = vrot.slane %v503, 5
      %v506 = vor.u32 %v502, %v505
      %v507 = vrot.slane %v506, 4
      %v509 = vshll.u32 %v433, 16
      %v511 = vrot.slane %v509, 5
      %v512 = vsel %vm442, %v507, %v511
      %v514 = vshrl.u32 %v434, 16
      %v516 = vrot.slane %v514, 4
      %v517 = vshll.u32 %v434, 16
      %v519 = vrot.slane %v517, 5
      %v520 = vor.u32 %v516, %v519
      %v521 = vrot.slane %v520, 4
      %v523 = vshll.u32 %v435, 16
      %v525 = vrot.slane %v523, 5
      %v526 = vsel %vm442, %v521, %v525
      %v528 = vshrl.u32 %v436, 16
      %v530 = vrot.slane %v528, 4
      %v531 = vshll.u32 %v436, 16
      %v533 = vrot.slane %v531, 5
      %v534 = vor.u32 %v530, %v533
      %v535 = vrot.slane %v534, 4
      %v537 = vshll.u32 %v437, 16
      %v539 = vrot.slane %v537, 5
      %v540 = vsel %vm442, %v535, %v539
      %v542 = vshrl.u32 %v438, 16
      %v544 = vrot.slane %v542, 4
      %v545 = vshll.u32 %v438, 16
      %v547 = vrot.slane %v545, 5
      %v548 = vor.u32 %v544, %v547
      %v549 = vrot.slane %v548, 4
      %v551 = vshll.u32 %v439, 16
      %v553 = vrot.slane %v551, 5
      %v554 = vsel %vm442, %v549, %v553
      %s555 = scalar_lea.vmem %s1, 8
      %v556 = vld [vmem:[%s555] sm:$0xf]
      %v557 = vunpack.c.l.b16 %v456
      %v558 = vunpack.c.l.b16 %v470
      %v559 = vunpack.c.l.b16 %v484
      %v560 = vunpack.c.l.b16 %v498
      %v561 = vunpack.c.l.b16 %v512
      %v562 = vunpack.c.l.b16 %v526
      %v563 = vunpack.c.l.b16 %v540
      %v564 = vunpack.c.l.b16 %v554
      %v565 = vpack.c.b16 %v558, %v557
      %v566 = vpack.c.b16 %v560, %v559
      %v567 = vpack.c.b16 %v562, %v561
      %v568 = vpack.c.b16 %v564, %v563
      %v570 = vsel %vm242, %v565, 0
      %v573 = vsel %vm242, %v566, 0
      %v576 = vsel %vm242, %v567, 0
      %v579 = vsel %vm242, %v568, 0
      %v582 = vsel %vm255, %v556, 0
      %584 = vmatprep.subr.bf16.mxu0 0
      %585 = vmatpush1.bf16.msra.mxu0 %v582
      %586 = vmatprep.subr.bf16.mxu0 0
      %587 = vmatpush1.bf16.msra.mxu0 0
      %588 = vmatprep.subr.bf16.mxu0 0
      %589 = vmatpush1.bf16.msra.mxu0 0
      %590 = vmatprep.subr.bf16.mxu0 0
      %591 = vmatpush1.bf16.msra.mxu0 0
      %592 = vmatprep.subr.bf16.mxu0 0
      %593 = vmatpush1.bf16.msra.mxu0 0
      %594 = vmatprep.subr.bf16.mxu0 0
      %595 = vmatpush1.bf16.msra.mxu0 0
      %596 = vmatprep.subr.bf16.mxu0 0
      %597 = vmatpush1.bf16.msra.mxu0 0
      %598 = vmatprep.subr.bf16.mxu0 0
      %599 = vmatpush1.bf16.msra.mxu0 0
      %600 = vmatprep.subr.bf16.mxu0 0
      %601 = vmatpush1.bf16.msra.mxu0 0
      %602 = vmatprep.subr.bf16.mxu0 0
      %603 = vmatpush1.bf16.msra.mxu0 0
      %604 = vmatprep.subr.bf16.mxu0 0
      %605 = vmatpush1.bf16.msra.mxu0 0
      %606 = vmatprep.subr.bf16.mxu0 0
      %607 = vmatpush1.bf16.msra.mxu0 0
      %608 = vmatprep.subr.bf16.mxu0 0
      %609 = vmatpush1.bf16.msra.mxu0 0
      %610 = vmatprep.subr.bf16.mxu0 0
      %611 = vmatpush1.bf16.msra.mxu0 0
      %612 = vmatprep.subr.bf16.mxu0 0
      %613 = vmatpush1.bf16.msra.mxu0 0
      %614 = vmatprep.subr.bf16.mxu0 0
      %615 = vmatpush1.bf16.msra.mxu0 0
      %616 = vmatprep.mubr.bf16.mxu0 0
      %617 = vmatmul.mubr.bf16.gmra.mrb[0].mxu0 %v570
      %v618 = vpop.f32.mrb[0].mxu0
      %v619 = vadd.f32 0.0, %v618
      %v620 = vpop.f32.mrb[0].mxu0
      %v621 = vpop.f32.mrb[0].mxu0
      %v622 = vadd.f32 0.0, %v621
      %v623 = vpop.f32.mrb[0].mxu0
      %624 = vmatprep.mubr.bf16.mxu0 0
      %625 = vmatmul.mubr.bf16.gmra.mrb[0].mxu0 %v573
      %v626 = vpop.f32.mrb[0].mxu0
      %v627 = vadd.f32 0.0, %v626
      %v628 = vpop.f32.mrb[0].mxu0
      %v629 = vpop.f32.mrb[0].mxu0
      %v630 = vadd.f32 0.0, %v629
      %v631 = vpop.f32.mrb[0].mxu0
      %632 = vmatprep.mubr.bf16.mxu0 0
      %633 = vmatmul.mubr.bf16.gmra.mrb[0].mxu0 %v576
      %v634 = vpop.f32.mrb[0].mxu0
      %v635 = vadd.f32 0.0, %v634
      %v636 = vpop.f32.mrb[0].mxu0
      %v637 = vpop.f32.mrb[0].mxu0
      %v638 = vadd.f32 0.0, %v637
      %v639 = vpop.f32.mrb[0].mxu0
      %640 = vmatprep.mubr.bf16.mxu0 0
      %641 = vmatmul.mubr.bf16.gmra.mrb[0].mxu0 %v579
      %v642 = vpop.f32.mrb[0].mxu0
      %v643 = vadd.f32 0.0, %v642
      %v644 = vpop.f32.mrb[0].mxu0
      %v645 = vpop.f32.mrb[0].mxu0
      %v646 = vadd.f32 0.0, %v645
      %v647 = vpop.f32.mrb[0].mxu0
      %648 = vdwg.mxu0
      %v649 = vadd.f32 %v394, %v619
      %v650 = vadd.f32 %v397, %v622
      %v651 = vadd.f32 %v402, %v627
      %v652 = vadd.f32 %v405, %v630
      %v653 = vadd.f32 %v410, %v635
      %v654 = vadd.f32 %v413, %v638
      %v655 = vadd.f32 %v418, %v643
      %v656 = vadd.f32 %v421, %v646
      %s657 = sadd.s32 %s195, 18
      %s658 = smul.u32 %s657, 2
      %s659 = smul.addr %s658, 4
      %s660 = scalar_lea.vmem %s183, %s659
      %v661 = vld [vmem:[%s660] sm:$0xf]
      %v662 = vld [vmem:[%s660 + $0x8] sm:$0xf]
      %v663 = vld [vmem:[%s660 + $0x10] sm:$0xf]
      %v664 = vld [vmem:[%s660 + $0x18] sm:$0xf]
      %v665 = vld [vmem:[%s660 + $0x20] sm:$0xf]
      %v666 = vld [vmem:[%s660 + $0x28] sm:$0xf]
      %v667 = vld [vmem:[%s660 + $0x30] sm:$0xf]
      %v668 = vld [vmem:[%s660 + $0x38] sm:$0xf]
      %s669 = scalar_lea.vmem %s1, 12
      %v670 = vld [vmem:[%s669] sm:$0xf]
      %v679 = vunpack.c.l.b16 %v661
      %v680 = vunpack.c.l.b16 %v662
      %v681 = vunpack.c.l.b16 %v663
      %v682 = vunpack.c.l.b16 %v664
      %v683 = vunpack.c.l.b16 %v665
      %v684 = vunpack.c.l.b16 %v666
      %v685 = vunpack.c.l.b16 %v667
      %v686 = vunpack.c.l.b16 %v668
      %v687 = vpack.c.b16 %v680, %v679
      %v688 = vpack.c.b16 %v682, %v681
      %v689 = vpack.c.b16 %v684, %v683
      %v690 = vpack.c.b16 %v686, %v685
      %v692 = vsel %vm242, %v687, 0
      %v695 = vsel %vm242, %v688, 0
      %v698 = vsel %vm242, %v689, 0
      %v701 = vsel %vm242, %v690, 0
      %v704 = vsel %vm255, %v670, 0
      %706 = vmatprep.subr.bf16.mxu0 0
      %707 = vmatpush1.bf16.msra.mxu0 %v704
      %708 = vmatprep.subr.bf16.mxu0 0
      %709 = vmatpush1.bf16.msra.mxu0 0
      %710 = vmatprep.subr.bf16.mxu0 0
      %711 = vmatpush1.bf16.msra.mxu0 0
      %712 = vmatprep.subr.bf16.mxu0 0
      %713 = vmatpush1.bf16.msra.mxu0 0
      %714 = vmatprep.subr.bf16.mxu0 0
      %715 = vmatpush1.bf16.msra.mxu0 0
      %716 = vmatprep.subr.bf16.mxu0 0
      %717 = vmatpush1.bf16.msra.mxu0 0
      %718 = vmatprep.subr.bf16.mxu0 0
      %719 = vmatpush1.bf16.msra.mxu0 0
      %720 = vmatprep.subr.bf16.mxu0 0
      %721 = vmatpush1.bf16.msra.mxu0 0
      %722 = vmatprep.subr.bf16.mxu0 0
      %723 = vmatpush1.bf16.msra.mxu0 0
      %724 = vmatprep.subr.bf16.mxu0 0
      %725 = vmatpush1.bf16.msra.mxu0 0
      %726 = vmatprep.subr.bf16.mxu0 0
      %727 = vmatpush1.bf16.msra.mxu0 0
      %728 = vmatprep.subr.bf16.mxu0 0
      %729 = vmatpush1.bf16.msra.mxu0 0
      %730 = vmatprep.subr.bf16.mxu0 0
      %731 = vmatpush1.bf16.msra.mxu0 0
      %732 = vmatprep.subr.bf16.mxu0 0
      %733 = vmatpush1.bf16.msra.mxu0 0
      %734 = vmatprep.subr.bf16.mxu0 0
      %735 = vmatpush1.bf16.msra.mxu0 0
      %736 = vmatprep.subr.bf16.mxu0 0
      %737 = vmatpush1.bf16.msra.mxu0 0
      %738 = vmatprep.mubr.bf16.mxu0 0
      %739 = vmatmul.mubr.bf16.gmra.mrb[0].mxu0 %v692
      %v740 = vpop.f32.mrb[0].mxu0
      %v741 = vadd.f32 0.0, %v740
      %v742 = vpop.f32.mrb[0].mxu0
      %v743 = vpop.f32.mrb[0].mxu0
      %v744 = vadd.f32 0.0, %v743
      %v745 = vpop.f32.mrb[0].mxu0
      %746 = vmatprep.mubr.bf16.mxu0 0
      %747 = vmatmul.mubr.bf16.gmra.mrb[0].mxu0 %v695
      %v748 = vpop.f32.mrb[0].mxu0
      %v749 = vadd.f32 0.0, %v748
      %v750 = vpop.f32.mrb[0].mxu0
      %v751 = vpop.f32.mrb[0].mxu0
      %v752 = vadd.f32 0.0, %v751
      %v753 = vpop.f32.mrb[0].mxu0
      %754 = vmatprep.mubr.bf16.mxu0 0
      %755 = vmatmul.mubr.bf16.gmra.mrb[0].mxu0 %v698
      %v756 = vpop.f32.mrb[0].mxu0
      %v757 = vadd.f32 0.0, %v756
      %v758 = vpop.f32.mrb[0].mxu0
      %v759 = vpop.f32.mrb[0].mxu0
      %v760 = vadd.f32 0.0, %v759
      %v761 = vpop.f32.mrb[0].mxu0
      %762 = vmatprep.mubr.bf16.mxu0 0
      %763 = vmatmul.mubr.bf16.gmra.mrb[0].mxu0 %v701
      %v764 = vpop.f32.mrb[0].mxu0
      %v765 = vadd.f32 0.0, %v764
      %v766 = vpop.f32.mrb[0].mxu0
      %v767 = vpop.f32.mrb[0].mxu0
      %v768 = vadd.f32 0.0, %v767
      %v769 = vpop.f32.mrb[0].mxu0
      %770 = vdwg.mxu0
      %v771 = vadd.f32 %v649, %v741
      %v772 = vadd.f32 %v650, %v744
      %v773 = vadd.f32 %v651, %v749
      %v774 = vadd.f32 %v652, %v752
      %v775 = vadd.f32 %v653, %v757
      %v776 = vadd.f32 %v654, %v760
      %v777 = vadd.f32 %v655, %v765
      %v778 = vadd.f32 %v656, %v768
      %s779 = sadd.s32 %s195, 27
      %s780 = smul.u32 %s779, 2
      %s781 = smul.addr %s780, 4
      %s782 = scalar_lea.vmem %s183, %s781
      %v783 = vld [vmem:[%s782] sm:$0xf]
      %v784 = vld [vmem:[%s782 + $0x8] sm:$0xf]
      %v785 = vld [vmem:[%s782 + $0x10] sm:$0xf]
      %v786 = vld [vmem:[%s782 + $0x18] sm:$0xf]
      %v787 = vld [vmem:[%s782 + $0x20] sm:$0xf]
      %v788 = vld [vmem:[%s782 + $0x28] sm:$0xf]
      %v789 = vld [vmem:[%s782 + $0x30] sm:$0xf]
      %v790 = vld [vmem:[%s782 + $0x38] sm:$0xf]
      %s791 = scalar_lea.vmem %s1, 16
      %v792 = vld [vmem:[%s791] sm:$0xf]
      %v801 = vunpack.c.l.b16 %v783
      %v802 = vunpack.c.l.b16 %v784
      %v803 = vunpack.c.l.b16 %v785
      %v804 = vunpack.c.l.b16 %v786
      %v805 = vunpack.c.l.b16 %v787
      %v806 = vunpack.c.l.b16 %v788
      %v807 = vunpack.c.l.b16 %v789
      %v808 = vunpack.c.l.b16 %v790
      %v809 = vpack.c.b16 %v802, %v801
      %v810 = vpack.c.b16 %v804, %v803
      %v811 = vpack.c.b16 %v806, %v805
      %v812 = vpack.c.b16 %v808, %v807
      %v814 = vsel %vm242, %v809, 0
      %v817 = vsel %vm242, %v810, 0
      %v820 = vsel %vm242, %v811, 0
      %v823 = vsel %vm242, %v812, 0
      %v826 = vsel %vm255, %v792, 0
      %828 = vmatprep.subr.bf16.mxu0 0
      %829 = vmatpush1.bf16.msra.mxu0 %v826
      %830 = vmatprep.subr.bf16.mxu0 0
      %831 = vmatpush1.bf16.msra.mxu0 0
      %832 = vmatprep.subr.bf16.mxu0 0
      %833 = vmatpush1.bf16.msra.mxu0 0
      %834 = vmatprep.subr.bf16.mxu0 0
      %835 = vmatpush1.bf16.msra.mxu0 0
      %836 = vmatprep.subr.bf16.mxu0 0
      %837 = vmatpush1.bf16.msra.mxu0 0
      %838 = vmatprep.subr.bf16.mxu0 0
      %839 = vmatpush1.bf16.msra.mxu0 0
      %840 = vmatprep.subr.bf16.mxu0 0
      %841 = vmatpush1.bf16.msra.mxu0 0
      %842 = vmatprep.subr.bf16.mxu0 0
      %843 = vmatpush1.bf16.msra.mxu0 0
      %844 = vmatprep.subr.bf16.mxu0 0
      %845 = vmatpush1.bf16.msra.mxu0 0
      %846 = vmatprep.subr.bf16.mxu0 0
      %847 = vmatpush1.bf16.msra.mxu0 0
      %848 = vmatprep.subr.bf16.mxu0 0
      %849 = vmatpush1.bf16.msra.mxu0 0
      %850 = vmatprep.subr.bf16.mxu0 0
      %851 = vmatpush1.bf16.msra.mxu0 0
      %852 = vmatprep.subr.bf16.mxu0 0
      %853 = vmatpush1.bf16.msra.mxu0 0
      %854 = vmatprep.subr.bf16.mxu0 0
      %855 = vmatpush1.bf16.msra.mxu0 0
      %856 = vmatprep.subr.bf16.mxu0 0
      %857 = vmatpush1.bf16.msra.mxu0 0
      %858 = vmatprep.subr.bf16.mxu0 0
      %859 = vmatpush1.bf16.msra.mxu0 0
      %860 = vmatprep.mubr.bf16.mxu0 0
      %861 = vmatmul.mubr.bf16.gmra.mrb[0].mxu0 %v814
      %v862 = vpop.f32.mrb[0].mxu0
      %v863 = vadd.f32 0.0, %v862
      %v864 = vpop.f32.mrb[0].mxu0
      %v865 = vpop.f32.mrb[0].mxu0
      %v866 = vadd.f32 0.0, %v865
      %v867 = vpop.f32.mrb[0].mxu0
      %868 = vmatprep.mubr.bf16.mxu0 0
      %869 = vmatmul.mubr.bf16.gmra.mrb[0].mxu0 %v817
      %v870 = vpop.f32.mrb[0].mxu0
      %v871 = vadd.f32 0.0, %v870
      %v872 = vpop.f32.mrb[0].mxu0
      %v873 = vpop.f32.mrb[0].mxu0
      %v874 = vadd.f32 0.0, %v873
      %v875 = vpop.f32.mrb[0].mxu0
      %876 = vmatprep.mubr.bf16.mxu0 0
      %877 = vmatmul.mubr.bf16.gmra.mrb[0].mxu0 %v820
      %v878 = vpop.f32.mrb[0].mxu0
      %v879 = vadd.f32 0.0, %v878
      %v880 = vpop.f32.mrb[0].mxu0
      %v881 = vpop.f32.mrb[0].mxu0
      %v882 = vadd.f32 0.0, %v881
      %v883 = vpop.f32.mrb[0].mxu0
      %884 = vmatprep.mubr.bf16.mxu0 0
      %885 = vmatmul.mubr.bf16.gmra.mrb[0].mxu0 %v823
      %v886 = vpop.f32.mrb[0].mxu0
      %v887 = vadd.f32 0.0, %v886
      %v888 = vpop.f32.mrb[0].mxu0
      %v889 = vpop.f32.mrb[0].mxu0
      %v890 = vadd.f32 0.0, %v889
      %v891 = vpop.f32.mrb[0].mxu0
      %892 = vdwg.mxu0
      %v893 = vadd.f32 %v771, %v863
      %v894 = vadd.f32 %v772, %v866
      %v895 = vadd.f32 %v773, %v871
      %v896 = vadd.f32 %v774, %v874
      %v897 = vadd.f32 %v775, %v879
      %v898 = vadd.f32 %v776, %v882
      %v899 = vadd.f32 %v777, %v887
      %v900 = vadd.f32 %v778, %v890
      %v901 = vld [vmem:[%s660] sm:$0xf]
      %v902 = vld [vmem:[%s660 + $0x4] sm:$0x1]
      %v903 = vld [vmem:[%s660 + $0x8] sm:$0xf]
      %v904 = vld [vmem:[%s660 + $0xc] sm:$0x1]
      %v905 = vld [vmem:[%s660 + $0x10] sm:$0xf]
      %v906 = vld [vmem:[%s660 + $0x14] sm:$0x1]
      %v907 = vld [vmem:[%s660 + $0x18] sm:$0xf]
      %v908 = vld [vmem:[%s660 + $0x1c] sm:$0x1]
      %v909 = vld [vmem:[%s660 + $0x20] sm:$0xf]
      %v910 = vld [vmem:[%s660 + $0x24] sm:$0x1]
      %v911 = vld [vmem:[%s660 + $0x28] sm:$0xf]
      %v912 = vld [vmem:[%s660 + $0x2c] sm:$0x1]
      %v913 = vld [vmem:[%s660 + $0x30] sm:$0xf]
      %v914 = vld [vmem:[%s660 + $0x34] sm:$0x1]
      %v915 = vld [vmem:[%s660 + $0x38] sm:$0xf]
      %v916 = vld [vmem:[%s660 + $0x3c] sm:$0x1]
      %v918 = vshrl.u32 %v901, 16
      %v920 = vrot.slane %v918, 4
      %v921 = vshll.u32 %v901, 16
      %v923 = vrot.slane %v921, 5
      %v924 = vor.u32 %v920, %v923
      %v925 = vrot.slane %v924, 4
      %v927 = vshll.u32 %v902, 16
      %v929 = vrot.slane %v927, 5
      %v930 = vsel %vm442, %v925, %v929
      %v932 = vshrl.u32 %v903, 16
      %v934 = vrot.slane %v932, 4
      %v935 = vshll.u32 %v903, 16
      %v937 = vrot.slane %v935, 5
      %v938 = vor.u32 %v934, %v937
      %v939 = vrot.slane %v938, 4
      %v941 = vshll.u32 %v904, 16
      %v943 = vrot.slane %v941, 5
      %v944 = vsel %vm442, %v939, %v943
      %v946 = vshrl.u32 %v905, 16
      %v948 = vrot.slane %v946, 4
      %v949 = vshll.u32 %v905, 16
      %v951 = vrot.slane %v949, 5
      %v952 = vor.u32 %v948, %v951
      %v953 = vrot.slane %v952, 4
      %v955 = vshll.u32 %v906, 16
      %v957 = vrot.slane %v955, 5
      %v958 = vsel %vm442, %v953, %v957
      %v960 = vshrl.u32 %v907, 16
      %v962 = vrot.slane %v960, 4
      %v963 = vshll.u32 %v907, 16
      %v965 = vrot.slane %v963, 5
      %v966 = vor.u32 %v962, %v965
      %v967 = vrot.slane %v966, 4
      %v969 = vshll.u32 %v908, 16
      %v971 = vrot.slane %v969, 5
      %v972 = vsel %vm442, %v967, %v971
      %v974 = vshrl.u32 %v909, 16
      %v976 = vrot.slane %v974, 4
      %v977 = vshll.u32 %v909, 16
      %v979 = vrot.slane %v977, 5
      %v980 = vor.u32 %v976, %v979
      %v981 = vrot.slane %v980, 4
      %v983 = vshll.u32 %v910, 16
      %v985 = vrot.slane %v983, 5
      %v986 = vsel %vm442, %v981, %v985
      %v988 = vshrl.u32 %v911, 16
      %v990 = vrot.slane %v988, 4
      %v991 = vshll.u32 %v911, 16
      %v993 = vrot.slane %v991, 5
      %v994 = vor.u32 %v990, %v993
      %v995 = vrot.slane %v994, 4
      %v997 = vshll.u32 %v912, 16
      %v999 = vrot.slane %v997, 5
      %v1000 = vsel %vm442, %v995, %v999
      %v1002 = vshrl.u32 %v913, 16
      %v1004 = vrot.slane %v1002, 4
      %v1005 = vshll.u32 %v913, 16
      %v1007 = vrot.slane %v1005, 5
      %v1008 = vor.u32 %v1004, %v1007
      %v1009 = vrot.slane %v1008, 4
      %v1011 = vshll.u32 %v914, 16
      %v1013 = vrot.slane %v1011, 5
      %v1014 = vsel %vm442, %v1009, %v1013
      %v1016 = vshrl.u32 %v915, 16
      %v1018 = vrot.slane %v1016, 4
      %v1019 = vshll.u32 %v915, 16
      %v1021 = vrot.slane %v1019, 5
      %v1022 = vor.u32 %v1018, %v1021
      %v1023 = vrot.slane %v1022, 4
      %v1025 = vshll.u32 %v916, 16
      %v1027 = vrot.slane %v1025, 5
      %v1028 = vsel %vm442, %v1023, %v1027
      %s1029 = scalar_lea.vmem %s1, 20
      %v1030 = vld [vmem:[%s1029] sm:$0xf]
      %v1031 = vunpack.c.l.b16 %v930
      %v1032 = vunpack.c.l.b16 %v944
      %v1033 = vunpack.c.l.b16 %v958
      %v1034 = vunpack.c.l.b16 %v972
      %v1035 = vunpack.c.l.b16 %v986
      %v1036 = vunpack.c.l.b16 %v1000
      %v1037 = vunpack.c.l.b16 %v1014
      %v1038 = vunpack.c.l.b16 %v1028
      %v1039 = vpack.c.b16 %v1032, %v1031
      %v1040 = vpack.c.b16 %v1034, %v1033
      %v1041 = vpack.c.b16 %v1036, %v1035
      %v1042 = vpack.c.b16 %v1038, %v1037
      %v1044 = vsel %vm242, %v1039, 0
      %v1047 = vsel %vm242, %v1040, 0
      %v1050 = vsel %vm242, %v1041, 0
      %v1053 = vsel %vm242, %v1042, 0
      %v1056 = vsel %vm255, %v1030, 0
      %1058 = vmatprep.subr.bf16.mxu0 0
      %1059 = vmatpush1.bf16.msra.mxu0 %v1056
      %1060 = vmatprep.subr.bf16.mxu0 0
      %1061 = vmatpush1.bf16.msra.mxu0 0
      %1062 = vmatprep.subr.bf16.mxu0 0
      %1063 = vmatpush1.bf16.msra.mxu0 0
      %1064 = vmatprep.subr.bf16.mxu0 0
      %1065 = vmatpush1.bf16.msra.mxu0 0
      %1066 = vmatprep.subr.bf16.mxu0 0
      %1067 = vmatpush1.bf16.msra.mxu0 0
      %1068 = vmatprep.subr.bf16.mxu0 0
      %1069 = vmatpush1.bf16.msra.mxu0 0
      %1070 = vmatprep.subr.bf16.mxu0 0
      %1071 = vmatpush1.bf16.msra.mxu0 0
      %1072 = vmatprep.subr.bf16.mxu0 0
      %1073 = vmatpush1.bf16.msra.mxu0 0
      %1074 = vmatprep.subr.bf16.mxu0 0
      %1075 = vmatpush1.bf16.msra.mxu0 0
      %1076 = vmatprep.subr.bf16.mxu0 0
      %1077 = vmatpush1.bf16.msra.mxu0 0
      %1078 = vmatprep.subr.bf16.mxu0 0
      %1079 = vmatpush1.bf16.msra.mxu0 0
      %1080 = vmatprep.subr.bf16.mxu0 0
      %1081 = vmatpush1.bf16.msra.mxu0 0
      %1082 = vmatprep.subr.bf16.mxu0 0
      %1083 = vmatpush1.bf16.msra.mxu0 0
      %1084 = vmatprep.subr.bf16.mxu0 0
      %1085 = vmatpush1.bf16.msra.mxu0 0
      %1086 = vmatprep.subr.bf16.mxu0 0
      %1087 = vmatpush1.bf16.msra.mxu0 0
      %1088 = vmatprep.subr.bf16.mxu0 0
      %1089 = vmatpush1.bf16.msra.mxu0 0
      %1090 = vmatprep.mubr.bf16.mxu0 0
      %1091 = vmatmul.mubr.bf16.gmra.mrb[0].mxu0 %v1044
      %v1092 = vpop.f32.mrb[0].mxu0
      %v1093 = vadd.f32 0.0, %v1092
      %v1094 = vpop.f32.mrb[0].mxu0
      %v1095 = vpop.f32.mrb[0].mxu0
      %v1096 = vadd.f32 0.0, %v1095
      %v1097 = vpop.f32.mrb[0].mxu0
      %1098 = vmatprep.mubr.bf16.mxu0 0
      %1099 = vmatmul.mubr.bf16.gmra.mrb[0].mxu0 %v1047
      %v1100 = vpop.f32.mrb[0].mxu0
      %v1101 = vadd.f32 0.0, %v1100
      %v1102 = vpop.f32.mrb[0].mxu0
      %v1103 = vpop.f32.mrb[0].mxu0
      %v1104 = vadd.f32 0.0, %v1103
      %v1105 = vpop.f32.mrb[0].mxu0
      %1106 = vmatprep.mubr.bf16.mxu0 0
      %1107 = vmatmul.mubr.bf16.gmra.mrb[0].mxu0 %v1050
      %v1108 = vpop.f32.mrb[0].mxu0
      %v1109 = vadd.f32 0.0, %v1108
      %v1110 = vpop.f32.mrb[0].mxu0
      %v1111 = vpop.f32.mrb[0].mxu0
      %v1112 = vadd.f32 0.0, %v1111
      %v1113 = vpop.f32.mrb[0].mxu0
      %1114 = vmatprep.mubr.bf16.mxu0 0
      %1115 = vmatmul.mubr.bf16.gmra.mrb[0].mxu0 %v1053
      %v1116 = vpop.f32.mrb[0].mxu0
      %v1117 = vadd.f32 0.0, %v1116
      %v1118 = vpop.f32.mrb[0].mxu0
      %v1119 = vpop.f32.mrb[0].mxu0
      %v1120 = vadd.f32 0.0, %v1119
      %v1121 = vpop.f32.mrb[0].mxu0
      %1122 = vdwg.mxu0
      %v1123 = vadd.f32 %v893, %v1093
      %v1124 = vadd.f32 %v894, %v1096
      %v1125 = vadd.f32 %v895, %v1101
      %v1126 = vadd.f32 %v896, %v1104
      %v1127 = vadd.f32 %v897, %v1109
      %v1128 = vadd.f32 %v898, %v1112
      %v1129 = vadd.f32 %v899, %v1117
      %v1130 = vadd.f32 %v900, %v1120
      %s1131 = sadd.s32 %s195, 1
      %s1132 = smul.u32 %s1131, 2
      %s1133 = smul.addr %s1132, 4
      %s1134 = scalar_lea.vmem %s183, %s1133
      %v1135 = vld [vmem:[%s1134] sm:$0xf]
      %v1136 = vld [vmem:[%s1134 + $0x8] sm:$0xf]
      %v1137 = vld [vmem:[%s1134 + $0x10] sm:$0xf]
      %v1138 = vld [vmem:[%s1134 + $0x18] sm:$0xf]
      %v1139 = vld [vmem:[%s1134 + $0x20] sm:$0xf]
      %v1140 = vld [vmem:[%s1134 + $0x28] sm:$0xf]
      %v1141 = vld [vmem:[%s1134 + $0x30] sm:$0xf]
      %v1142 = vld [vmem:[%s1134 + $0x38] sm:$0xf]
      %s1143 = scalar_lea.vmem %s1, 24
      %v1144 = vld [vmem:[%s1143] sm:$0xf]
      %v1153 = vunpack.c.l.b16 %v1135
      %v1154 = vunpack.c.l.b16 %v1136
      %v1155 = vunpack.c.l.b16 %v1137
      %v1156 = vunpack.c.l.b16 %v1138
      %v1157 = vunpack.c.l.b16 %v1139
      %v1158 = vunpack.c.l.b16 %v1140
      %v1159 = vunpack.c.l.b16 %v1141
      %v1160 = vunpack.c.l.b16 %v1142
      %v1161 = vpack.c.b16 %v1154, %v1153
      %v1162 = vpack.c.b16 %v1156, %v1155
      %v1163 = vpack.c.b16 %v1158, %v1157
      %v1164 = vpack.c.b16 %v1160, %v1159
      %v1166 = vsel %vm242, %v1161, 0
      %v1169 = vsel %vm242, %v1162, 0
      %v1172 = vsel %vm242, %v1163, 0
      %v1175 = vsel %vm242, %v1164, 0
      %v1178 = vsel %vm255, %v1144, 0
      %1180 = vmatprep.subr.bf16.mxu0 0
      %1181 = vmatpush1.bf16.msra.mxu0 %v1178
      %1182 = vmatprep.subr.bf16.mxu0 0
      %1183 = vmatpush1.bf16.msra.mxu0 0
      %1184 = vmatprep.subr.bf16.mxu0 0
      %1185 = vmatpush1.bf16.msra.mxu0 0
      %1186 = vmatprep.subr.bf16.mxu0 0
      %1187 = vmatpush1.bf16.msra.mxu0 0
      %1188 = vmatprep.subr.bf16.mxu0 0
      %1189 = vmatpush1.bf16.msra.mxu0 0
      %1190 = vmatprep.subr.bf16.mxu0 0
      %1191 = vmatpush1.bf16.msra.mxu0 0
      %1192 = vmatprep.subr.bf16.mxu0 0
      %1193 = vmatpush1.bf16.msra.mxu0 0
      %1194 = vmatprep.subr.bf16.mxu0 0
      %1195 = vmatpush1.bf16.msra.mxu0 0
      %1196 = vmatprep.subr.bf16.mxu0 0
      %1197 = vmatpush1.bf16.msra.mxu0 0
      %1198 = vmatprep.subr.bf16.mxu0 0
      %1199 = vmatpush1.bf16.msra.mxu0 0
      %1200 = vmatprep.subr.bf16.mxu0 0
      %1201 = vmatpush1.bf16.msra.mxu0 0
      %1202 = vmatprep.subr.bf16.mxu0 0
      %1203 = vmatpush1.bf16.msra.mxu0 0
      %1204 = vmatprep.subr.bf16.mxu0 0
      %1205 = vmatpush1.bf16.msra.mxu0 0
      %1206 = vmatprep.subr.bf16.mxu0 0
      %1207 = vmatpush1.bf16.msra.mxu0 0
      %1208 = vmatprep.subr.bf16.mxu0 0
      %1209 = vmatpush1.bf16.msra.mxu0 0
      %1210 = vmatprep.subr.bf16.mxu0 0
      %1211 = vmatpush1.bf16.msra.mxu0 0
      %1212 = vmatprep.mubr.bf16.mxu0 0
      %1213 = vmatmul.mubr.bf16.gmra.mrb[0].mxu0 %v1166
      %v1214 = vpop.f32.mrb[0].mxu0
      %v1215 = vadd.f32 0.0, %v1214
      %v1216 = vpop.f32.mrb[0].mxu0
      %v1217 = vpop.f32.mrb[0].mxu0
      %v1218 = vadd.f32 0.0, %v1217
      %v1219 = vpop.f32.mrb[0].mxu0
      %1220 = vmatprep.mubr.bf16.mxu0 0
      %1221 = vmatmul.mubr.bf16.gmra.mrb[0].mxu0 %v1169
      %v1222 = vpop.f32.mrb[0].mxu0
      %v1223 = vadd.f32 0.0, %v1222
      %v1224 = vpop.f32.mrb[0].mxu0
      %v1225 = vpop.f32.mrb[0].mxu0
      %v1226 = vadd.f32 0.0, %v1225
      %v1227 = vpop.f32.mrb[0].mxu0
      %1228 = vmatprep.mubr.bf16.mxu0 0
      %1229 = vmatmul.mubr.bf16.gmra.mrb[0].mxu0 %v1172
      %v1230 = vpop.f32.mrb[0].mxu0
      %v1231 = vadd.f32 0.0, %v1230
      %v1232 = vpop.f32.mrb[0].mxu0
      %v1233 = vpop.f32.mrb[0].mxu0
      %v1234 = vadd.f32 0.0, %v1233
      %v1235 = vpop.f32.mrb[0].mxu0
      %1236 = vmatprep.mubr.bf16.mxu0 0
      %1237 = vmatmul.mubr.bf16.gmra.mrb[0].mxu0 %v1175
      %v1238 = vpop.f32.mrb[0].mxu0
      %v1239 = vadd.f32 0.0, %v1238
      %v1240 = vpop.f32.mrb[0].mxu0
      %v1241 = vpop.f32.mrb[0].mxu0
      %v1242 = vadd.f32 0.0, %v1241
      %v1243 = vpop.f32.mrb[0].mxu0
      %1244 = vdwg.mxu0
      %v1245 = vadd.f32 %v1123, %v1215
      %v1246 = vadd.f32 %v1124, %v1218
      %v1247 = vadd.f32 %v1125, %v1223
      %v1248 = vadd.f32 %v1126, %v1226
      %v1249 = vadd.f32 %v1127, %v1231
      %v1250 = vadd.f32 %v1128, %v1234
      %v1251 = vadd.f32 %v1129, %v1239
      %v1252 = vadd.f32 %v1130, %v1242
      %s1253 = sadd.s32 %s195, 10
      %s1254 = smul.u32 %s1253, 2
      %s1255 = smul.addr %s1254, 4
      %s1256 = scalar_lea.vmem %s183, %s1255
      %v1257 = vld [vmem:[%s1256] sm:$0xf]
      %v1258 = vld [vmem:[%s1256 + $0x8] sm:$0xf]
      %v1259 = vld [vmem:[%s1256 + $0x10] sm:$0xf]
      %v1260 = vld [vmem:[%s1256 + $0x18] sm:$0xf]
      %v1261 = vld [vmem:[%s1256 + $0x20] sm:$0xf]
      %v1262 = vld [vmem:[%s1256 + $0x28] sm:$0xf]
      %v1263 = vld [vmem:[%s1256 + $0x30] sm:$0xf]
      %v1264 = vld [vmem:[%s1256 + $0x38] sm:$0xf]
      %s1265 = scalar_lea.vmem %s1, 28
      %v1266 = vld [vmem:[%s1265] sm:$0xf]
      %v1275 = vunpack.c.l.b16 %v1257
      %v1276 = vunpack.c.l.b16 %v1258
      %v1277 = vunpack.c.l.b16 %v1259
      %v1278 = vunpack.c.l.b16 %v1260
      %v1279 = vunpack.c.l.b16 %v1261
      %v1280 = vunpack.c.l.b16 %v1262
      %v1281 = vunpack.c.l.b16 %v1263
      %v1282 = vunpack.c.l.b16 %v1264
      %v1283 = vpack.c.b16 %v1276, %v1275
      %v1284 = vpack.c.b16 %v1278, %v1277
      %v1285 = vpack.c.b16 %v1280, %v1279
      %v1286 = vpack.c.b16 %v1282, %v1281
      %v1288 = vsel %vm242, %v1283, 0
      %v1291 = vsel %vm242, %v1284, 0
      %v1294 = vsel %vm242, %v1285, 0
      %v1297 = vsel %vm242, %v1286, 0
      %v1300 = vsel %vm255, %v1266, 0
      %1302 = vmatprep.subr.bf16.mxu0 0
      %1303 = vmatpush1.bf16.msra.mxu0 %v1300
      %1304 = vmatprep.subr.bf16.mxu0 0
      %1305 = vmatpush1.bf16.msra.mxu0 0
      %1306 = vmatprep.subr.bf16.mxu0 0
      %1307 = vmatpush1.bf16.msra.mxu0 0
      %1308 = vmatprep.subr.bf16.mxu0 0
      %1309 = vmatpush1.bf16.msra.mxu0 0
      %1310 = vmatprep.subr.bf16.mxu0 0
      %1311 = vmatpush1.bf16.msra.mxu0 0
      %1312 = vmatprep.subr.bf16.mxu0 0
      %1313 = vmatpush1.bf16.msra.mxu0 0
      %1314 = vmatprep.subr.bf16.mxu0 0
      %1315 = vmatpush1.bf16.msra.mxu0 0
      %1316 = vmatprep.subr.bf16.mxu0 0
      %1317 = vmatpush1.bf16.msra.mxu0 0
      %1318 = vmatprep.subr.bf16.mxu0 0
      %1319 = vmatpush1.bf16.msra.mxu0 0
      %1320 = vmatprep.subr.bf16.mxu0 0
      %1321 = vmatpush1.bf16.msra.mxu0 0
      %1322 = vmatprep.subr.bf16.mxu0 0
      %1323 = vmatpush1.bf16.msra.mxu0 0
      %1324 = vmatprep.subr.bf16.mxu0 0
      %1325 = vmatpush1.bf16.msra.mxu0 0
      %1326 = vmatprep.subr.bf16.mxu0 0
      %1327 = vmatpush1.bf16.msra.mxu0 0
      %1328 = vmatprep.subr.bf16.mxu0 0
      %1329 = vmatpush1.bf16.msra.mxu0 0
      %1330 = vmatprep.subr.bf16.mxu0 0
      %1331 = vmatpush1.bf16.msra.mxu0 0
      %1332 = vmatprep.subr.bf16.mxu0 0
      %1333 = vmatpush1.bf16.msra.mxu0 0
      %1334 = vmatprep.mubr.bf16.mxu0 0
      %1335 = vmatmul.mubr.bf16.gmra.mrb[0].mxu0 %v1288
      %v1336 = vpop.f32.mrb[0].mxu0
      %v1337 = vadd.f32 0.0, %v1336
      %v1338 = vpop.f32.mrb[0].mxu0
      %v1339 = vpop.f32.mrb[0].mxu0
      %v1340 = vadd.f32 0.0, %v1339
      %v1341 = vpop.f32.mrb[0].mxu0
      %1342 = vmatprep.mubr.bf16.mxu0 0
      %1343 = vmatmul.mubr.bf16.gmra.mrb[0].mxu0 %v1291
      %v1344 = vpop.f32.mrb[0].mxu0
      %v1345 = vadd.f32 0.0, %v1344
      %v1346 = vpop.f32.mrb[0].mxu0
      %v1347 = vpop.f32.mrb[0].mxu0
      %v1348 = vadd.f32 0.0, %v1347
      %v1349 = vpop.f32.mrb[0].mxu0
      %1350 = vmatprep.mubr.bf16.mxu0 0
      %1351 = vmatmul.mubr.bf16.gmra.mrb[0].mxu0 %v1294
      %v1352 = vpop.f32.mrb[0].mxu0
      %v1353 = vadd.f32 0.0, %v1352
      %v1354 = vpop.f32.mrb[0].mxu0
      %v1355 = vpop.f32.mrb[0].mxu0
      %v1356 = vadd.f32 0.0, %v1355
      %v1357 = vpop.f32.mrb[0].mxu0
      %1358 = vmatprep.mubr.bf16.mxu0 0
      %1359 = vmatmul.mubr.bf16.gmra.mrb[0].mxu0 %v1297
      %v1360 = vpop.f32.mrb[0].mxu0
      %v1361 = vadd.f32 0.0, %v1360
      %v1362 = vpop.f32.mrb[0].mxu0
      %v1363 = vpop.f32.mrb[0].mxu0
      %v1364 = vadd.f32 0.0, %v1363
      %v1365 = vpop.f32.mrb[0].mxu0
      %1366 = vdwg.mxu0
      %v1367 = vadd.f32 %v1245, %v1337
      %v1368 = vadd.f32 %v1246, %v1340
      %v1369 = vadd.f32 %v1247, %v1345
      %v1370 = vadd.f32 %v1248, %v1348
      %v1371 = vadd.f32 %v1249, %v1353
      %v1372 = vadd.f32 %v1250, %v1356
      %v1373 = vadd.f32 %v1251, %v1361
      %v1374 = vadd.f32 %v1252, %v1364
      %v1375 = vld [vmem:[%s1134] sm:$0xf]
      %v1376 = vld [vmem:[%s1134 + $0x4] sm:$0x1]
      %v1377 = vld [vmem:[%s1134 + $0x8] sm:$0xf]
      %v1378 = vld [vmem:[%s1134 + $0xc] sm:$0x1]
      %v1379 = vld [vmem:[%s1134 + $0x10] sm:$0xf]
      %v1380 = vld [vmem:[%s1134 + $0x14] sm:$0x1]
      %v1381 = vld [vmem:[%s1134 + $0x18] sm:$0xf]
      %v1382 = vld [vmem:[%s1134 + $0x1c] sm:$0x1]
      %v1383 = vld [vmem:[%s1134 + $0x20] sm:$0xf]
      %v1384 = vld [vmem:[%s1134 + $0x24] sm:$0x1]
      %v1385 = vld [vmem:[%s1134 + $0x28] sm:$0xf]
      %v1386 = vld [vmem:[%s1134 + $0x2c] sm:$0x1]
      %v1387 = vld [vmem:[%s1134 + $0x30] sm:$0xf]
      %v1388 = vld [vmem:[%s1134 + $0x34] sm:$0x1]
      %v1389 = vld [vmem:[%s1134 + $0x38] sm:$0xf]
      %v1390 = vld [vmem:[%s1134 + $0x3c] sm:$0x1]
      %v1392 = vshrl.u32 %v1375, 16
      %v1394 = vrot.slane %v1392, 4
      %v1395 = vshll.u32 %v1375, 16
      %v1397 = vrot.slane %v1395, 5
      %v1398 = vor.u32 %v1394, %v1397
      %v1399 = vrot.slane %v1398, 4
      %v1401 = vshll.u32 %v1376, 16
      %v1403 = vrot.slane %v1401, 5
      %v1404 = vsel %vm442, %v1399, %v1403
      %v1406 = vshrl.u32 %v1377, 16
      %v1408 = vrot.slane %v1406, 4
      %v1409 = vshll.u32 %v1377, 16
      %v1411 = vrot.slane %v1409, 5
      %v1412 = vor.u32 %v1408, %v1411
      %v1413 = vrot.slane %v1412, 4
      %v1415 = vshll.u32 %v1378, 16
      %v1417 = vrot.slane %v1415, 5
      %v1418 = vsel %vm442, %v1413, %v1417
      %v1420 = vshrl.u32 %v1379, 16
      %v1422 = vrot.slane %v1420, 4
      %v1423 = vshll.u32 %v1379, 16
      %v1425 = vrot.slane %v1423, 5
      %v1426 = vor.u32 %v1422, %v1425
      %v1427 = vrot.slane %v1426, 4
      %v1429 = vshll.u32 %v1380, 16
      %v1431 = vrot.slane %v1429, 5
      %v1432 = vsel %vm442, %v1427, %v1431
      %v1434 = vshrl.u32 %v1381, 16
      %v1436 = vrot.slane %v1434, 4
      %v1437 = vshll.u32 %v1381, 16
      %v1439 = vrot.slane %v1437, 5
      %v1440 = vor.u32 %v1436, %v1439
      %v1441 = vrot.slane %v1440, 4
      %v1443 = vshll.u32 %v1382, 16
      %v1445 = vrot.slane %v1443, 5
      %v1446 = vsel %vm442, %v1441, %v1445
      %v1448 = vshrl.u32 %v1383, 16
      %v1450 = vrot.slane %v1448, 4
      %v1451 = vshll.u32 %v1383, 16
      %v1453 = vrot.slane %v1451, 5
      %v1454 = vor.u32 %v1450, %v1453
      %v1455 = vrot.slane %v1454, 4
      %v1457 = vshll.u32 %v1384, 16
      %v1459 = vrot.slane %v1457, 5
      %v1460 = vsel %vm442, %v1455, %v1459
      %v1462 = vshrl.u32 %v1385, 16
      %v1464 = vrot.slane %v1462, 4
      %v1465 = vshll.u32 %v1385, 16
      %v1467 = vrot.slane %v1465, 5
      %v1468 = vor.u32 %v1464, %v1467
      %v1469 = vrot.slane %v1468, 4
      %v1471 = vshll.u32 %v1386, 16
      %v1473 = vrot.slane %v1471, 5
      %v1474 = vsel %vm442, %v1469, %v1473
      %v1476 = vshrl.u32 %v1387, 16
      %v1478 = vrot.slane %v1476, 4
      %v1479 = vshll.u32 %v1387, 16
      %v1481 = vrot.slane %v1479, 5
      %v1482 = vor.u32 %v1478, %v1481
      %v1483 = vrot.slane %v1482, 4
      %v1485 = vshll.u32 %v1388, 16
      %v1487 = vrot.slane %v1485, 5
      %v1488 = vsel %vm442, %v1483, %v1487
      %v1490 = vshrl.u32 %v1389, 16
      %v1492 = vrot.slane %v1490, 4
      %v1493 = vshll.u32 %v1389, 16
      %v1495 = vrot.slane %v1493, 5
      %v1496 = vor.u32 %v1492, %v1495
      %v1497 = vrot.slane %v1496, 4
      %v1499 = vshll.u32 %v1390, 16
      %v1501 = vrot.slane %v1499, 5
      %v1502 = vsel %vm442, %v1497, %v1501
      %s1503 = scalar_lea.vmem %s1, 32
      %v1504 = vld [vmem:[%s1503] sm:$0xf]
      %v1505 = vunpack.c.l.b16 %v1404
      %v1506 = vunpack.c.l.b16 %v1418
      %v1507 = vunpack.c.l.b16 %v1432
      %v1508 = vunpack.c.l.b16 %v1446
      %v1509 = vunpack.c.l.b16 %v1460
      %v1510 = vunpack.c.l.b16 %v1474
      %v1511 = vunpack.c.l.b16 %v1488
      %v1512 = vunpack.c.l.b16 %v1502
      %v1513 = vpack.c.b16 %v1506, %v1505
      %v1514 = vpack.c.b16 %v1508, %v1507
      %v1515 = vpack.c.b16 %v1510, %v1509
      %v1516 = vpack.c.b16 %v1512, %v1511
      %v1518 = vsel %vm242, %v1513, 0
      %v1521 = vsel %vm242, %v1514, 0
      %v1524 = vsel %vm242, %v1515, 0
      %v1527 = vsel %vm242, %v1516, 0
      %v1530 = vsel %vm255, %v1504, 0
      %1532 = vmatprep.subr.bf16.mxu0 0
      %1533 = vmatpush1.bf16.msra.mxu0 %v1530
      %1534 = vmatprep.subr.bf16.mxu0 0
      %1535 = vmatpush1.bf16.msra.mxu0 0
      %1536 = vmatprep.subr.bf16.mxu0 0
      %1537 = vmatpush1.bf16.msra.mxu0 0
      %1538 = vmatprep.subr.bf16.mxu0 0
      %1539 = vmatpush1.bf16.msra.mxu0 0
      %1540 = vmatprep.subr.bf16.mxu0 0
      %1541 = vmatpush1.bf16.msra.mxu0 0
      %1542 = vmatprep.subr.bf16.mxu0 0
      %1543 = vmatpush1.bf16.msra.mxu0 0
      %1544 = vmatprep.subr.bf16.mxu0 0
      %1545 = vmatpush1.bf16.msra.mxu0 0
      %1546 = vmatprep.subr.bf16.mxu0 0
      %1547 = vmatpush1.bf16.msra.mxu0 0
      %1548 = vmatprep.subr.bf16.mxu0 0
      %1549 = vmatpush1.bf16.msra.mxu0 0
      %1550 = vmatprep.subr.bf16.mxu0 0
      %1551 = vmatpush1.bf16.msra.mxu0 0
      %1552 = vmatprep.subr.bf16.mxu0 0
      %1553 = vmatpush1.bf16.msra.mxu0 0
      %1554 = vmatprep.subr.bf16.mxu0 0
      %1555 = vmatpush1.bf16.msra.mxu0 0
      %1556 = vmatprep.subr.bf16.mxu0 0
      %1557 = vmatpush1.bf16.msra.mxu0 0
      %1558 = vmatprep.subr.bf16.mxu0 0
      %1559 = vmatpush1.bf16.msra.mxu0 0
      %1560 = vmatprep.subr.bf16.mxu0 0
      %1561 = vmatpush1.bf16.msra.mxu0 0
      %1562 = vmatprep.subr.bf16.mxu0 0
      %1563 = vmatpush1.bf16.msra.mxu0 0
      %1564 = vmatprep.mubr.bf16.mxu0 0
      %1565 = vmatmul.mubr.bf16.gmra.mrb[0].mxu0 %v1518
      %v1566 = vpop.f32.mrb[0].mxu0
      %v1567 = vadd.f32 0.0, %v1566
      %v1568 = vpop.f32.mrb[0].mxu0
      %v1569 = vpop.f32.mrb[0].mxu0
      %v1570 = vadd.f32 0.0, %v1569
      %v1571 = vpop.f32.mrb[0].mxu0
      %1572 = vmatprep.mubr.bf16.mxu0 0
      %1573 = vmatmul.mubr.bf16.gmra.mrb[0].mxu0 %v1521
      %v1574 = vpop.f32.mrb[0].mxu0
      %v1575 = vadd.f32 0.0, %v1574
      %v1576 = vpop.f32.mrb[0].mxu0
      %v1577 = vpop.f32.mrb[0].mxu0
      %v1578 = vadd.f32 0.0, %v1577
      %v1579 = vpop.f32.mrb[0].mxu0
      %1580 = vmatprep.mubr.bf16.mxu0 0
      %1581 = vmatmul.mubr.bf16.gmra.mrb[0].mxu0 %v1524
      %v1582 = vpop.f32.mrb[0].mxu0
      %v1583 = vadd.f32 0.0, %v1582
      %v1584 = vpop.f32.mrb[0].mxu0
      %v1585 = vpop.f32.mrb[0].mxu0
      %v1586 = vadd.f32 0.0, %v1585
      %v1587 = vpop.f32.mrb[0].mxu0
      %1588 = vmatprep.mubr.bf16.mxu0 0
      %1589 = vmatmul.mubr.bf16.gmra.mrb[0].mxu0 %v1527
      %v1590 = vpop.f32.mrb[0].mxu0
      %v1591 = vadd.f32 0.0, %v1590
      %v1592 = vpop.f32.mrb[0].mxu0
      %v1593 = vpop.f32.mrb[0].mxu0
      %v1594 = vadd.f32 0.0, %v1593
      %v1595 = vpop.f32.mrb[0].mxu0
      %1596 = vdwg.mxu0
      %v1597 = vadd.f32 %v1367, %v1567
      %v1598 = vadd.f32 %v1368, %v1570
      %v1599 = vadd.f32 %v1369, %v1575
      %v1600 = vadd.f32 %v1370, %v1578
      %v1601 = vadd.f32 %v1371, %v1583
      %v1602 = vadd.f32 %v1372, %v1586
      %v1603 = vadd.f32 %v1373, %v1591
      %v1604 = vadd.f32 %v1374, %v1594
      %v1605 = vld [vmem:[%s2] sm:$0x1]
      %v1607 = vlaneseq
      %v1608 = vshrl.u32 %v1607, 7
      %v1609 = vsub.s32 0, %v1608
      %v1610 = vrot.slane %v1605, %v1609
      %v1612 = vadd.f32 %v1597, %v1610
      %v1613 = vadd.f32 %v1598, %v1610
      %v1614 = vadd.f32 %v1599, %v1610
      %v1615 = vadd.f32 %v1600, %v1610
      %v1616 = vadd.f32 %v1601, %v1610
      %v1617 = vadd.f32 %v1602, %v1610
      %v1618 = vadd.f32 %v1603, %v1610
      %v1619 = vadd.f32 %v1604, %v1610
      %v1620 = vmax.f32 %v1612, 0.0
      %v1621 = vmax.f32 %v1613, 0.0
      %v1622 = vmax.f32 %v1614, 0.0
      %v1623 = vmax.f32 %v1615, 0.0
      %v1624 = vmax.f32 %v1616, 0.0
      %v1625 = vmax.f32 %v1617, 0.0
      %v1626 = vmax.f32 %v1618, 0.0
      %v1627 = vmax.f32 %v1619, 0.0
      %v1628 = vpack.c.bf16 %v1621, %v1620
      %v1629 = vpack.c.bf16 %v1623, %v1622
      %v1630 = vpack.c.bf16 %v1625, %v1624
      %v1631 = vpack.c.bf16 %v1627, %v1626
      %v1636 = vunpack.c.l.b16 %v1628
      %v1637 = vunpack.c.h.b16 %v1628
      %v1638 = vunpack.c.l.b16 %v1629
      %v1639 = vunpack.c.h.b16 %v1629
      %v1640 = vunpack.c.l.b16 %v1630
      %v1641 = vunpack.c.h.b16 %v1630
      %v1642 = vunpack.c.l.b16 %v1631
      %v1643 = vunpack.c.h.b16 %v1631
      %v1644 = vpack.c.b16 %v1636, %v1636
      %v1645 = vpack.c.b16 %v1637, %v1637
      %v1646 = vpack.c.b16 %v1638, %v1638
      %v1647 = vpack.c.b16 %v1639, %v1639
      %v1648 = vpack.c.b16 %v1640, %v1640
      %v1649 = vpack.c.b16 %v1641, %v1641
      %v1650 = vpack.c.b16 %v1642, %v1642
      %v1651 = vpack.c.b16 %v1643, %v1643
      %1660 = vst [vmem:[%s192] sm:$0xf] %v1644
      %1661 = vst [vmem:[%s192 + $0x4] sm:$0xf] %v1645
      %1662 = vst [vmem:[%s192 + $0x8] sm:$0xf] %v1646
      %1663 = vst [vmem:[%s192 + $0xc] sm:$0xf] %v1647
      %1664 = vst [vmem:[%s192 + $0x10] sm:$0xf] %v1648
      %1665 = vst [vmem:[%s192 + $0x14] sm:$0xf] %v1649
      %1666 = vst [vmem:[%s192 + $0x18] sm:$0xf] %v1650
      %1667 = vst [vmem:[%s192 + $0x1c] sm:$0xf] %v1651
      %s1668 = smul.u32 8, %s19
      %p1669 = scmp.lt.s32.totalorder %s18, 1
      %s1670 = scalar_select %p1669, %s18, 1
      %p1671 = scmp.lt.s32.totalorder %s1668, 7
      %s1672 = scalar_select %p1671, %s1668, 7
      %s1673 = smul.addr %s1670, 8
      %s1674 = sadd.s32 %s1672, %s1673
      %s1675 = smul.addr %s1674, 4
      %s1676 = scalar_lea.vmem %s3, %s1675
      // Predicated region
      $region33: #{resnet_block_forward.2} parent=31 // pred_check
        %p1677 = pneg %p114
      $region34: #{resnet_block_forward.2} parent=31 // pred_check_branch
        %1679 = sbr.rel (%p1677) target = $region36
      $region35: #{resnet_block_forward.2} parent=31 // pred_region
        %s1680 = smul.u32 8, %s19
      $region36: #{resnet_block_forward.2} parent=31 // pred_fallthru
        _
    $region32: #{resnet_block_forward.2} parent=5 // pred_fallthru
      _
    %p1681 = scmp.le.s32.totalorder 2, %s9
    // Predicated region
    $region37: #{resnet_block_forward.2} parent=5 // pred_check
      %p1682 = pneg %p1681
    $region38: #{resnet_block_forward.2} parent=5 // pred_check_branch
      %1684 = sbr.rel (%p1682) target = $region40
    $region39: #{resnet_block_forward.2} parent=5 // pred_region
      %s1685 = ssub.s32 %s9, 2
      // Predicated region
      $region41: #{resnet_block_forward.2} parent=39 // pred_check
        %p1686 = pneg %p120
      $region42: #{resnet_block_forward.2} parent=39 // pred_check_branch
        %1688 = sbr.rel (%p1686) target = $region44
      $region43: #{resnet_block_forward.2} parent=39 // pred_region
        %s1689 = smul.u32 8, %s21
        %p1690 = scmp.lt.s32.totalorder %s20, 1
        %s1691 = scalar_select %p1690, %s20, 1
        %p1692 = scmp.lt.s32.totalorder %s1689, 7
        %s1693 = scalar_select %p1692, %s1689, 7
        %s1694 = smul.addr %s1691, 8
        %s1695 = sadd.s32 %s1693, %s1694
        %s1696 = smul.addr %s1695, 4
        %s1697 = scalar_lea.vmem %s3, %s1696
      $region44: #{resnet_block_forward.2} parent=39 // pred_fallthru
        _
    $region40: #{resnet_block_forward.2} parent=5 // pred_fallthru
      _
  $region6: #{resnet_block_forward.2} parent=0 // loop_footer
    %s13 = sadd.s32 1, %s9
  $region7: #{resnet_block_forward.2} parent=0 // loop_footer_branch
    %8 = sbr.rel target = $region3
  $region8: #{resnet_block_forward.2} parent=0 // loop_exit
    _

// kernel: resnet_block_forward.3
$region0: #{resnet_block_forward.3}
  #allocation0 [shape = 'u32[]', space=smem, size = 0x4, offset = 0x4, fixed_abs, tag = 'smem constant byte address 0x4 - core index']
  #allocation1 [shape = 'u32[144,128]{1,0:T(1,128)}', space=vmem, size = 0x12000, scoped, tag = 'internal scratch']
  %s0 = inlined_call_operand.vmem [shape: bf16[2,10,10,128], index: 0, kind: input, shape index: {}]
  %s1 = inlined_call_operand.vmem [shape: bf16[9,128,128], index: 1, kind: input, shape index: {}]
  %s2 = inlined_call_operand.vmem [shape: f32[1,128], index: 2, kind: input, shape index: {}]
  %s3 = inlined_call_operand.vmem [shape: bf16[2,64,8], index: 3, kind: input, shape index: {}]
  %s4 = inlined_call_operand.vmem [shape: bf16[8,128], index: 4, kind: input, shape index: {}]
  %s5 = inlined_call_operand.vmem [shape: f32[2,64,128], index: 5, kind: output, shape index: {}]
  %s6 = sld [smem:[#allocation0]]
  $region53: #{resnet_block_forward.3} parent=0
    _
  %s8 = ssub.s32 1, %s6
  %s9 = scalar_select 0, %s8, %s6
  loop: start=0, step=1, limit=4
  $region2: #{resnet_block_forward.3} parent=0 // loop_pre_header
    _
  $region3: #{resnet_block_forward.3} parent=0 // loop_header
    %s11 = sphi 0, %s15
    %p12 = scmp.ge.s32.totalorder %s11, 4
    %s18 = sphi 0, %s30
    %s19 = sphi 0, %s26
    %s20 = sphi 0, %s18
    %s21 = sphi 0, %s19
    %s22 = sphi 0, %s20
    %s23 = sphi 0, %s21
    %s33 = sphi 0, %s35
    %s36 = sphi 0, %s33
    %s37 = sphi 0, %s36
    %s53 = sphi 0, %s37
    %s57 = sphi 0, %s57
    %s59 = sphi 0, %s57
    %s60 = sphi 0, %s59
    %s74 = sphi 0, %s60
    %s78 = sphi 0, %s78
    %s80 = sphi 0, %s78
    %s81 = sphi 0, %s80
    %s95 = sphi 0, %s81
    %s103 = sphi 0, %s105
    %s106 = sphi 0, %s103
    %s107 = sphi 0, %s106
    %s123 = sphi 0, %s107
    %s127 = sphi 0, %s127
    %s129 = sphi 0, %s127
    %s130 = sphi 0, %s129
    %s144 = sphi 0, %s130
    %s152 = sphi 0, %s154
    %s155 = sphi 0, %s152
    %s156 = sphi 0, %s155
    %s172 = sphi 0, %s156
  $region4: #{resnet_block_forward.3} parent=0 // loop_header_branch
    %14 = sbr.rel (%p12) target = $region8
  $region5: #{resnet_block_forward.3} parent=0 // loop_body
    %s16 = ssub.s32 %s11, 1
    %s17 = ssub.s32 %s11, 2
    %s24 = sadd.s32 1, %s19
    %p25 = scmp.ge.s32.totalorder %s24, 1
    %s26 = scalar_select %p25, 0, %s24
    %s27 = sadd.s32 1, %s18
    %s28 = scalar_select %p25, %s27, %s18
    %p29 = scmp.ge.s32.totalorder %s28, 2
    %s30 = scalar_select %p29, 0, %s28
    %s31 = ssub.s32 %s18, %s30
    %p32 = scmp.eq.s32.totalorder %s31, 0
    %s34 = sadd.s32 %s33, 1
    %s35 = scalar_select %p32, %s33, %s34
    %p38 = pneg %p32
    %p39 = scmp.eq.s32.totalorder %s11, 1
    %p40 = por %p38, %p39
    %p41 = scmp.ne.s32.totalorder %s33, %s36
    %p42 = scmp.eq.s32.totalorder %s11, 0
    %p43 = por %p41, %p42
    %p44 = scmp.ne.s32.totalorder %s33, %s36
    %p45 = scmp.eq.s32.totalorder %s16, 1
    %p46 = por %p44, %p45
    %p47 = scmp.ne.s32.totalorder %s36, %s37
    %p48 = scmp.eq.s32.totalorder %s16, 0
    %p49 = por %p47, %p48
    %p50 = scmp.ne.s32.totalorder %s36, %s37
    %p51 = scmp.eq.s32.totalorder %s17, 1
    %p52 = por %p50, %p51
    %p54 = scmp.ne.s32.totalorder %s37, %s53
    %p55 = scmp.eq.s32.totalorder %s17, 0
    %p56 = por %p54, %p55
    %s58 = sadd.s32 %s57, 1
    %p61 = scmp.eq.s32.totalorder %s11, 1
    %p62 = scmp.ne.s32.totalorder %s57, %s59
    %p63 = scmp.eq.s32.totalorder %s11, 0
    %p64 = por %p62, %p63
    %p65 = scmp.ne.s32.totalorder %s57, %s59
    %p66 = scmp.eq.s32.totalorder %s16, 1
    %p67 = por %p65, %p66
    %p68 = scmp.ne.s32.totalorder %s59, %s60
    %p69 = scmp.eq.s32.totalorder %s16, 0
    %p70 = por %p68, %p69
    %p71 = scmp.ne.s32.totalorder %s59, %s60
    %p72 = scmp.eq.s32.totalorder %s17, 1
    %p73 = por %p71, %p72
    %p75 = scmp.ne.s32.totalorder %s60, %s74
    %p76 = scmp.eq.s32.totalorder %s17, 0
    %p77 = por %p75, %p76
    %s79 = sadd.s32 %s78, 1
    %p82 = scmp.eq.s32.totalorder %s11, 1
    %p83 = scmp.ne.s32.totalorder %s78, %s80
    %p84 = scmp.eq.s32.totalorder %s11, 0
    %p85 = por %p83, %p84
    %p86 = scmp.ne.s32.totalorder %s78, %s80
    %p87 = scmp.eq.s32.totalorder %s16, 1
    %p88 = por %p86, %p87
    %p89 = scmp.ne.s32.totalorder %s80, %s81
    %p90 = scmp.eq.s32.totalorder %s16, 0
    %p91 = por %p89, %p90
    %p92 = scmp.ne.s32.totalorder %s80, %s81
    %p93 = scmp.eq.s32.totalorder %s17, 1
    %p94 = por %p92, %p93
    %p96 = scmp.ne.s32.totalorder %s81, %s95
    %p97 = scmp.eq.s32.totalorder %s17, 0
    %p98 = por %p96, %p97
    %s99 = ssub.s32 %s18, %s30
    %s100 = ssub.s32 %s19, %s26
    %s101 = sor.u32 %s99, %s100
    %p102 = scmp.eq.s32.totalorder %s101, 0
    %s104 = sadd.s32 %s103, 1
    %s105 = scalar_select %p102, %s103, %s104
    %p108 = pneg %p102
    %p109 = scmp.eq.s32.totalorder %s11, 1
    %p110 = por %p108, %p109
    %p111 = scmp.ne.s32.totalorder %s103, %s106
    %p112 = scmp.eq.s32.totalorder %s11, 0
    %p113 = por %p111, %p112
    %p114 = scmp.ne.s32.totalorder %s103, %s106
    %p115 = scmp.eq.s32.totalorder %s16, 1
    %p116 = por %p114, %p115
    %p117 = scmp.ne.s32.totalorder %s106, %s107
    %p118 = scmp.eq.s32.totalorder %s16, 0
    %p119 = por %p117, %p118
    %p120 = scmp.ne.s32.totalorder %s106, %s107
    %p121 = scmp.eq.s32.totalorder %s17, 1
    %p122 = por %p120, %p121
    %p124 = scmp.ne.s32.totalorder %s107, %s123
    %p125 = scmp.eq.s32.totalorder %s17, 0
    %p126 = por %p124, %p125
    %s128 = sadd.s32 %s127, 1
    %p131 = scmp.eq.s32.totalorder %s11, 1
    %p132 = scmp.ne.s32.totalorder %s127, %s129
    %p133 = scmp.eq.s32.totalorder %s11, 0
    %p134 = por %p132, %p133
    %p135 = scmp.ne.s32.totalorder %s127, %s129
    %p136 = scmp.eq.s32.totalorder %s16, 1
    %p137 = por %p135, %p136
    %p138 = scmp.ne.s32.totalorder %s129, %s130
    %p139 = scmp.eq.s32.totalorder %s16, 0
    %p140 = por %p138, %p139
    %p141 = scmp.ne.s32.totalorder %s129, %s130
    %p142 = scmp.eq.s32.totalorder %s17, 1
    %p143 = por %p141, %p142
    %p145 = scmp.ne.s32.totalorder %s130, %s144
    %p146 = scmp.eq.s32.totalorder %s17, 0
    %p147 = por %p145, %p146
    %s148 = ssub.s32 %s18, %s30
    %s149 = ssub.s32 %s19, %s26
    %s150 = sor.u32 %s148, %s149
    %p151 = scmp.eq.s32.totalorder %s150, 0
    %s153 = sadd.s32 %s152, 1
    %s154 = scalar_select %p151, %s152, %s153
    %p157 = pneg %p151
    %p158 = scmp.eq.s32.totalorder %s11, 1
    %p159 = por %p157, %p158
    %p160 = scmp.ne.s32.totalorder %s152, %s155
    %p161 = scmp.eq.s32.totalorder %s11, 0
    %p162 = por %p160, %p161
    %p163 = scmp.ne.s32.totalorder %s152, %s155
    %p164 = scmp.eq.s32.totalorder %s16, 1
    %p165 = por %p163, %p164
    %p166 = scmp.ne.s32.totalorder %s155, %s156
    %p167 = scmp.eq.s32.totalorder %s16, 0
    %p168 = por %p166, %p167
    %p169 = scmp.ne.s32.totalorder %s155, %s156
    %p170 = scmp.eq.s32.totalorder %s17, 1
    %p171 = por %p169, %p170
    %p173 = scmp.ne.s32.totalorder %s156, %s172
    %p174 = scmp.eq.s32.totalorder %s17, 0
    %p175 = por %p173, %p174
    %p176 = scmp.le.s32.totalorder 1, %s11
    %p177 = scmp.lt.s32.totalorder %s11, 3
    %p178 = pnand %p176, %p177
    %p179 = pneg %p178
    // Predicated region
    $region9: #{resnet_block_forward.3} parent=5 // pred_check
      _
    $region10: #{resnet_block_forward.3} parent=5 // pred_check_branch
      %181 = sbr.rel (%p178) target = $region12
    $region11: #{resnet_block_forward.3} parent=5 // pred_region
      %s182 = ssub.s32 %s11, 1
      // Predicated region
      $region13: #{resnet_block_forward.3} parent=11 // pred_check
        %p183 = pneg %p70
      $region14: #{resnet_block_forward.3} parent=11 // pred_check_branch
        %185 = sbr.rel (%p183) target = $region16
      $region15: #{resnet_block_forward.3} parent=11 // pred_region
        _
      $region16: #{resnet_block_forward.3} parent=11 // pred_fallthru
        _
      // Predicated region
      $region17: #{resnet_block_forward.3} parent=11 // pred_check
        %p186 = pneg %p91
      $region18: #{resnet_block_forward.3} parent=11 // pred_check_branch
        %188 = sbr.rel (%p186) target = $region20
      $region19: #{resnet_block_forward.3} parent=11 // pred_region
        _
      $region20: #{resnet_block_forward.3} parent=11 // pred_fallthru
        _
      // Predicated region
      $region21: #{resnet_block_forward.3} parent=11 // pred_check
        %p189 = pneg %p140
      $region22: #{resnet_block_forward.3} parent=11 // pred_check_branch
        %191 = sbr.rel (%p189) target = $region24
      $region23: #{resnet_block_forward.3} parent=11 // pred_region
        _
      $region24: #{resnet_block_forward.3} parent=11 // pred_fallthru
        _
    $region12: #{resnet_block_forward.3} parent=5 // pred_fallthru
      _
    %p192 = scmp.lt.s32.totalorder %s11, 2
    // Predicated region
    $region25: #{resnet_block_forward.3} parent=5 // pred_check
      %p193 = pneg %p192
    $region26: #{resnet_block_forward.3} parent=5 // pred_check_branch
      %195 = sbr.rel (%p193) target = $region28
    $region27: #{resnet_block_forward.3} parent=5 // pred_region
      // Predicated region
      $region29: #{resnet_block_forward.3} parent=27 // pred_check
        %p196 = pneg %p43
      $region30: #{resnet_block_forward.3} parent=27 // pred_check_branch
        %198 = sbr.rel (%p196) target = $region32
      $region31: #{resnet_block_forward.3} parent=27 // pred_region
        %p199 = scmp.lt.s32.totalorder %s18, 1
        %s200 = scalar_select %p199, %s18, 1
        %s201 = smul.addr %s200, 20
        %s202 = smul.addr %s201, 4
        %s203 = scalar_lea.vmem %s0, %s202
      $region32: #{resnet_block_forward.3} parent=27 // pred_fallthru
        _
      // Predicated region
      $region33: #{resnet_block_forward.3} parent=27 // pred_check
        %p204 = pneg %p113
      $region34: #{resnet_block_forward.3} parent=27 // pred_check_branch
        %206 = sbr.rel (%p204) target = $region36
      $region35: #{resnet_block_forward.3} parent=27 // pred_region
        %s207 = smul.u32 8, %s19
        %p208 = scmp.lt.s32.totalorder %s18, 1
        %s209 = scalar_select %p208, %s18, 1
        %p210 = scmp.lt.s32.totalorder %s207, 7
        %s211 = scalar_select %p210, %s207, 7
        %s212 = smul.addr %s209, 8
        %s213 = sadd.s32 %s211, %s212
        %s214 = smul.addr %s213, 4
        %s215 = scalar_lea.vmem %s3, %s214
        %s216 = smul.u32 8, %s19
      $region36: #{resnet_block_forward.3} parent=27 // pred_fallthru
        _
    $region28: #{resnet_block_forward.3} parent=5 // pred_fallthru
      _
    %p217 = scmp.le.s32.totalorder 1, %s11
    %p218 = scmp.lt.s32.totalorder %s11, 3
    %p219 = pnand %p217, %p218
    %p220 = pneg %p219
    // Predicated region
    $region37: #{resnet_block_forward.3} parent=5 // pred_check
      _
    $region38: #{resnet_block_forward.3} parent=5 // pred_check_branch
      %222 = sbr.rel (%p219) target = $region40
    $region39: #{resnet_block_forward.3} parent=5 // pred_region
      %s223 = ssub.s32 %s11, 1
      %p224 = scmp.lt.s32.totalorder %s20, 1
      %s225 = scalar_select %p224, %s20, 1
      %s226 = smul.addr %s225, 20
      %s227 = smul.addr %s226, 4
      %s228 = scalar_lea.vmem %s0, %s227
      %p229 = pneg %p49
      %p230 = pneg %p46
      %p231 = pneg %p70
      %p232 = pneg %p67
      %p233 = pneg %p91
      %p234 = pneg %p88
      %s235 = smul.u32 8, %s21
      %p236 = scmp.lt.s32.totalorder %s20, 1
      %s237 = scalar_select %p236, %s20, 1
      %p238 = scmp.lt.s32.totalorder %s235, 7
      %s239 = scalar_select %p238, %s235, 7
      %s240 = smul.addr %s237, 8
      %s241 = sadd.s32 %s239, %s240
      %s242 = smul.addr %s241, 4
      %s243 = scalar_lea.vmem %s3, %s242
      %p244 = pneg %p119
      %p245 = pneg %p116
      %p246 = pneg %p140
      %p247 = pneg %p137
      %p248 = pneg %p168
      %p249 = pneg %p165
      %s250 = smul.u32 8, %s21
      %p251 = scmp.lt.s32.totalorder %s20, 1
      %s252 = scalar_select %p251, %s20, 1
      %p253 = scmp.lt.s32.totalorder %s250, 7
      %s254 = scalar_select %p253, %s250, 7
      %s255 = smul.addr %s252, 8
      %s256 = sadd.s32 %s254, %s255
      %s257 = smul.addr %s256, 8
      %s258 = scalar_lea.vmem %s5, %s257
      %p259 = scmp.lt.s32.totalorder %s20, 1
      %s260 = scalar_select %p259, %s20, 1
      %s261 = smul.addr %s260, 20
      %s262 = smul.addr %s261, 4
      %s263 = scalar_lea.vmem %s0, %s262
      %s264 = smul.u32 8, %s21
      %p265 = scmp.lt.s32.totalorder %s20, 1
      %s266 = scalar_select %p265, %s20, 1
      %p267 = scmp.lt.s32.totalorder %s264, 7
      %s268 = scalar_select %p267, %s264, 7
      %s269 = smul.addr %s266, 8
      %s270 = sadd.s32 %s268, %s269
      %s271 = smul.addr %s270, 4
      %s272 = scalar_lea.vmem %s3, %s271
      %s273 = smul.u32 8, %s21
      %s274 = smul.u32 8, %s21
      %p275 = scmp.lt.s32.totalorder %s20, 1
      %s276 = scalar_select %p275, %s20, 1
      %p277 = scmp.lt.s32.totalorder %s274, 7
      %s278 = scalar_select %p277, %s274, 7
      %s279 = smul.addr %s276, 8
      %s280 = sadd.s32 %s278, %s279
      %s281 = smul.addr %s280, 8
      %s282 = scalar_lea.vmem %s5, %s281
      %s283 = smul.u32 8, %s21
      %s285 = smul.u32 %s21, 8
      %s286 = smul.u32 %s285, 2
      %s287 = smul.addr %s286, 4
      %s288 = scalar_lea.vmem %s263, %s287
      %v289 = vld [vmem:[%s288] sm:$0xf]
      %v290 = vld [vmem:[%s288 + $0x8] sm:$0xf]
      %v291 = vld [vmem:[%s288 + $0x10] sm:$0xf]
      %v292 = vld [vmem:[%s288 + $0x18] sm:$0xf]
      %v293 = vld [vmem:[%s288 + $0x20] sm:$0xf]
      %v294 = vld [vmem:[%s288 + $0x28] sm:$0xf]
      %v295 = vld [vmem:[%s288 + $0x30] sm:$0xf]
      %v296 = vld [vmem:[%s288 + $0x38] sm:$0xf]
      %v297 = vld [vmem:[%s1] sm:$0xf]
      %v298 = vld [vmem:[%s1 + $0x4] sm:$0xf]
      %v299 = vld [vmem:[%s1 + $0x8] sm:$0xf]
      %v300 = vld [vmem:[%s1 + $0xc] sm:$0xf]
      %v301 = vld [vmem:[%s1 + $0x10] sm:$0xf]
      %v302 = vld [vmem:[%s1 + $0x14] sm:$0xf]
      %v303 = vld [vmem:[%s1 + $0x18] sm:$0xf]
      %v304 = vld [vmem:[%s1 + $0x1c] sm:$0xf]
      %v305 = vld [vmem:[%s1 + $0x20] sm:$0xf]
      %v306 = vld [vmem:[%s1 + $0x24] sm:$0xf]
      %v307 = vld [vmem:[%s1 + $0x28] sm:$0xf]
      %v308 = vld [vmem:[%s1 + $0x2c] sm:$0xf]
      %v309 = vld [vmem:[%s1 + $0x30] sm:$0xf]
      %v310 = vld [vmem:[%s1 + $0x34] sm:$0xf]
      %v311 = vld [vmem:[%s1 + $0x38] sm:$0xf]
      %v312 = vld [vmem:[%s1 + $0x3c] sm:$0xf]
      %v313 = vld [vmem:[%s288 + $0x4] sm:$0x1]
      %v314 = vld [vmem:[%s288 + $0xc] sm:$0x1]
      %v315 = vld [vmem:[%s288 + $0x14] sm:$0x1]
      %v316 = vld [vmem:[%s288 + $0x1c] sm:$0x1]
      %v317 = vld [vmem:[%s288 + $0x24] sm:$0x1]
      %v318 = vld [vmem:[%s288 + $0x2c] sm:$0x1]
      %v319 = vld [vmem:[%s288 + $0x34] sm:$0x1]
      %v320 = vld [vmem:[%s288 + $0x3c] sm:$0x1]
      %vm321 = vsmask.f32 3328
      %vm322 = vsmask.f32 7440
      %vm323 = vmor %vm321, %vm322
      %v325 = vshrl.u32 %v289, 16
      %v327 = vrot.slane %v325, 4
      %v328 = vshll.u32 %v289, 16
      %v330 = vrot.slane %v328, 5
      %v331 = vor.u32 %v327, %v330
      %v332 = vrot.slane %v331, 4
      %v334 = vshll.u32 %v313, 16
      %v336 = vrot.slane %v334, 5
      %v337 = vsel %vm323, %v332, %v336
      %v339 = vshrl.u32 %v290, 16
      %v341 = vrot.slane %v339, 4
      %v342 = vshll.u32 %v290, 16
      %v344 = vrot.slane %v342, 5
      %v345 = vor.u32 %v341, %v344
      %v346 = vrot.slane %v345, 4
      %v348 = vshll.u32 %v314, 16
      %v350 = vrot.slane %v348, 5
      %v351 = vsel %vm323, %v346, %v350
      %v353 = vshrl.u32 %v291, 16
      %v355 = vrot.slane %v353, 4
      %v356 = vshll.u32 %v291, 16
      %v358 = vrot.slane %v356, 5
      %v359 = vor.u32 %v355, %v358
      %v360 = vrot.slane %v359, 4
      %v362 = vshll.u32 %v315, 16
      %v364 = vrot.slane %v362, 5
      %v365 = vsel %vm323, %v360, %v364
      %v367 = vshrl.u32 %v292, 16
      %v369 = vrot.slane %v367, 4
      %v370 = vshll.u32 %v292, 16
      %v372 = vrot.slane %v370, 5
      %v373 = vor.u32 %v369, %v372
      %v374 = vrot.slane %v373, 4
      %v376 = vshll.u32 %v316, 16
      %v378 = vrot.slane %v376, 5
      %v379 = vsel %vm323, %v374, %v378
      %v381 = vshrl.u32 %v293, 16
      %v383 = vrot.slane %v381, 4
      %v384 = vshll.u32 %v293, 16
      %v386 = vrot.slane %v384, 5
      %v387 = vor.u32 %v383, %v386
      %v388 = vrot.slane %v387, 4
      %v390 = vshll.u32 %v317, 16
      %v392 = vrot.slane %v390, 5
      %v393 = vsel %vm323, %v388, %v392
      %v395 = vshrl.u32 %v294, 16
      %v397 = vrot.slane %v395, 4
      %v398 = vshll.u32 %v294, 16
      %v400 = vrot.slane %v398, 5
      %v401 = vor.u32 %v397, %v400
      %v402 = vrot.slane %v401, 4
      %v404 = vshll.u32 %v318, 16
      %v406 = vrot.slane %v404, 5
      %v407 = vsel %vm323, %v402, %v406
      %v409 = vshrl.u32 %v295, 16
      %v411 = vrot.slane %v409, 4
      %v412 = vshll.u32 %v295, 16
      %v414 = vrot.slane %v412, 5
      %v415 = vor.u32 %v411, %v414
      %v416 = vrot.slane %v415, 4
      %v418 = vshll.u32 %v319, 16
      %v420 = vrot.slane %v418, 5
      %v421 = vsel %vm323, %v416, %v420
      %v423 = vshrl.u32 %v296, 16
      %v425 = vrot.slane %v423, 4
      %v426 = vshll.u32 %v296, 16
      %v428 = vrot.slane %v426, 5
      %v429 = vor.u32 %v425, %v428
      %v430 = vrot.slane %v429, 4
      %v432 = vshll.u32 %v320, 16
      %v434 = vrot.slane %v432, 5
      %v435 = vsel %vm323, %v430, %v434
      %s436 = scalar_lea.vmem %s1, 64
      %v437 = vld [vmem:[%s436] sm:$0xf]
      %v438 = vld [vmem:[%s436 + $0x4] sm:$0xf]
      %v439 = vld [vmem:[%s436 + $0x8] sm:$0xf]
      %v440 = vld [vmem:[%s436 + $0xc] sm:$0xf]
      %v441 = vld [vmem:[%s436 + $0x10] sm:$0xf]
      %v442 = vld [vmem:[%s436 + $0x14] sm:$0xf]
      %v443 = vld [vmem:[%s436 + $0x18] sm:$0xf]
      %v444 = vld [vmem:[%s436 + $0x1c] sm:$0xf]
      %v445 = vld [vmem:[%s436 + $0x20] sm:$0xf]
      %v446 = vld [vmem:[%s436 + $0x24] sm:$0xf]
      %v447 = vld [vmem:[%s436 + $0x28] sm:$0xf]
      %v448 = vld [vmem:[%s436 + $0x2c] sm:$0xf]
      %v449 = vld [vmem:[%s436 + $0x30] sm:$0xf]
      %v450 = vld [vmem:[%s436 + $0x34] sm:$0xf]
      %v451 = vld [vmem:[%s436 + $0x38] sm:$0xf]
      %v452 = vld [vmem:[%s436 + $0x3c] sm:$0xf]
      %v453 = vunpack.c.l.b16 %v337
      %v454 = vunpack.c.l.b16 %v351
      %v455 = vunpack.c.l.b16 %v365
      %v456 = vunpack.c.l.b16 %v379
      %v457 = vunpack.c.l.b16 %v393
      %v458 = vunpack.c.l.b16 %v407
      %v459 = vunpack.c.l.b16 %v421
      %v460 = vunpack.c.l.b16 %v435
      %v461 = vpack.c.b16 %v454, %v453
      %v462 = vpack.c.b16 %v456, %v455
      %v463 = vpack.c.b16 %v458, %v457
      %v464 = vpack.c.b16 %v460, %v459
      %v485 = vunpack.c.l.b16 %v437
      %v486 = vunpack.c.l.b16 %v438
      %v487 = vunpack.c.l.b16 %v439
      %v488 = vunpack.c.l.b16 %v440
      %v489 = vunpack.c.l.b16 %v441
      %v490 = vunpack.c.l.b16 %v442
      %v491 = vunpack.c.l.b16 %v443
      %v492 = vunpack.c.l.b16 %v444
      %v493 = vunpack.c.l.b16 %v445
      %v494 = vunpack.c.l.b16 %v446
      %v495 = vunpack.c.l.b16 %v447
      %v496 = vunpack.c.l.b16 %v448
      %v497 = vunpack.c.l.b16 %v449
      %v498 = vunpack.c.l.b16 %v450
      %v499 = vunpack.c.l.b16 %v451
      %v500 = vunpack.c.l.b16 %v452
      %v501 = vpack.c.b16 %v486, %v485
      %v502 = vpack.c.b16 %v488, %v487
      %v503 = vpack.c.b16 %v490, %v489
      %v504 = vpack.c.b16 %v492, %v491
      %v505 = vpack.c.b16 %v494, %v493
      %v506 = vpack.c.b16 %v496, %v495
      %v507 = vpack.c.b16 %v498, %v497
      %v508 = vpack.c.b16 %v500, %v499
      %517 = vmatprep.subr.bf16.mxu0 0
      %518 = vmatpush1.bf16.msra.mxu0 %v501
      %519 = vmatprep.subr.bf16.mxu0 0
      %520 = vmatpush1.bf16.msra.mxu0 %v502
      %521 = vmatprep.subr.bf16.mxu0 0
      %522 = vmatpush1.bf16.msra.mxu0 %v503
      %523 = vmatprep.subr.bf16.mxu0 0
      %524 = vmatpush1.bf16.msra.mxu0 %v504
      %525 = vmatprep.subr.bf16.mxu0 0
      %526 = vmatpush1.bf16.msra.mxu0 %v505
      %527 = vmatprep.subr.bf16.mxu0 0
      %528 = vmatpush1.bf16.msra.mxu0 %v506
      %529 = vmatprep.subr.bf16.mxu0 0
      %530 = vmatpush1.bf16.msra.mxu0 %v507
      %531 = vmatprep.subr.bf16.mxu0 0
      %532 = vmatpush1.bf16.msra.mxu0 %v508
      %533 = vmatprep.subr.bf16.mxu0 0
      %534 = vmatpush1.bf16.msra.mxu0 0
      %535 = vmatprep.subr.bf16.mxu0 0
      %536 = vmatpush1.bf16.msra.mxu0 0
      %537 = vmatprep.subr.bf16.mxu0 0
      %538 = vmatpush1.bf16.msra.mxu0 0
      %539 = vmatprep.subr.bf16.mxu0 0
      %540 = vmatpush1.bf16.msra.mxu0 0
      %541 = vmatprep.subr.bf16.mxu0 0
      %542 = vmatpush1.bf16.msra.mxu0 0
      %543 = vmatprep.subr.bf16.mxu0 0
      %544 = vmatpush1.bf16.msra.mxu0 0
      %545 = vmatprep.subr.bf16.mxu0 0
      %546 = vmatpush1.bf16.msra.mxu0 0
      %547 = vmatprep.subr.bf16.mxu0 0
      %548 = vmatpush1.bf16.msra.mxu0 0
      %549 = vmatprep.mubr.bf16.mxu0 0
      %550 = vmatmul.mubr.bf16.gmra.mrb[0].mxu0 %v461
      %v551 = vpop.f32.mrb[0].mxu0
      %v552 = vadd.f32 0.0, %v551
      %v553 = vpop.f32.mrb[0].mxu0
      %v554 = vpop.f32.mrb[0].mxu0
      %v555 = vadd.f32 0.0, %v554
      %v556 = vpop.f32.mrb[0].mxu0
      %557 = vmatprep.mubr.bf16.mxu0 0
      %558 = vmatmul.mubr.bf16.gmra.mrb[0].mxu0 %v462
      %v559 = vpop.f32.mrb[0].mxu0
      %v560 = vadd.f32 0.0, %v559
      %v561 = vpop.f32.mrb[0].mxu0
      %v562 = vpop.f32.mrb[0].mxu0
      %v563 = vadd.f32 0.0, %v562
      %v564 = vpop.f32.mrb[0].mxu0
      %565 = vmatprep.mubr.bf16.mxu0 0
      %566 = vmatmul.mubr.bf16.gmra.mrb[0].mxu0 %v463
      %v567 = vpop.f32.mrb[0].mxu0
      %v568 = vadd.f32 0.0, %v567
      %v569 = vpop.f32.mrb[0].mxu0
      %v570 = vpop.f32.mrb[0].mxu0
      %v571 = vadd.f32 0.0, %v570
      %v572 = vpop.f32.mrb[0].mxu0
      %573 = vmatprep.mubr.bf16.mxu0 0
      %574 = vmatmul.mubr.bf16.gmra.mrb[0].mxu0 %v464
      %v575 = vpop.f32.mrb[0].mxu0
      %v576 = vadd.f32 0.0, %v575
      %v577 = vpop.f32.mrb[0].mxu0
      %v578 = vpop.f32.mrb[0].mxu0
      %v579 = vadd.f32 0.0, %v578
      %v580 = vpop.f32.mrb[0].mxu0
      %581 = vdwg.mxu0
      %v590 = vunpack.c.l.b16 %v289
      %v591 = vunpack.c.l.b16 %v290
      %v592 = vunpack.c.l.b16 %v291
      %v593 = vunpack.c.l.b16 %v292
      %v594 = vunpack.c.l.b16 %v293
      %v595 = vunpack.c.l.b16 %v294
      %v596 = vunpack.c.l.b16 %v295
      %v597 = vunpack.c.l.b16 %v296
      %v598 = vpack.c.b16 %v591, %v590
      %v599 = vpack.c.b16 %v593, %v592
      %v600 = vpack.c.b16 %v595, %v594
      %v601 = vpack.c.b16 %v597, %v596
      %v622 = vunpack.c.l.b16 %v297
      %v623 = vunpack.c.l.b16 %v298
      %v624 = vunpack.c.l.b16 %v299
      %v625 = vunpack.c.l.b16 %v300
      %v626 = vunpack.c.l.b16 %v301
      %v627 = vunpack.c.l.b16 %v302
      %v628 = vunpack.c.l.b16 %v303
      %v629 = vunpack.c.l.b16 %v304
      %v630 = vunpack.c.l.b16 %v305
      %v631 = vunpack.c.l.b16 %v306
      %v632 = vunpack.c.l.b16 %v307
      %v633 = vunpack.c.l.b16 %v308
      %v634 = vunpack.c.l.b16 %v309
      %v635 = vunpack.c.l.b16 %v310
      %v636 = vunpack.c.l.b16 %v311
      %v637 = vunpack.c.l.b16 %v312
      %v638 = vpack.c.b16 %v623, %v622
      %v639 = vpack.c.b16 %v625, %v624
      %v640 = vpack.c.b16 %v627, %v626
      %v641 = vpack.c.b16 %v629, %v628
      %v642 = vpack.c.b16 %v631, %v630
      %v643 = vpack.c.b16 %v633, %v632
      %v644 = vpack.c.b16 %v635, %v634
      %v645 = vpack.c.b16 %v637, %v636
      %654 = vmatprep.subr.bf16.mxu0 0
      %655 = vmatpush1.bf16.msra.mxu0 %v638
      %656 = vmatprep.subr.bf16.mxu0 0
      %657 = vmatpush1.bf16.msra.mxu0 %v639
      %658 = vmatprep.subr.bf16.mxu0 0
      %659 = vmatpush1.bf16.msra.mxu0 %v640
      %660 = vmatprep.subr.bf16.mxu0 0
      %661 = vmatpush1.bf16.msra.mxu0 %v641
      %662 = vmatprep.subr.bf16.mxu0 0
      %663 = vmatpush1.bf16.msra.mxu0 %v642
      %664 = vmatprep.subr.bf16.mxu0 0
      %665 = vmatpush1.bf16.msra.mxu0 %v643
      %666 = vmatprep.subr.bf16.mxu0 0
      %667 = vmatpush1.bf16.msra.mxu0 %v644
      %668 = vmatprep.subr.bf16.mxu0 0
      %669 = vmatpush1.bf16.msra.mxu0 %v645
      %670 = vmatprep.subr.bf16.mxu0 0
      %671 = vmatpush1.bf16.msra.mxu0 0
      %672 = vmatprep.subr.bf16.mxu0 0
      %673 = vmatpush1.bf16.msra.mxu0 0
      %674 = vmatprep.subr.bf16.mxu0 0
      %675 = vmatpush1.bf16.msra.mxu0 0
      %676 = vmatprep.subr.bf16.mxu0 0
      %677 = vmatpush1.bf16.msra.mxu0 0
      %678 = vmatprep.subr.bf16.mxu0 0
      %679 = vmatpush1.bf16.msra.mxu0 0
      %680 = vmatprep.subr.bf16.mxu0 0
      %681 = vmatpush1.bf16.msra.mxu0 0
      %682 = vmatprep.subr.bf16.mxu0 0
      %683 = vmatpush1.bf16.msra.mxu0 0
      %684 = vmatprep.subr.bf16.mxu0 0
      %685 = vmatpush1.bf16.msra.mxu0 0
      %686 = vmatprep.mubr.bf16.mxu0 0
      %687 = vmatmul.mubr.bf16.gmra.mrb[0].mxu0 %v598
      %v688 = vpop.f32.mrb[0].mxu0
      %v689 = vadd.f32 %v552, %v688
      %v690 = vpop.f32.mrb[0].mxu0
      %v691 = vpop.f32.mrb[0].mxu0
      %v692 = vadd.f32 %v555, %v691
      %v693 = vpop.f32.mrb[0].mxu0
      %694 = vmatprep.mubr.bf16.mxu0 0
      %695 = vmatmul.mubr.bf16.gmra.mrb[0].mxu0 %v599
      %v696 = vpop.f32.mrb[0].mxu0
      %v697 = vadd.f32 %v560, %v696
      %v698 = vpop.f32.mrb[0].mxu0
      %v699 = vpop.f32.mrb[0].mxu0
      %v700 = vadd.f32 %v563, %v699
      %v701 = vpop.f32.mrb[0].mxu0
      %702 = vmatprep.mubr.bf16.mxu0 0
      %703 = vmatmul.mubr.bf16.gmra.mrb[0].mxu0 %v600
      %v704 = vpop.f32.mrb[0].mxu0
      %v705 = vadd.f32 %v568, %v704
      %v706 = vpop.f32.mrb[0].mxu0
      %v707 = vpop.f32.mrb[0].mxu0
      %v708 = vadd.f32 %v571, %v707
      %v709 = vpop.f32.mrb[0].mxu0
      %710 = vmatprep.mubr.bf16.mxu0 0
      %711 = vmatmul.mubr.bf16.gmra.mrb[0].mxu0 %v601
      %v712 = vpop.f32.mrb[0].mxu0
      %v713 = vadd.f32 %v576, %v712
      %v714 = vpop.f32.mrb[0].mxu0
      %v715 = vpop.f32.mrb[0].mxu0
      %v716 = vadd.f32 %v579, %v715
      %v717 = vpop.f32.mrb[0].mxu0
      %718 = vdwg.mxu0
      %v719 = vld [vmem:[%s288] sm:$0xe]
      %v720 = vld [vmem:[%s288 + $0x8] sm:$0xe]
      %v721 = vld [vmem:[%s288 + $0x10] sm:$0xe]
      %v722 = vld [vmem:[%s288 + $0x18] sm:$0xe]
      %v723 = vld [vmem:[%s288 + $0x20] sm:$0xe]
      %v724 = vld [vmem:[%s288 + $0x28] sm:$0xe]
      %v725 = vld [vmem:[%s288 + $0x30] sm:$0xe]
      %v726 = vld [vmem:[%s288 + $0x38] sm:$0xe]
      %vm743 = vcmask 1042432
      %vm744 = vcmask 1046532
      %vm745 = vmor %vm743, %vm744
      %v746 = vrot.slane %v719, 5
      %v747 = vrot.slane %v746, 4
      %v748 = vrot.slane %v313, 5
      %v749 = vsel %vm745, %v747, %v748
      %v750 = vrot.slane %v720, 5
      %v751 = vrot.slane %v750, 4
      %v752 = vrot.slane %v314, 5
      %v753 = vsel %vm745, %v751, %v752
      %v754 = vrot.slane %v721, 5
      %v755 = vrot.slane %v754, 4
      %v756 = vrot.slane %v315, 5
      %v757 = vsel %vm745, %v755, %v756
      %v758 = vrot.slane %v722, 5
      %v759 = vrot.slane %v758, 4
      %v760 = vrot.slane %v316, 5
      %v761 = vsel %vm745, %v759, %v760
      %v762 = vrot.slane %v723, 5
      %v763 = vrot.slane %v762, 4
      %v764 = vrot.slane %v317, 5
      %v765 = vsel %vm745, %v763, %v764
      %v766 = vrot.slane %v724, 5
      %v767 = vrot.slane %v766, 4
      %v768 = vrot.slane %v318, 5
      %v769 = vsel %vm745, %v767, %v768
      %v770 = vrot.slane %v725, 5
      %v771 = vrot.slane %v770, 4
      %v772 = vrot.slane %v319, 5
      %v773 = vsel %vm745, %v771, %v772
      %v774 = vrot.slane %v726, 5
      %v775 = vrot.slane %v774, 4
      %v776 = vrot.slane %v320, 5
      %v777 = vsel %vm745, %v775, %v776
      %s778 = scalar_lea.vmem %s1, 128
      %v779 = vld [vmem:[%s778] sm:$0xf]
      %v780 = vld [vmem:[%s778 + $0x4] sm:$0xf]
      %v781 = vld [vmem:[%s778 + $0x8] sm:$0xf]
      %v782 = vld [vmem:[%s778 + $0xc] sm:$0xf]
      %v783 = vld [vmem:[%s778 + $0x10] sm:$0xf]
      %v784 = vld [vmem:[%s778 + $0x14] sm:$0xf]
      %v785 = vld [vmem:[%s778 + $0x18] sm:$0xf]
      %v786 = vld [vmem:[%s778 + $0x1c] sm:$0xf]
      %v787 = vld [vmem:[%s778 + $0x20] sm:$0xf]
      %v788 = vld [vmem:[%s778 + $0x24] sm:$0xf]
      %v789 = vld [vmem:[%s778 + $0x28] sm:$0xf]
      %v790 = vld [vmem:[%s778 + $0x2c] sm:$0xf]
      %v791 = vld [vmem:[%s778 + $0x30] sm:$0xf]
      %v792 = vld [vmem:[%s778 + $0x34] sm:$0xf]
      %v793 = vld [vmem:[%s778 + $0x38] sm:$0xf]
      %v794 = vld [vmem:[%s778 + $0x3c] sm:$0xf]
      %v795 = vunpack.c.l.b16 %v749
      %v796 = vunpack.c.l.b16 %v753
      %v797 = vunpack.c.l.b16 %v757
      %v798 = vunpack.c.l.b16 %v761
      %v799 = vunpack.c.l.b16 %v765
      %v800 = vunpack.c.l.b16 %v769
      %v801 = vunpack.c.l.b16 %v773
      %v802 = vunpack.c.l.b16 %v777
      %v803 = vpack.c.b16 %v796, %v795
      %v804 = vpack.c.b16 %v798, %v797
      %v805 = vpack.c.b16 %v800, %v799
      %v806 = vpack.c.b16 %v802, %v801
      %v827 = vunpack.c.l.b16 %v779
      %v828 = vunpack.c.l.b16 %v780
      %v829 = vunpack.c.l.b16 %v781
      %v830 = vunpack.c.l.b16 %v782
      %v831 = vunpack.c.l.b16 %v783
      %v832 = vunpack.c.l.b16 %v784
      %v833 = vunpack.c.l.b16 %v785
      %v834 = vunpack.c.l.b16 %v786
      %v835 = vunpack.c.l.b16 %v787
      %v836 = vunpack.c.l.b16 %v788
      %v837 = vunpack.c.l.b16 %v789
      %v838 = vunpack.c.l.b16 %v790
      %v839 = vunpack.c.l.b16 %v791
      %v840 = vunpack.c.l.b16 %v792
      %v841 = vunpack.c.l.b16 %v793
      %v842 = vunpack.c.l.b16 %v794
      %v843 = vpack.c.b16 %v828, %v827
      %v844 = vpack.c.b16 %v830, %v829
      %v845 = vpack.c.b16 %v832, %v831
      %v846 = vpack.c.b16 %v834, %v833
      %v847 = vpack.c.b16 %v836, %v835
      %v848 = vpack.c.b16 %v838, %v837
      %v849 = vpack.c.b16 %v840, %v839
      %v850 = vpack.c.b16 %v842, %v841
      %859 = vmatprep.subr.bf16.mxu0 0
      %860 = vmatpush1.bf16.msra.mxu0 %v843
      %861 = vmatprep.subr.bf16.mxu0 0
      %862 = vmatpush1.bf16.msra.mxu0 %v844
      %863 = vmatprep.subr.bf16.mxu0 0
      %864 = vmatpush1.bf16.msra.mxu0 %v845
      %865 = vmatprep.subr.bf16.mxu0 0
      %866 = vmatpush1.bf16.msra.mxu0 %v846
      %867 = vmatprep.subr.bf16.mxu0 0
      %868 = vmatpush1.bf16.msra.mxu0 %v847
      %869 = vmatprep.subr.bf16.mxu0 0
      %870 = vmatpush1.bf16.msra.mxu0 %v848
      %871 = vmatprep.subr.bf16.mxu0 0
      %872 = vmatpush1.bf16.msra.mxu0 %v849
      %873 = vmatprep.subr.bf16.mxu0 0
      %874 = vmatpush1.bf16.msra.mxu0 %v850
      %875 = vmatprep.subr.bf16.mxu0 0
      %876 = vmatpush1.bf16.msra.mxu0 0
      %877 = vmatprep.subr.bf16.mxu0 0
      %878 = vmatpush1.bf16.msra.mxu0 0
      %879 = vmatprep.subr.bf16.mxu0 0
      %880 = vmatpush1.bf16.msra.mxu0 0
      %881 = vmatprep.subr.bf16.mxu0 0
      %882 = vmatpush1.bf16.msra.mxu0 0
      %883 = vmatprep.subr.bf16.mxu0 0
      %884 = vmatpush1.bf16.msra.mxu0 0
      %885 = vmatprep.subr.bf16.mxu0 0
      %886 = vmatpush1.bf16.msra.mxu0 0
      %887 = vmatprep.subr.bf16.mxu0 0
      %888 = vmatpush1.bf16.msra.mxu0 0
      %889 = vmatprep.subr.bf16.mxu0 0
      %890 = vmatpush1.bf16.msra.mxu0 0
      %891 = vmatprep.mubr.bf16.mxu0 0
      %892 = vmatmul.mubr.bf16.gmra.mrb[0].mxu0 %v803
      %v893 = vpop.f32.mrb[0].mxu0
      %v894 = vadd.f32 0.0, %v893
      %v895 = vpop.f32.mrb[0].mxu0
      %v896 = vpop.f32.mrb[0].mxu0
      %v897 = vadd.f32 0.0, %v896
      %v898 = vpop.f32.mrb[0].mxu0
      %899 = vmatprep.mubr.bf16.mxu0 0
      %900 = vmatmul.mubr.bf16.gmra.mrb[0].mxu0 %v804
      %v901 = vpop.f32.mrb[0].mxu0
      %v902 = vadd.f32 0.0, %v901
      %v903 = vpop.f32.mrb[0].mxu0
      %v904 = vpop.f32.mrb[0].mxu0
      %v905 = vadd.f32 0.0, %v904
      %v906 = vpop.f32.mrb[0].mxu0
      %907 = vmatprep.mubr.bf16.mxu0 0
      %908 = vmatmul.mubr.bf16.gmra.mrb[0].mxu0 %v805
      %v909 = vpop.f32.mrb[0].mxu0
      %v910 = vadd.f32 0.0, %v909
      %v911 = vpop.f32.mrb[0].mxu0
      %v912 = vpop.f32.mrb[0].mxu0
      %v913 = vadd.f32 0.0, %v912
      %v914 = vpop.f32.mrb[0].mxu0
      %915 = vmatprep.mubr.bf16.mxu0 0
      %916 = vmatmul.mubr.bf16.gmra.mrb[0].mxu0 %v806
      %v917 = vpop.f32.mrb[0].mxu0
      %v918 = vadd.f32 0.0, %v917
      %v919 = vpop.f32.mrb[0].mxu0
      %v920 = vpop.f32.mrb[0].mxu0
      %v921 = vadd.f32 0.0, %v920
      %v922 = vpop.f32.mrb[0].mxu0
      %923 = vdwg.mxu0
      %v924 = vadd.f32 %v689, %v894
      %v925 = vadd.f32 %v692, %v897
      %v926 = vadd.f32 %v697, %v902
      %v927 = vadd.f32 %v700, %v905
      %v928 = vadd.f32 %v705, %v910
      %v929 = vadd.f32 %v708, %v913
      %v930 = vadd.f32 %v713, %v918
      %v931 = vadd.f32 %v716, %v921
      %s932 = sadd.s32 %s285, 1
      %s933 = smul.u32 %s932, 2
      %s934 = smul.addr %s933, 4
      %s935 = scalar_lea.vmem %s263, %s934
      %v936 = vld [vmem:[%s935] sm:$0xf]
      %v937 = vld [vmem:[%s935 + $0x8] sm:$0xf]
      %v938 = vld [vmem:[%s935 + $0x10] sm:$0xf]
      %v939 = vld [vmem:[%s935 + $0x18] sm:$0xf]
      %v940 = vld [vmem:[%s935 + $0x20] sm:$0xf]
      %v941 = vld [vmem:[%s935 + $0x28] sm:$0xf]
      %v942 = vld [vmem:[%s935 + $0x30] sm:$0xf]
      %v943 = vld [vmem:[%s935 + $0x38] sm:$0xf]
      %s944 = scalar_lea.vmem %s1, 192
      %v945 = vld [vmem:[%s944] sm:$0xf]
      %v946 = vld [vmem:[%s944 + $0x4] sm:$0xf]
      %v947 = vld [vmem:[%s944 + $0x8] sm:$0xf]
      %v948 = vld [vmem:[%s944 + $0xc] sm:$0xf]
      %v949 = vld [vmem:[%s944 + $0x10] sm:$0xf]
      %v950 = vld [vmem:[%s944 + $0x14] sm:$0xf]
      %v951 = vld [vmem:[%s944 + $0x18] sm:$0xf]
      %v952 = vld [vmem:[%s944 + $0x1c] sm:$0xf]
      %v953 = vld [vmem:[%s944 + $0x20] sm:$0xf]
      %v954 = vld [vmem:[%s944 + $0x24] sm:$0xf]
      %v955 = vld [vmem:[%s944 + $0x28] sm:$0xf]
      %v956 = vld [vmem:[%s944 + $0x2c] sm:$0xf]
      %v957 = vld [vmem:[%s944 + $0x30] sm:$0xf]
      %v958 = vld [vmem:[%s944 + $0x34] sm:$0xf]
      %v959 = vld [vmem:[%s944 + $0x38] sm:$0xf]
      %v960 = vld [vmem:[%s944 + $0x3c] sm:$0xf]
      %v969 = vunpack.c.l.b16 %v936
      %v970 = vunpack.c.l.b16 %v937
      %v971 = vunpack.c.l.b16 %v938
      %v972 = vunpack.c.l.b16 %v939
      %v973 = vunpack.c.l.b16 %v940
      %v974 = vunpack.c.l.b16 %v941
      %v975 = vunpack.c.l.b16 %v942
      %v976 = vunpack.c.l.b16 %v943
      %v977 = vpack.c.b16 %v970, %v969
      %v978 = vpack.c.b16 %v972, %v971
      %v979 = vpack.c.b16 %v974, %v973
      %v980 = vpack.c.b16 %v976, %v975
      %v1001 = vunpack.c.l.b16 %v945
      %v1002 = vunpack.c.l.b16 %v946
      %v1003 = vunpack.c.l.b16 %v947
      %v1004 = vunpack.c.l.b16 %v948
      %v1005 = vunpack.c.l.b16 %v949
      %v1006 = vunpack.c.l.b16 %v950
      %v1007 = vunpack.c.l.b16 %v951
      %v1008 = vunpack.c.l.b16 %v952
      %v1009 = vunpack.c.l.b16 %v953
      %v1010 = vunpack.c.l.b16 %v954
      %v1011 = vunpack.c.l.b16 %v955
      %v1012 = vunpack.c.l.b16 %v956
      %v1013 = vunpack.c.l.b16 %v957
      %v1014 = vunpack.c.l.b16 %v958
      %v1015 = vunpack.c.l.b16 %v959
      %v1016 = vunpack.c.l.b16 %v960
      %v1017 = vpack.c.b16 %v1002, %v1001
      %v1018 = vpack.c.b16 %v1004, %v1003
      %v1019 = vpack.c.b16 %v1006, %v1005
      %v1020 = vpack.c.b16 %v1008, %v1007
      %v1021 = vpack.c.b16 %v1010, %v1009
      %v1022 = vpack.c.b16 %v1012, %v1011
      %v1023 = vpack.c.b16 %v1014, %v1013
      %v1024 = vpack.c.b16 %v1016, %v1015
      %1033 = vmatprep.subr.bf16.mxu0 0
      %1034 = vmatpush1.bf16.msra.mxu0 %v1017
      %1035 = vmatprep.subr.bf16.mxu0 0
      %1036 = vmatpush1.bf16.msra.mxu0 %v1018
      %1037 = vmatprep.subr.bf16.mxu0 0
      %1038 = vmatpush1.bf16.msra.mxu0 %v1019
      %1039 = vmatprep.subr.bf16.mxu0 0
      %1040 = vmatpush1.bf16.msra.mxu0 %v1020
      %1041 = vmatprep.subr.bf16.mxu0 0
      %1042 = vmatpush1.bf16.msra.mxu0 %v1021
      %1043 = vmatprep.subr.bf16.mxu0 0
      %1044 = vmatpush1.bf16.msra.mxu0 %v1022
      %1045 = vmatprep.subr.bf16.mxu0 0
      %1046 = vmatpush1.bf16.msra.mxu0 %v1023
      %1047 = vmatprep.subr.bf16.mxu0 0
      %1048 = vmatpush1.bf16.msra.mxu0 %v1024
      %1049 = vmatprep.subr.bf16.mxu0 0
      %1050 = vmatpush1.bf16.msra.mxu0 0
      %1051 = vmatprep.subr.bf16.mxu0 0
      %1052 = vmatpush1.bf16.msra.mxu0 0
      %1053 = vmatprep.subr.bf16.mxu0 0
      %1054 = vmatpush1.bf16.msra.mxu0 0
      %1055 = vmatprep.subr.bf16.mxu0 0
      %1056 = vmatpush1.bf16.msra.mxu0 0
      %1057 = vmatprep.subr.bf16.mxu0 0
      %1058 = vmatpush1.bf16.msra.mxu0 0
      %1059 = vmatprep.subr.bf16.mxu0 0
      %1060 = vmatpush1.bf16.msra.mxu0 0
      %1061 = vmatprep.subr.bf16.mxu0 0
      %1062 = vmatpush1.bf16.msra.mxu0 0
      %1063 = vmatprep.subr.bf16.mxu0 0
      %1064 = vmatpush1.bf16.msra.mxu0 0
      %1065 = vmatprep.mubr.bf16.mxu0 0
      %1066 = vmatmul.mubr.bf16.gmra.mrb[0].mxu0 %v977
      %v1067 = vpop.f32.mrb[0].mxu0
      %v1068 = vadd.f32 0.0, %v1067
      %v1069 = vpop.f32.mrb[0].mxu0
      %v1070 = vpop.f32.mrb[0].mxu0
      %v1071 = vadd.f32 0.0, %v1070
      %v1072 = vpop.f32.mrb[0].mxu0
      %1073 = vmatprep.mubr.bf16.mxu0 0
      %1074 = vmatmul.mubr.bf16.gmra.mrb[0].mxu0 %v978
      %v1075 = vpop.f32.mrb[0].mxu0
      %v1076 = vadd.f32 0.0, %v1075
      %v1077 = vpop.f32.mrb[0].mxu0
      %v1078 = vpop.f32.mrb[0].mxu0
      %v1079 = vadd.f32 0.0, %v1078
      %v1080 = vpop.f32.mrb[0].mxu0
      %1081 = vmatprep.mubr.bf16.mxu0 0
      %1082 = vmatmul.mubr.bf16.gmra.mrb[0].mxu0 %v979
      %v1083 = vpop.f32.mrb[0].mxu0
      %v1084 = vadd.f32 0.0, %v1083
      %v1085 = vpop.f32.mrb[0].mxu0
      %v1086 = vpop.f32.mrb[0].mxu0
      %v1087 = vadd.f32 0.0, %v1086
      %v1088 = vpop.f32.mrb[0].mxu0
      %1089 = vmatprep.mubr.bf16.mxu0 0
      %1090 = vmatmul.mubr.bf16.gmra.mrb[0].mxu0 %v980
      %v1091 = vpop.f32.mrb[0].mxu0
      %v1092 = vadd.f32 0.0, %v1091
      %v1093 = vpop.f32.mrb[0].mxu0
      %v1094 = vpop.f32.mrb[0].mxu0
      %v1095 = vadd.f32 0.0, %v1094
      %v1096 = vpop.f32.mrb[0].mxu0
      %1097 = vdwg.mxu0
      %v1098 = vadd.f32 %v924, %v1068
      %v1099 = vadd.f32 %v925, %v1071
      %v1100 = vadd.f32 %v926, %v1076
      %v1101 = vadd.f32 %v927, %v1079
      %v1102 = vadd.f32 %v928, %v1084
      %v1103 = vadd.f32 %v929, %v1087
      %v1104 = vadd.f32 %v930, %v1092
      %v1105 = vadd.f32 %v931, %v1095
      %v1106 = vld [vmem:[%s935] sm:$0xf]
      %v1107 = vld [vmem:[%s935 + $0x4] sm:$0x1]
      %v1108 = vld [vmem:[%s935 + $0x8] sm:$0xf]
      %v1109 = vld [vmem:[%s935 + $0xc] sm:$0x1]
      %v1110 = vld [vmem:[%s935 + $0x10] sm:$0xf]
      %v1111 = vld [vmem:[%s935 + $0x14] sm:$0x1]
      %v1112 = vld [vmem:[%s935 + $0x18] sm:$0xf]
      %v1113 = vld [vmem:[%s935 + $0x1c] sm:$0x1]
      %v1114 = vld [vmem:[%s935 + $0x20] sm:$0xf]
      %v1115 = vld [vmem:[%s935 + $0x24] sm:$0x1]
      %v1116 = vld [vmem:[%s935 + $0x28] sm:$0xf]
      %v1117 = vld [vmem:[%s935 + $0x2c] sm:$0x1]
      %v1118 = vld [vmem:[%s935 + $0x30] sm:$0xf]
      %v1119 = vld [vmem:[%s935 + $0x34] sm:$0x1]
      %v1120 = vld [vmem:[%s935 + $0x38] sm:$0xf]
      %v1121 = vld [vmem:[%s935 + $0x3c] sm:$0x1]
      %v1123 = vshrl.u32 %v1106, 16
      %v1125 = vrot.slane %v1123, 4
      %v1126 = vshll.u32 %v1106, 16
      %v1128 = vrot.slane %v1126, 5
      %v1129 = vor.u32 %v1125, %v1128
      %v1130 = vrot.slane %v1129, 4
      %v1132 = vshll.u32 %v1107, 16
      %v1134 = vrot.slane %v1132, 5
      %v1135 = vsel %vm323, %v1130, %v1134
      %v1137 = vshrl.u32 %v1108, 16
      %v1139 = vrot.slane %v1137, 4
      %v1140 = vshll.u32 %v1108, 16
      %v1142 = vrot.slane %v1140, 5
      %v1143 = vor.u32 %v1139, %v1142
      %v1144 = vrot.slane %v1143, 4
      %v1146 = vshll.u32 %v1109, 16
      %v1148 = vrot.slane %v1146, 5
      %v1149 = vsel %vm323, %v1144, %v1148
      %v1151 = vshrl.u32 %v1110, 16
      %v1153 = vrot.slane %v1151, 4
      %v1154 = vshll.u32 %v1110, 16
      %v1156 = vrot.slane %v1154, 5
      %v1157 = vor.u32 %v1153, %v1156
      %v1158 = vrot.slane %v1157, 4
      %v1160 = vshll.u32 %v1111, 16
      %v1162 = vrot.slane %v1160, 5
      %v1163 = vsel %vm323, %v1158, %v1162
      %v1165 = vshrl.u32 %v1112, 16
      %v1167 = vrot.slane %v1165, 4
      %v1168 = vshll.u32 %v1112, 16
      %v1170 = vrot.slane %v1168, 5
      %v1171 = vor.u32 %v1167, %v1170
      %v1172 = vrot.slane %v1171, 4
      %v1174 = vshll.u32 %v1113, 16
      %v1176 = vrot.slane %v1174, 5
      %v1177 = vsel %vm323, %v1172, %v1176
      %v1179 = vshrl.u32 %v1114, 16
      %v1181 = vrot.slane %v1179, 4
      %v1182 = vshll.u32 %v1114, 16
      %v1184 = vrot.slane %v1182, 5
      %v1185 = vor.u32 %v1181, %v1184
      %v1186 = vrot.slane %v1185, 4
      %v1188 = vshll.u32 %v1115, 16
      %v1190 = vrot.slane %v1188, 5
      %v1191 = vsel %vm323, %v1186, %v1190
      %v1193 = vshrl.u32 %v1116, 16
      %v1195 = vrot.slane %v1193, 4
      %v1196 = vshll.u32 %v1116, 16
      %v1198 = vrot.slane %v1196, 5
      %v1199 = vor.u32 %v1195, %v1198
      %v1200 = vrot.slane %v1199, 4
      %v1202 = vshll.u32 %v1117, 16
      %v1204 = vrot.slane %v1202, 5
      %v1205 = vsel %vm323, %v1200, %v1204
      %v1207 = vshrl.u32 %v1118, 16
      %v1209 = vrot.slane %v1207, 4
      %v1210 = vshll.u32 %v1118, 16
      %v1212 = vrot.slane %v1210, 5
      %v1213 = vor.u32 %v1209, %v1212
      %v1214 = vrot.slane %v1213, 4
      %v1216 = vshll.u32 %v1119, 16
      %v1218 = vrot.slane %v1216, 5
      %v1219 = vsel %vm323, %v1214, %v1218
      %v1221 = vshrl.u32 %v1120, 16
      %v1223 = vrot.slane %v1221, 4
      %v1224 = vshll.u32 %v1120, 16
      %v1226 = vrot.slane %v1224, 5
      %v1227 = vor.u32 %v1223, %v1226
      %v1228 = vrot.slane %v1227, 4
      %v1230 = vshll.u32 %v1121, 16
      %v1232 = vrot.slane %v1230, 5
      %v1233 = vsel %vm323, %v1228, %v1232
      %s1234 = scalar_lea.vmem %s1, 256
      %v1235 = vld [vmem:[%s1234] sm:$0xf]
      %v1236 = vld [vmem:[%s1234 + $0x4] sm:$0xf]
      %v1237 = vld [vmem:[%s1234 + $0x8] sm:$0xf]
      %v1238 = vld [vmem:[%s1234 + $0xc] sm:$0xf]
      %v1239 = vld [vmem:[%s1234 + $0x10] sm:$0xf]
      %v1240 = vld [vmem:[%s1234 + $0x14] sm:$0xf]
      %v1241 = vld [vmem:[%s1234 + $0x18] sm:$0xf]
      %v1242 = vld [vmem:[%s1234 + $0x1c] sm:$0xf]
      %v1243 = vld [vmem:[%s1234 + $0x20] sm:$0xf]
      %v1244 = vld [vmem:[%s1234 + $0x24] sm:$0xf]
      %v1245 = vld [vmem:[%s1234 + $0x28] sm:$0xf]
      %v1246 = vld [vmem:[%s1234 + $0x2c] sm:$0xf]
      %v1247 = vld [vmem:[%s1234 + $0x30] sm:$0xf]
      %v1248 = vld [vmem:[%s1234 + $0x34] sm:$0xf]
      %v1249 = vld [vmem:[%s1234 + $0x38] sm:$0xf]
      %v1250 = vld [vmem:[%s1234 + $0x3c] sm:$0xf]
      %v1251 = vunpack.c.l.b16 %v1135
      %v1252 = vunpack.c.l.b16 %v1149
      %v1253 = vunpack.c.l.b16 %v1163
      %v1254 = vunpack.c.l.b16 %v1177
      %v1255 = vunpack.c.l.b16 %v1191
      %v1256 = vunpack.c.l.b16 %v1205
      %v1257 = vunpack.c.l.b16 %v1219
      %v1258 = vunpack.c.l.b16 %v1233
      %v1259 = vpack.c.b16 %v1252, %v1251
      %v1260 = vpack.c.b16 %v1254, %v1253
      %v1261 = vpack.c.b16 %v1256, %v1255
      %v1262 = vpack.c.b16 %v1258, %v1257
      %v1283 = vunpack.c.l.b16 %v1235
      %v1284 = vunpack.c.l.b16 %v1236
      %v1285 = vunpack.c.l.b16 %v1237
      %v1286 = vunpack.c.l.b16 %v1238
      %v1287 = vunpack.c.l.b16 %v1239
      %v1288 = vunpack.c.l.b16 %v1240
      %v1289 = vunpack.c.l.b16 %v1241
      %v1290 = vunpack.c.l.b16 %v1242
      %v1291 = vunpack.c.l.b16 %v1243
      %v1292 = vunpack.c.l.b16 %v1244
      %v1293 = vunpack.c.l.b16 %v1245
      %v1294 = vunpack.c.l.b16 %v1246
      %v1295 = vunpack.c.l.b16 %v1247
      %v1296 = vunpack.c.l.b16 %v1248
      %v1297 = vunpack.c.l.b16 %v1249
      %v1298 = vunpack.c.l.b16 %v1250
      %v1299 = vpack.c.b16 %v1284, %v1283
      %v1300 = vpack.c.b16 %v1286, %v1285
      %v1301 = vpack.c.b16 %v1288, %v1287
      %v1302 = vpack.c.b16 %v1290, %v1289
      %v1303 = vpack.c.b16 %v1292, %v1291
      %v1304 = vpack.c.b16 %v1294, %v1293
      %v1305 = vpack.c.b16 %v1296, %v1295
      %v1306 = vpack.c.b16 %v1298, %v1297
      %1315 = vmatprep.subr.bf16.mxu0 0
      %1316 = vmatpush1.bf16.msra.mxu0 %v1299
      %1317 = vmatprep.subr.bf16.mxu0 0
      %1318 = vmatpush1.bf16.msra.mxu0 %v1300
      %1319 = vmatprep.subr.bf16.mxu0 0
      %1320 = vmatpush1.bf16.msra.mxu0 %v1301
      %1321 = vmatprep.subr.bf16.mxu0 0
      %1322 = vmatpush1.bf16.msra.mxu0 %v1302
      %1323 = vmatprep.subr.bf16.mxu0 0
      %1324 = vmatpush1.bf16.msra.mxu0 %v1303
      %1325 = vmatprep.subr.bf16.mxu0 0
      %1326 = vmatpush1.bf16.msra.mxu0 %v1304
      %1327 = vmatprep.subr.bf16.mxu0 0
      %1328 = vmatpush1.bf16.msra.mxu0 %v1305
      %1329 = vmatprep.subr.bf16.mxu0 0
      %1330 = vmatpush1.bf16.msra.mxu0 %v1306
      %1331 = vmatprep.subr.bf16.mxu0 0
      %1332 = vmatpush1.bf16.msra.mxu0 0
      %1333 = vmatprep.subr.bf16.mxu0 0
      %1334 = vmatpush1.bf16.msra.mxu0 0
      %1335 = vmatprep.subr.bf16.mxu0 0
      %1336 = vmatpush1.bf16.msra.mxu0 0
      %1337 = vmatprep.subr.bf16.mxu0 0
      %1338 = vmatpush1.bf16.msra.mxu0 0
      %1339 = vmatprep.subr.bf16.mxu0 0
      %1340 = vmatpush1.bf16.msra.mxu0 0
      %1341 = vmatprep.subr.bf16.mxu0 0
      %1342 = vmatpush1.bf16.msra.mxu0 0
      %1343 = vmatprep.subr.bf16.mxu0 0
      %1344 = vmatpush1.bf16.msra.mxu0 0
      %1345 = vmatprep.subr.bf16.mxu0 0
      %1346 = vmatpush1.bf16.msra.mxu0 0
      %1347 = vmatprep.mubr.bf16.mxu0 0
      %1348 = vmatmul.mubr.bf16.gmra.mrb[0].mxu0 %v1259
      %v1349 = vpop.f32.mrb[0].mxu0
      %v1350 = vadd.f32 0.0, %v1349
      %v1351 = vpop.f32.mrb[0].mxu0
      %v1352 = vpop.f32.mrb[0].mxu0
      %v1353 = vadd.f32 0.0, %v1352
      %v1354 = vpop.f32.mrb[0].mxu0
      %1355 = vmatprep.mubr.bf16.mxu0 0
      %1356 = vmatmul.mubr.bf16.gmra.mrb[0].mxu0 %v1260
      %v1357 = vpop.f32.mrb[0].mxu0
      %v1358 = vadd.f32 0.0, %v1357
      %v1359 = vpop.f32.mrb[0].mxu0
      %v1360 = vpop.f32.mrb[0].mxu0
      %v1361 = vadd.f32 0.0, %v1360
      %v1362 = vpop.f32.mrb[0].mxu0
      %1363 = vmatprep.mubr.bf16.mxu0 0
      %1364 = vmatmul.mubr.bf16.gmra.mrb[0].mxu0 %v1261
      %v1365 = vpop.f32.mrb[0].mxu0
      %v1366 = vadd.f32 0.0, %v1365
      %v1367 = vpop.f32.mrb[0].mxu0
      %v1368 = vpop.f32.mrb[0].mxu0
      %v1369 = vadd.f32 0.0, %v1368
      %v1370 = vpop.f32.mrb[0].mxu0
      %1371 = vmatprep.mubr.bf16.mxu0 0
      %1372 = vmatmul.mubr.bf16.gmra.mrb[0].mxu0 %v1262
      %v1373 = vpop.f32.mrb[0].mxu0
      %v1374 = vadd.f32 0.0, %v1373
      %v1375 = vpop.f32.mrb[0].mxu0
      %v1376 = vpop.f32.mrb[0].mxu0
      %v1377 = vadd.f32 0.0, %v1376
      %v1378 = vpop.f32.mrb[0].mxu0
      %1379 = vdwg.mxu0
      %v1380 = vadd.f32 %v1098, %v1350
      %v1381 = vadd.f32 %v1099, %v1353
      %v1382 = vadd.f32 %v1100, %v1358
      %v1383 = vadd.f32 %v1101, %v1361
      %v1384 = vadd.f32 %v1102, %v1366
      %v1385 = vadd.f32 %v1103, %v1369
      %v1386 = vadd.f32 %v1104, %v1374
      %v1387 = vadd.f32 %v1105, %v1377
      %v1388 = vld [vmem:[%s935] sm:$0xe]
      %v1389 = vld [vmem:[%s935 + $0x8] sm:$0xe]
      %v1390 = vld [vmem:[%s935 + $0x10] sm:$0xe]
      %v1391 = vld [vmem:[%s935 + $0x18] sm:$0xe]
      %v1392 = vld [vmem:[%s935 + $0x20] sm:$0xe]
      %v1393 = vld [vmem:[%s935 + $0x28] sm:$0xe]
      %v1394 = vld [vmem:[%s935 + $0x30] sm:$0xe]
      %v1395 = vld [vmem:[%s935 + $0x38] sm:$0xe]
      %v1412 = vrot.slane %v1388, 5
      %v1413 = vrot.slane %v1412, 4
      %v1414 = vrot.slane %v1107, 5
      %v1415 = vsel %vm745, %v1413, %v1414
      %v1416 = vrot.slane %v1389, 5
      %v1417 = vrot.slane %v1416, 4
      %v1418 = vrot.slane %v1109, 5
      %v1419 = vsel %vm745, %v1417, %v1418
      %v1420 = vrot.slane %v1390, 5
      %v1421 = vrot.slane %v1420, 4
      %v1422 = vrot.slane %v1111, 5
      %v1423 = vsel %vm745, %v1421, %v1422
      %v1424 = vrot.slane %v1391, 5
      %v1425 = vrot.slane %v1424, 4
      %v1426 = vrot.slane %v1113, 5
      %v1427 = vsel %vm745, %v1425, %v1426
      %v1428 = vrot.slane %v1392, 5
      %v1429 = vrot.slane %v1428, 4
      %v1430 = vrot.slane %v1115, 5
      %v1431 = vsel %vm745, %v1429, %v1430
      %v1432 = vrot.slane %v1393, 5
      %v1433 = vrot.slane %v1432, 4
      %v1434 = vrot.slane %v1117, 5
      %v1435 = vsel %vm745, %v1433, %v1434
      %v1436 = vrot.slane %v1394, 5
      %v1437 = vrot.slane %v1436, 4
      %v1438 = vrot.slane %v1119, 5
      %v1439 = vsel %vm745, %v1437, %v1438
      %v1440 = vrot.slane %v1395, 5
      %v1441 = vrot.slane %v1440, 4
      %v1442 = vrot.slane %v1121, 5
      %v1443 = vsel %vm745, %v1441, %v1442
      %s1444 = scalar_lea.vmem %s1, 320
      %v1445 = vld [vmem:[%s1444] sm:$0xf]
      %v1446 = vld [vmem:[%s1444 + $0x4] sm:$0xf]
      %v1447 = vld [vmem:[%s1444 + $0x8] sm:$0xf]
      %v1448 = vld [vmem:[%s1444 + $0xc] sm:$0xf]
      %v1449 = vld [vmem:[%s1444 + $0x10] sm:$0xf]
      %v1450 = vld [vmem:[%s1444 + $0x14] sm:$0xf]
      %v1451 = vld [vmem:[%s1444 + $0x18] sm:$0xf]
      %v1452 = vld [vmem:[%s1444 + $0x1c] sm:$0xf]
      %v1453 = vld [vmem:[%s1444 + $0x20] sm:$0xf]
      %v1454 = vld [vmem:[%s1444 + $0x24] sm:$0xf]
      %v1455 = vld [vmem:[%s1444 + $0x28] sm:$0xf]
      %v1456 = vld [vmem:[%s1444 + $0x2c] sm:$0xf]
      %v1457 = vld [vmem:[%s1444 + $0x30] sm:$0xf]
      %v1458 = vld [vmem:[%s1444 + $0x34] sm:$0xf]
      %v1459 = vld [vmem:[%s1444 + $0x38] sm:$0xf]
      %v1460 = vld [vmem:[%s1444 + $0x3c] sm:$0xf]
      %v1461 = vunpack.c.l.b16 %v1415
      %v1462 = vunpack.c.l.b16 %v1419
      %v1463 = vunpack.c.l.b16 %v1423
      %v1464 = vunpack.c.l.b16 %v1427
      %v1465 = vunpack.c.l.b16 %v1431
      %v1466 = vunpack.c.l.b16 %v1435
      %v1467 = vunpack.c.l.b16 %v1439
      %v1468 = vunpack.c.l.b16 %v1443
      %v1469 = vpack.c.b16 %v1462, %v1461
      %v1470 = vpack.c.b16 %v1464, %v1463
      %v1471 = vpack.c.b16 %v1466, %v1465
      %v1472 = vpack.c.b16 %v1468, %v1467
      %v1493 = vunpack.c.l.b16 %v1445
      %v1494 = vunpack.c.l.b16 %v1446
      %v1495 = vunpack.c.l.b16 %v1447
      %v1496 = vunpack.c.l.b16 %v1448
      %v1497 = vunpack.c.l.b16 %v1449
      %v1498 = vunpack.c.l.b16 %v1450
      %v1499 = vunpack.c.l.b16 %v1451
      %v1500 = vunpack.c.l.b16 %v1452
      %v1501 = vunpack.c.l.b16 %v1453
      %v1502 = vunpack.c.l.b16 %v1454
      %v1503 = vunpack.c.l.b16 %v1455
      %v1504 = vunpack.c.l.b16 %v1456
      %v1505 = vunpack.c.l.b16 %v1457
      %v1506 = vunpack.c.l.b16 %v1458
      %v1507 = vunpack.c.l.b16 %v1459
      %v1508 = vunpack.c.l.b16 %v1460
      %v1509 = vpack.c.b16 %v1494, %v1493
      %v1510 = vpack.c.b16 %v1496, %v1495
      %v1511 = vpack.c.b16 %v1498, %v1497
      %v1512 = vpack.c.b16 %v1500, %v1499
      %v1513 = vpack.c.b16 %v1502, %v1501
      %v1514 = vpack.c.b16 %v1504, %v1503
      %v1515 = vpack.c.b16 %v1506, %v1505
      %v1516 = vpack.c.b16 %v1508, %v1507
      %1525 = vmatprep.subr.bf16.mxu0 0
      %1526 = vmatpush1.bf16.msra.mxu0 %v1509
      %1527 = vmatprep.subr.bf16.mxu0 0
      %1528 = vmatpush1.bf16.msra.mxu0 %v1510
      %1529 = vmatprep.subr.bf16.mxu0 0
      %1530 = vmatpush1.bf16.msra.mxu0 %v1511
      %1531 = vmatprep.subr.bf16.mxu0 0
      %1532 = vmatpush1.bf16.msra.mxu0 %v1512
      %1533 = vmatprep.subr.bf16.mxu0 0
      %1534 = vmatpush1.bf16.msra.mxu0 %v1513
      %1535 = vmatprep.subr.bf16.mxu0 0
      %1536 = vmatpush1.bf16.msra.mxu0 %v1514
      %1537 = vmatprep.subr.bf16.mxu0 0
      %1538 = vmatpush1.bf16.msra.mxu0 %v1515
      %1539 = vmatprep.subr.bf16.mxu0 0
      %1540 = vmatpush1.bf16.msra.mxu0 %v1516
      %1541 = vmatprep.subr.bf16.mxu0 0
      %1542 = vmatpush1.bf16.msra.mxu0 0
      %1543 = vmatprep.subr.bf16.mxu0 0
      %1544 = vmatpush1.bf16.msra.mxu0 0
      %1545 = vmatprep.subr.bf16.mxu0 0
      %1546 = vmatpush1.bf16.msra.mxu0 0
      %1547 = vmatprep.subr.bf16.mxu0 0
      %1548 = vmatpush1.bf16.msra.mxu0 0
      %1549 = vmatprep.subr.bf16.mxu0 0
      %1550 = vmatpush1.bf16.msra.mxu0 0
      %1551 = vmatprep.subr.bf16.mxu0 0
      %1552 = vmatpush1.bf16.msra.mxu0 0
      %1553 = vmatprep.subr.bf16.mxu0 0
      %1554 = vmatpush1.bf16.msra.mxu0 0
      %1555 = vmatprep.subr.bf16.mxu0 0
      %1556 = vmatpush1.bf16.msra.mxu0 0
      %1557 = vmatprep.mubr.bf16.mxu0 0
      %1558 = vmatmul.mubr.bf16.gmra.mrb[0].mxu0 %v1469
      %v1559 = vpop.f32.mrb[0].mxu0
      %v1560 = vadd.f32 0.0, %v1559
      %v1561 = vpop.f32.mrb[0].mxu0
      %v1562 = vpop.f32.mrb[0].mxu0
      %v1563 = vadd.f32 0.0, %v1562
      %v1564 = vpop.f32.mrb[0].mxu0
      %1565 = vmatprep.mubr.bf16.mxu0 0
      %1566 = vmatmul.mubr.bf16.gmra.mrb[0].mxu0 %v1470
      %v1567 = vpop.f32.mrb[0].mxu0
      %v1568 = vadd.f32 0.0, %v1567
      %v1569 = vpop.f32.mrb[0].mxu0
      %v1570 = vpop.f32.mrb[0].mxu0
      %v1571 = vadd.f32 0.0, %v1570
      %v1572 = vpop.f32.mrb[0].mxu0
      %1573 = vmatprep.mubr.bf16.mxu0 0
      %1574 = vmatmul.mubr.bf16.gmra.mrb[0].mxu0 %v1471
      %v1575 = vpop.f32.mrb[0].mxu0
      %v1576 = vadd.f32 0.0, %v1575
      %v1577 = vpop.f32.mrb[0].mxu0
      %v1578 = vpop.f32.mrb[0].mxu0
      %v1579 = vadd.f32 0.0, %v1578
      %v1580 = vpop.f32.mrb[0].mxu0
      %1581 = vmatprep.mubr.bf16.mxu0 0
      %1582 = vmatmul.mubr.bf16.gmra.mrb[0].mxu0 %v1472
      %v1583 = vpop.f32.mrb[0].mxu0
      %v1584 = vadd.f32 0.0, %v1583
      %v1585 = vpop.f32.mrb[0].mxu0
      %v1586 = vpop.f32.mrb[0].mxu0
      %v1587 = vadd.f32 0.0, %v1586
      %v1588 = vpop.f32.mrb[0].mxu0
      %1589 = vdwg.mxu0
      %v1590 = vadd.f32 %v1380, %v1560
      %v1591 = vadd.f32 %v1381, %v1563
      %v1592 = vadd.f32 %v1382, %v1568
      %v1593 = vadd.f32 %v1383, %v1571
      %v1594 = vadd.f32 %v1384, %v1576
      %v1595 = vadd.f32 %v1385, %v1579
      %v1596 = vadd.f32 %v1386, %v1584
      %v1597 = vadd.f32 %v1387, %v1587
      %s1598 = sadd.s32 %s285, 2
      %s1599 = smul.u32 %s1598, 2
      %s1600 = smul.addr %s1599, 4
      %s1601 = scalar_lea.vmem %s263, %s1600
      %v1602 = vld [vmem:[%s1601] sm:$0xf]
      %v1603 = vld [vmem:[%s1601 + $0x8] sm:$0xf]
      %v1604 = vld [vmem:[%s1601 + $0x10] sm:$0xf]
      %v1605 = vld [vmem:[%s1601 + $0x18] sm:$0xf]
      %v1606 = vld [vmem:[%s1601 + $0x20] sm:$0xf]
      %v1607 = vld [vmem:[%s1601 + $0x28] sm:$0xf]
      %v1608 = vld [vmem:[%s1601 + $0x30] sm:$0xf]
      %v1609 = vld [vmem:[%s1601 + $0x38] sm:$0xf]
      %s1610 = scalar_lea.vmem %s1, 384
      %v1611 = vld [vmem:[%s1610] sm:$0xf]
      %v1612 = vld [vmem:[%s1610 + $0x4] sm:$0xf]
      %v1613 = vld [vmem:[%s1610 + $0x8] sm:$0xf]
      %v1614 = vld [vmem:[%s1610 + $0xc] sm:$0xf]
      %v1615 = vld [vmem:[%s1610 + $0x10] sm:$0xf]
      %v1616 = vld [vmem:[%s1610 + $0x14] sm:$0xf]
      %v1617 = vld [vmem:[%s1610 + $0x18] sm:$0xf]
      %v1618 = vld [vmem:[%s1610 + $0x1c] sm:$0xf]
      %v1619 = vld [vmem:[%s1610 + $0x20] sm:$0xf]
      %v1620 = vld [vmem:[%s1610 + $0x24] sm:$0xf]
      %v1621 = vld [vmem:[%s1610 + $0x28] sm:$0xf]
      %v1622 = vld [vmem:[%s1610 + $0x2c] sm:$0xf]
      %v1623 = vld [vmem:[%s1610 + $0x30] sm:$0xf]
      %v1624 = vld [vmem:[%s1610 + $0x34] sm:$0xf]
      %v1625 = vld [vmem:[%s1610 + $0x38] sm:$0xf]
      %v1626 = vld [vmem:[%s1610 + $0x3c] sm:$0xf]
      %v1635 = vunpack.c.l.b16 %v1602
      %v1636 = vunpack.c.l.b16 %v1603
      %v1637 = vunpack.c.l.b16 %v1604
      %v1638 = vunpack.c.l.b16 %v1605
      %v1639 = vunpack.c.l.b16 %v1606
      %v1640 = vunpack.c.l.b16 %v1607
      %v1641 = vunpack.c.l.b16 %v1608
      %v1642 = vunpack.c.l.b16 %v1609
      %v1643 = vpack.c.b16 %v1636, %v1635
      %v1644 = vpack.c.b16 %v1638, %v1637
      %v1645 = vpack.c.b16 %v1640, %v1639
      %v1646 = vpack.c.b16 %v1642, %v1641
      %v1667 = vunpack.c.l.b16 %v1611
      %v1668 = vunpack.c.l.b16 %v1612
      %v1669 = vunpack.c.l.b16 %v1613
      %v1670 = vunpack.c.l.b16 %v1614
      %v1671 = vunpack.c.l.b16 %v1615
      %v1672 = vunpack.c.l.b16 %v1616
      %v1673 = vunpack.c.l.b16 %v1617
      %v1674 = vunpack.c.l.b16 %v1618
      %v1675 = vunpack.c.l.b16 %v1619
      %v1676 = vunpack.c.l.b16 %v1620
      %v1677 = vunpack.c.l.b16 %v1621
      %v1678 = vunpack.c.l.b16 %v1622
      %v1679 = vunpack.c.l.b16 %v1623
      %v1680 = vunpack.c.l.b16 %v1624
      %v1681 = vunpack.c.l.b16 %v1625
      %v1682 = vunpack.c.l.b16 %v1626
      %v1683 = vpack.c.b16 %v1668, %v1667
      %v1684 = vpack.c.b16 %v1670, %v1669
      %v1685 = vpack.c.b16 %v1672, %v1671
      %v1686 = vpack.c.b16 %v1674, %v1673
      %v1687 = vpack.c.b16 %v1676, %v1675
      %v1688 = vpack.c.b16 %v1678, %v1677
      %v1689 = vpack.c.b16 %v1680, %v1679
      %v1690 = vpack.c.b16 %v1682, %v1681
      %1699 = vmatprep.subr.bf16.mxu0 0
      %1700 = vmatpush1.bf16.msra.mxu0 %v1683
      %1701 = vmatprep.subr.bf16.mxu0 0
      %1702 = vmatpush1.bf16.msra.mxu0 %v1684
      %1703 = vmatprep.subr.bf16.mxu0 0
      %1704 = vmatpush1.bf16.msra.mxu0 %v1685
      %1705 = vmatprep.subr.bf16.mxu0 0
      %1706 = vmatpush1.bf16.msra.mxu0 %v1686
      %1707 = vmatprep.subr.bf16.mxu0 0
      %1708 = vmatpush1.bf16.msra.mxu0 %v1687
      %1709 = vmatprep.subr.bf16.mxu0 0
      %1710 = vmatpush1.bf16.msra.mxu0 %v1688
      %1711 = vmatprep.subr.bf16.mxu0 0
      %1712 = vmatpush1.bf16.msra.mxu0 %v1689
      %1713 = vmatprep.subr.bf16.mxu0 0
      %1714 = vmatpush1.bf16.msra.mxu0 %v1690
      %1715 = vmatprep.subr.bf16.mxu0 0
      %1716 = vmatpush1.bf16.msra.mxu0 0
      %1717 = vmatprep.subr.bf16.mxu0 0
      %1718 = vmatpush1.bf16.msra.mxu0 0
      %1719 = vmatprep.subr.bf16.mxu0 0
      %1720 = vmatpush1.bf16.msra.mxu0 0
      %1721 = vmatprep.subr.bf16.mxu0 0
      %1722 = vmatpush1.bf16.msra.mxu0 0
      %1723 = vmatprep.subr.bf16.mxu0 0
      %1724 = vmatpush1.bf16.msra.mxu0 0
      %1725 = vmatprep.subr.bf16.mxu0 0
      %1726 = vmatpush1.bf16.msra.mxu0 0
      %1727 = vmatprep.subr.bf16.mxu0 0
      %1728 = vmatpush1.bf16.msra.mxu0 0
      %1729 = vmatprep.subr.bf16.mxu0 0
      %1730 = vmatpush1.bf16.msra.mxu0 0
      %1731 = vmatprep.mubr.bf16.mxu0 0
      %1732 = vmatmul.mubr.bf16.gmra.mrb[0].mxu0 %v1643
      %v1733 = vpop.f32.mrb[0].mxu0
      %v1734 = vadd.f32 0.0, %v1733
      %v1735 = vpop.f32.mrb[0].mxu0
      %v1736 = vpop.f32.mrb[0].mxu0
      %v1737 = vadd.f32 0.0, %v1736
      %v1738 = vpop.f32.mrb[0].mxu0
      %1739 = vmatprep.mubr.bf16.mxu0 0
      %1740 = vmatmul.mubr.bf16.gmra.mrb[0].mxu0 %v1644
      %v1741 = vpop.f32.mrb[0].mxu0
      %v1742 = vadd.f32 0.0, %v1741
      %v1743 = vpop.f32.mrb[0].mxu0
      %v1744 = vpop.f32.mrb[0].mxu0
      %v1745 = vadd.f32 0.0, %v1744
      %v1746 = vpop.f32.mrb[0].mxu0
      %1747 = vmatprep.mubr.bf16.mxu0 0
      %1748 = vmatmul.mubr.bf16.gmra.mrb[0].mxu0 %v1645
      %v1749 = vpop.f32.mrb[0].mxu0
      %v1750 = vadd.f32 0.0, %v1749
      %v1751 = vpop.f32.mrb[0].mxu0
      %v1752 = vpop.f32.mrb[0].mxu0
      %v1753 = vadd.f32 0.0, %v1752
      %v1754 = vpop.f32.mrb[0].mxu0
      %1755 = vmatprep.mubr.bf16.mxu0 0
      %1756 = vmatmul.mubr.bf16.gmra.mrb[0].mxu0 %v1646
      %v1757 = vpop.f32.mrb[0].mxu0
      %v1758 = vadd.f32 0.0, %v1757
      %v1759 = vpop.f32.mrb[0].mxu0
      %v1760 = vpop.f32.mrb[0].mxu0
      %v1761 = vadd.f32 0.0, %v1760
      %v1762 = vpop.f32.mrb[0].mxu0
      %1763 = vdwg.mxu0
      %v1764 = vadd.f32 %v1590, %v1734
      %v1765 = vadd.f32 %v1591, %v1737
      %v1766 = vadd.f32 %v1592, %v1742
      %v1767 = vadd.f32 %v1593, %v1745
      %v1768 = vadd.f32 %v1594, %v1750
      %v1769 = vadd.f32 %v1595, %v1753
      %v1770 = vadd.f32 %v1596, %v1758
      %v1771 = vadd.f32 %v1597, %v1761
      %v1772 = vld [vmem:[%s1601] sm:$0xf]
      %v1773 = vld [vmem:[%s1601 + $0x4] sm:$0x1]
      %v1774 = vld [vmem:[%s1601 + $0x8] sm:$0xf]
      %v1775 = vld [vmem:[%s1601 + $0xc] sm:$0x1]
      %v1776 = vld [vmem:[%s1601 + $0x10] sm:$0xf]
      %v1777 = vld [vmem:[%s1601 + $0x14] sm:$0x1]
      %v1778 = vld [vmem:[%s1601 + $0x18] sm:$0xf]
      %v1779 = vld [vmem:[%s1601 + $0x1c] sm:$0x1]
      %v1780 = vld [vmem:[%s1601 + $0x20] sm:$0xf]
      %v1781 = vld [vmem:[%s1601 + $0x24] sm:$0x1]
      %v1782 = vld [vmem:[%s1601 + $0x28] sm:$0xf]
      %v1783 = vld [vmem:[%s1601 + $0x2c] sm:$0x1]
      %v1784 = vld [vmem:[%s1601 + $0x30] sm:$0xf]
      %v1785 = vld [vmem:[%s1601 + $0x34] sm:$0x1]
      %v1786 = vld [vmem:[%s1601 + $0x38] sm:$0xf]
      %v1787 = vld [vmem:[%s1601 + $0x3c] sm:$0x1]
      %v1789 = vshrl.u32 %v1772, 16
      %v1791 = vrot.slane %v1789, 4
      %v1792 = vshll.u32 %v1772, 16
      %v1794 = vrot.slane %v1792, 5
      %v1795 = vor.u32 %v1791, %v1794
      %v1796 = vrot.slane %v1795, 4
      %v1798 = vshll.u32 %v1773, 16
      %v1800 = vrot.slane %v1798, 5
      %v1801 = vsel %vm323, %v1796, %v1800
      %v1803 = vshrl.u32 %v1774, 16
      %v1805 = vrot.slane %v1803, 4
      %v1806 = vshll.u32 %v1774, 16
      %v1808 = vrot.slane %v1806, 5
      %v1809 = vor.u32 %v1805, %v1808
      %v1810 = vrot.slane %v1809, 4
      %v1812 = vshll.u32 %v1775, 16
      %v1814 = vrot.slane %v1812, 5
      %v1815 = vsel %vm323, %v1810, %v1814
      %v1817 = vshrl.u32 %v1776, 16
      %v1819 = vrot.slane %v1817, 4
      %v1820 = vshll.u32 %v1776, 16
      %v1822 = vrot.slane %v1820, 5
      %v1823 = vor.u32 %v1819, %v1822
      %v1824 = vrot.slane %v1823, 4
      %v1826 = vshll.u32 %v1777, 16
      %v1828 = vrot.slane %v1826, 5
      %v1829 = vsel %vm323, %v1824, %v1828
      %v1831 = vshrl.u32 %v1778, 16
      %v1833 = vrot.slane %v1831, 4
      %v1834 = vshll.u32 %v1778, 16
      %v1836 = vrot.slane %v1834, 5
      %v1837 = vor.u32 %v1833, %v1836
      %v1838 = vrot.slane %v1837, 4
      %v1840 = vshll.u32 %v1779, 16
      %v1842 = vrot.slane %v1840, 5
      %v1843 = vsel %vm323, %v1838, %v1842
      %v1845 = vshrl.u32 %v1780, 16
      %v1847 = vrot.slane %v1845, 4
      %v1848 = vshll.u32 %v1780, 16
      %v1850 = vrot.slane %v1848, 5
      %v1851 = vor.u32 %v1847, %v1850
      %v1852 = vrot.slane %v1851, 4
      %v1854 = vshll.u32 %v1781, 16
      %v1856 = vrot.slane %v1854, 5
      %v1857 = vsel %vm323, %v1852, %v1856
      %v1859 = vshrl.u32 %v1782, 16
      %v1861 = vrot.slane %v1859, 4
      %v1862 = vshll.u32 %v1782, 16
      %v1864 = vrot.slane %v1862, 5
      %v1865 = vor.u32 %v1861, %v1864
      %v1866 = vrot.slane %v1865, 4
      %v1868 = vshll.u32 %v1783, 16
      %v1870 = vrot.slane %v1868, 5
      %v1871 = vsel %vm323, %v1866, %v1870
      %v1873 = vshrl.u32 %v1784, 16
      %v1875 = vrot.slane %v1873, 4
      %v1876 = vshll.u32 %v1784, 16
      %v1878 = vrot.slane %v1876, 5
      %v1879 = vor.u32 %v1875, %v1878
      %v1880 = vrot.slane %v1879, 4
      %v1882 = vshll.u32 %v1785, 16
      %v1884 = vrot.slane %v1882, 5
      %v1885 = vsel %vm323, %v1880, %v1884
      %v1887 = vshrl.u32 %v1786, 16
      %v1889 = vrot.slane %v1887, 4
      %v1890 = vshll.u32 %v1786, 16
      %v1892 = vrot.slane %v1890, 5
      %v1893 = vor.u32 %v1889, %v1892
      %v1894 = vrot.slane %v1893, 4
      %v1896 = vshll.u32 %v1787, 16
      %v1898 = vrot.slane %v1896, 5
      %v1899 = vsel %vm323, %v1894, %v1898
      %s1900 = scalar_lea.vmem %s1, 448
      %v1901 = vld [vmem:[%s1900] sm:$0xf]
      %v1902 = vld [vmem:[%s1900 + $0x4] sm:$0xf]
      %v1903 = vld [vmem:[%s1900 + $0x8] sm:$0xf]
      %v1904 = vld [vmem:[%s1900 + $0xc] sm:$0xf]
      %v1905 = vld [vmem:[%s1900 + $0x10] sm:$0xf]
      %v1906 = vld [vmem:[%s1900 + $0x14] sm:$0xf]
      %v1907 = vld [vmem:[%s1900 + $0x18] sm:$0xf]
      %v1908 = vld [vmem:[%s1900 + $0x1c] sm:$0xf]
      %v1909 = vld [vmem:[%s1900 + $0x20] sm:$0xf]
      %v1910 = vld [vmem:[%s1900 + $0x24] sm:$0xf]
      %v1911 = vld [vmem:[%s1900 + $0x28] sm:$0xf]
      %v1912 = vld [vmem:[%s1900 + $0x2c] sm:$0xf]
      %v1913 = vld [vmem:[%s1900 + $0x30] sm:$0xf]
      %v1914 = vld [vmem:[%s1900 + $0x34] sm:$0xf]
      %v1915 = vld [vmem:[%s1900 + $0x38] sm:$0xf]
      %v1916 = vld [vmem:[%s1900 + $0x3c] sm:$0xf]
      %v1917 = vunpack.c.l.b16 %v1801
      %v1918 = vunpack.c.l.b16 %v1815
      %v1919 = vunpack.c.l.b16 %v1829
      %v1920 = vunpack.c.l.b16 %v1843
      %v1921 = vunpack.c.l.b16 %v1857
      %v1922 = vunpack.c.l.b16 %v1871
      %v1923 = vunpack.c.l.b16 %v1885
      %v1924 = vunpack.c.l.b16 %v1899
      %v1925 = vpack.c.b16 %v1918, %v1917
      %v1926 = vpack.c.b16 %v1920, %v1919
      %v1927 = vpack.c.b16 %v1922, %v1921
      %v1928 = vpack.c.b16 %v1924, %v1923
      %v1949 = vunpack.c.l.b16 %v1901
      %v1950 = vunpack.c.l.b16 %v1902
      %v1951 = vunpack.c.l.b16 %v1903
      %v1952 = vunpack.c.l.b16 %v1904
      %v1953 = vunpack.c.l.b16 %v1905
      %v1954 = vunpack.c.l.b16 %v1906
      %v1955 = vunpack.c.l.b16 %v1907
      %v1956 = vunpack.c.l.b16 %v1908
      %v1957 = vunpack.c.l.b16 %v1909
      %v1958 = vunpack.c.l.b16 %v1910
      %v1959 = vunpack.c.l.b16 %v1911
      %v1960 = vunpack.c.l.b16 %v1912
      %v1961 = vunpack.c.l.b16 %v1913
      %v1962 = vunpack.c.l.b16 %v1914
      %v1963 = vunpack.c.l.b16 %v1915
      %v1964 = vunpack.c.l.b16 %v1916
      %v1965 = vpack.c.b16 %v1950, %v1949
      %v1966 = vpack.c.b16 %v1952, %v1951
      %v1967 = vpack.c.b16 %v1954, %v1953
      %v1968 = vpack.c.b16 %v1956, %v1955
      %v1969 = vpack.c.b16 %v1958, %v1957
      %v1970 = vpack.c.b16 %v1960, %v1959
      %v1971 = vpack.c.b16 %v1962, %v1961
      %v1972 = vpack.c.b16 %v1964, %v1963
      %1981 = vmatprep.subr.bf16.mxu0 0
      %1982 = vmatpush1.bf16.msra.mxu0 %v1965
      %1983 = vmatprep.subr.bf16.mxu0 0
      %1984 = vmatpush1.bf16.msra.mxu0 %v1966
      %1985 = vmatprep.subr.bf16.mxu0 0
      %1986 = vmatpush1.bf16.msra.mxu0 %v1967
      %1987 = vmatprep.subr.bf16.mxu0 0
      %1988 = vmatpush1.bf16.msra.mxu0 %v1968
      %1989 = vmatprep.subr.bf16.mxu0 0
      %1990 = vmatpush1.bf16.msra.mxu0 %v1969
      %1991 = vmatprep.subr.bf16.mxu0 0
      %1992 = vmatpush1.bf16.msra.mxu0 %v1970
      %1993 = vmatprep.subr.bf16.mxu0 0
      %1994 = vmatpush1.bf16.msra.mxu0 %v1971
      %1995 = vmatprep.subr.bf16.mxu0 0
      %1996 = vmatpush1.bf16.msra.mxu0 %v1972
      %1997 = vmatprep.subr.bf16.mxu0 0
      %1998 = vmatpush1.bf16.msra.mxu0 0
      %1999 = vmatprep.subr.bf16.mxu0 0
      %2000 = vmatpush1.bf16.msra.mxu0 0
      %2001 = vmatprep.subr.bf16.mxu0 0
      %2002 = vmatpush1.bf16.msra.mxu0 0
      %2003 = vmatprep.subr.bf16.mxu0 0
      %2004 = vmatpush1.bf16.msra.mxu0 0
      %2005 = vmatprep.subr.bf16.mxu0 0
      %2006 = vmatpush1.bf16.msra.mxu0 0
      %2007 = vmatprep.subr.bf16.mxu0 0
      %2008 = vmatpush1.bf16.msra.mxu0 0
      %2009 = vmatprep.subr.bf16.mxu0 0
      %2010 = vmatpush1.bf16.msra.mxu0 0
      %2011 = vmatprep.subr.bf16.mxu0 0
      %2012 = vmatpush1.bf16.msra.mxu0 0
      %2013 = vmatprep.mubr.bf16.mxu0 0
      %2014 = vmatmul.mubr.bf16.gmra.mrb[0].mxu0 %v1925
      %v2015 = vpop.f32.mrb[0].mxu0
      %v2016 = vadd.f32 0.0, %v2015
      %v2017 = vpop.f32.mrb[0].mxu0
      %v2018 = vpop.f32.mrb[0].mxu0
      %v2019 = vadd.f32 0.0, %v2018
      %v2020 = vpop.f32.mrb[0].mxu0
      %2021 = vmatprep.mubr.bf16.mxu0 0
      %2022 = vmatmul.mubr.bf16.gmra.mrb[0].mxu0 %v1926
      %v2023 = vpop.f32.mrb[0].mxu0
      %v2024 = vadd.f32 0.0, %v2023
      %v2025 = vpop.f32.mrb[0].mxu0
      %v2026 = vpop.f32.mrb[0].mxu0
      %v2027 = vadd.f32 0.0, %v2026
      %v2028 = vpop.f32.mrb[0].mxu0
      %2029 = vmatprep.mubr.bf16.mxu0 0
      %2030 = vmatmul.mubr.bf16.gmra.mrb[0].mxu0 %v1927
      %v2031 = vpop.f32.mrb[0].mxu0
      %v2032 = vadd.f32 0.0, %v2031
      %v2033 = vpop.f32.mrb[0].mxu0
      %v2034 = vpop.f32.mrb[0].mxu0
      %v2035 = vadd.f32 0.0, %v2034
      %v2036 = vpop.f32.mrb[0].mxu0
      %2037 = vmatprep.mubr.bf16.mxu0 0
      %2038 = vmatmul.mubr.bf16.gmra.mrb[0].mxu0 %v1928
      %v2039 = vpop.f32.mrb[0].mxu0
      %v2040 = vadd.f32 0.0, %v2039
      %v2041 = vpop.f32.mrb[0].mxu0
      %v2042 = vpop.f32.mrb[0].mxu0
      %v2043 = vadd.f32 0.0, %v2042
      %v2044 = vpop.f32.mrb[0].mxu0
      %2045 = vdwg.mxu0
      %v2046 = vadd.f32 %v1764, %v2016
      %v2047 = vadd.f32 %v1765, %v2019
      %v2048 = vadd.f32 %v1766, %v2024
      %v2049 = vadd.f32 %v1767, %v2027
      %v2050 = vadd.f32 %v1768, %v2032
      %v2051 = vadd.f32 %v1769, %v2035
      %v2052 = vadd.f32 %v1770, %v2040
      %v2053 = vadd.f32 %v1771, %v2043
      %v2054 = vld [vmem:[%s1601] sm:$0xe]
      %v2055 = vld [vmem:[%s1601 + $0x8] sm:$0xe]
      %v2056 = vld [vmem:[%s1601 + $0x10] sm:$0xe]
      %v2057 = vld [vmem:[%s1601 + $0x18] sm:$0xe]
      %v2058 = vld [vmem:[%s1601 + $0x20] sm:$0xe]
      %v2059 = vld [vmem:[%s1601 + $0x28] sm:$0xe]
      %v2060 = vld [vmem:[%s1601 + $0x30] sm:$0xe]
      %v2061 = vld [vmem:[%s1601 + $0x38] sm:$0xe]
      %v2078 = vrot.slane %v2054, 5
      %v2079 = vrot.slane %v2078, 4
      %v2080 = vrot.slane %v1773, 5
      %v2081 = vsel %vm745, %v2079, %v2080
      %v2082 = vrot.slane %v2055, 5
      %v2083 = vrot.slane %v2082, 4
      %v2084 = vrot.slane %v1775, 5
      %v2085 = vsel %vm745, %v2083, %v2084
      %v2086 = vrot.slane %v2056, 5
      %v2087 = vrot.slane %v2086, 4
      %v2088 = vrot.slane %v1777, 5
      %v2089 = vsel %vm745, %v2087, %v2088
      %v2090 = vrot.slane %v2057, 5
      %v2091 = vrot.slane %v2090, 4
      %v2092 = vrot.slane %v1779, 5
      %v2093 = vsel %vm745, %v2091, %v2092
      %v2094 = vrot.slane %v2058, 5
      %v2095 = vrot.slane %v2094, 4
      %v2096 = vrot.slane %v1781, 5
      %v2097 = vsel %vm745, %v2095, %v2096
      %v2098 = vrot.slane %v2059, 5
      %v2099 = vrot.slane %v2098, 4
      %v2100 = vrot.slane %v1783, 5
      %v2101 = vsel %vm745, %v2099, %v2100
      %v2102 = vrot.slane %v2060, 5
      %v2103 = vrot.slane %v2102, 4
      %v2104 = vrot.slane %v1785, 5
      %v2105 = vsel %vm745, %v2103, %v2104
      %v2106 = vrot.slane %v2061, 5
      %v2107 = vrot.slane %v2106, 4
      %v2108 = vrot.slane %v1787, 5
      %v2109 = vsel %vm745, %v2107, %v2108
      %s2110 = scalar_lea.vmem %s1, 512
      %v2111 = vld [vmem:[%s2110] sm:$0xf]
      %v2112 = vld [vmem:[%s2110 + $0x4] sm:$0xf]
      %v2113 = vld [vmem:[%s2110 + $0x8] sm:$0xf]
      %v2114 = vld [vmem:[%s2110 + $0xc] sm:$0xf]
      %v2115 = vld [vmem:[%s2110 + $0x10] sm:$0xf]
      %v2116 = vld [vmem:[%s2110 + $0x14] sm:$0xf]
      %v2117 = vld [vmem:[%s2110 + $0x18] sm:$0xf]
      %v2118 = vld [vmem:[%s2110 + $0x1c] sm:$0xf]
      %v2119 = vld [vmem:[%s2110 + $0x20] sm:$0xf]
      %v2120 = vld [vmem:[%s2110 + $0x24] sm:$0xf]
      %v2121 = vld [vmem:[%s2110 + $0x28] sm:$0xf]
      %v2122 = vld [vmem:[%s2110 + $0x2c] sm:$0xf]
      %v2123 = vld [vmem:[%s2110 + $0x30] sm:$0xf]
      %v2124 = vld [vmem:[%s2110 + $0x34] sm:$0xf]
      %v2125 = vld [vmem:[%s2110 + $0x38] sm:$0xf]
      %v2126 = vld [vmem:[%s2110 + $0x3c] sm:$0xf]
      %v2127 = vunpack.c.l.b16 %v2081
      %v2128 = vunpack.c.l.b16 %v2085
      %v2129 = vunpack.c.l.b16 %v2089
      %v2130 = vunpack.c.l.b16 %v2093
      %v2131 = vunpack.c.l.b16 %v2097
      %v2132 = vunpack.c.l.b16 %v2101
      %v2133 = vunpack.c.l.b16 %v2105
      %v2134 = vunpack.c.l.b16 %v2109
      %v2135 = vpack.c.b16 %v2128, %v2127
      %v2136 = vpack.c.b16 %v2130, %v2129
      %v2137 = vpack.c.b16 %v2132, %v2131
      %v2138 = vpack.c.b16 %v2134, %v2133
      %v2159 = vunpack.c.l.b16 %v2111
      %v2160 = vunpack.c.l.b16 %v2112
      %v2161 = vunpack.c.l.b16 %v2113
      %v2162 = vunpack.c.l.b16 %v2114
      %v2163 = vunpack.c.l.b16 %v2115
      %v2164 = vunpack.c.l.b16 %v2116
      %v2165 = vunpack.c.l.b16 %v2117
      %v2166 = vunpack.c.l.b16 %v2118
      %v2167 = vunpack.c.l.b16 %v2119
      %v2168 = vunpack.c.l.b16 %v2120
      %v2169 = vunpack.c.l.b16 %v2121
      %v2170 = vunpack.c.l.b16 %v2122
      %v2171 = vunpack.c.l.b16 %v2123
      %v2172 = vunpack.c.l.b16 %v2124
      %v2173 = vunpack.c.l.b16 %v2125
      %v2174 = vunpack.c.l.b16 %v2126
      %v2175 = vpack.c.b16 %v2160, %v2159
      %v2176 = vpack.c.b16 %v2162, %v2161
      %v2177 = vpack.c.b16 %v2164, %v2163
      %v2178 = vpack.c.b16 %v2166, %v2165
      %v2179 = vpack.c.b16 %v2168, %v2167
      %v2180 = vpack.c.b16 %v2170, %v2169
      %v2181 = vpack.c.b16 %v2172, %v2171
      %v2182 = vpack.c.b16 %v2174, %v2173
      %2191 = vmatprep.subr.bf16.mxu0 0
      %2192 = vmatpush1.bf16.msra.mxu0 %v2175
      %2193 = vmatprep.subr.bf16.mxu0 0
      %2194 = vmatpush1.bf16.msra.mxu0 %v2176
      %2195 = vmatprep.subr.bf16.mxu0 0
      %2196 = vmatpush1.bf16.msra.mxu0 %v2177
      %2197 = vmatprep.subr.bf16.mxu0 0
      %2198 = vmatpush1.bf16.msra.mxu0 %v2178
      %2199 = vmatprep.subr.bf16.mxu0 0
      %2200 = vmatpush1.bf16.msra.mxu0 %v2179
      %2201 = vmatprep.subr.bf16.mxu0 0
      %2202 = vmatpush1.bf16.msra.mxu0 %v2180
      %2203 = vmatprep.subr.bf16.mxu0 0
      %2204 = vmatpush1.bf16.msra.mxu0 %v2181
      %2205 = vmatprep.subr.bf16.mxu0 0
      %2206 = vmatpush1.bf16.msra.mxu0 %v2182
      %2207 = vmatprep.subr.bf16.mxu0 0
      %2208 = vmatpush1.bf16.msra.mxu0 0
      %2209 = vmatprep.subr.bf16.mxu0 0
      %2210 = vmatpush1.bf16.msra.mxu0 0
      %2211 = vmatprep.subr.bf16.mxu0 0
      %2212 = vmatpush1.bf16.msra.mxu0 0
      %2213 = vmatprep.subr.bf16.mxu0 0
      %2214 = vmatpush1.bf16.msra.mxu0 0
      %2215 = vmatprep.subr.bf16.mxu0 0
      %2216 = vmatpush1.bf16.msra.mxu0 0
      %2217 = vmatprep.subr.bf16.mxu0 0
      %2218 = vmatpush1.bf16.msra.mxu0 0
      %2219 = vmatprep.subr.bf16.mxu0 0
      %2220 = vmatpush1.bf16.msra.mxu0 0
      %2221 = vmatprep.subr.bf16.mxu0 0
      %2222 = vmatpush1.bf16.msra.mxu0 0
      %2223 = vmatprep.mubr.bf16.mxu0 0
      %2224 = vmatmul.mubr.bf16.gmra.mrb[0].mxu0 %v2135
      %v2225 = vpop.f32.mrb[0].mxu0
      %v2226 = vadd.f32 0.0, %v2225
      %v2227 = vpop.f32.mrb[0].mxu0
      %v2228 = vpop.f32.mrb[0].mxu0
      %v2229 = vadd.f32 0.0, %v2228
      %v2230 = vpop.f32.mrb[0].mxu0
      %2231 = vmatprep.mubr.bf16.mxu0 0
      %2232 = vmatmul.mubr.bf16.gmra.mrb[0].mxu0 %v2136
      %v2233 = vpop.f32.mrb[0].mxu0
      %v2234 = vadd.f32 0.0, %v2233
      %v2235 = vpop.f32.mrb[0].mxu0
      %v2236 = vpop.f32.mrb[0].mxu0
      %v2237 = vadd.f32 0.0, %v2236
      %v2238 = vpop.f32.mrb[0].mxu0
      %2239 = vmatprep.mubr.bf16.mxu0 0
      %2240 = vmatmul.mubr.bf16.gmra.mrb[0].mxu0 %v2137
      %v2241 = vpop.f32.mrb[0].mxu0
      %v2242 = vadd.f32 0.0, %v2241
      %v2243 = vpop.f32.mrb[0].mxu0
      %v2244 = vpop.f32.mrb[0].mxu0
      %v2245 = vadd.f32 0.0, %v2244
      %v2246 = vpop.f32.mrb[0].mxu0
      %2247 = vmatprep.mubr.bf16.mxu0 0
      %2248 = vmatmul.mubr.bf16.gmra.mrb[0].mxu0 %v2138
      %v2249 = vpop.f32.mrb[0].mxu0
      %v2250 = vadd.f32 0.0, %v2249
      %v2251 = vpop.f32.mrb[0].mxu0
      %v2252 = vpop.f32.mrb[0].mxu0
      %v2253 = vadd.f32 0.0, %v2252
      %v2254 = vpop.f32.mrb[0].mxu0
      %2255 = vdwg.mxu0
      %v2256 = vadd.f32 %v2046, %v2226
      %v2257 = vadd.f32 %v2047, %v2229
      %v2258 = vadd.f32 %v2048, %v2234
      %v2259 = vadd.f32 %v2049, %v2237
      %v2260 = vadd.f32 %v2050, %v2242
      %v2261 = vadd.f32 %v2051, %v2245
      %v2262 = vadd.f32 %v2052, %v2250
      %v2263 = vadd.f32 %v2053, %v2253
      %v2264 = vld [vmem:[%s272] sm:$0xf]
      %v2265 = vld [vmem:[%s272 + $0x4] sm:$0xf]
      %v2266 = vld [vmem:[%s272 + $0x8] sm:$0xf]
      %v2267 = vld [vmem:[%s272 + $0xc] sm:$0xf]
      %v2268 = vld [vmem:[%s272 + $0x10] sm:$0xf]
      %v2269 = vld [vmem:[%s272 + $0x14] sm:$0xf]
      %v2270 = vld [vmem:[%s272 + $0x18] sm:$0xf]
      %v2271 = vld [vmem:[%s272 + $0x1c] sm:$0xf]
      %v2272 = vld [vmem:[%s4] sm:$0xf]
      %v2281 = vunpack.c.l.b16 %v2264
      %v2282 = vunpack.c.l.b16 %v2265
      %v2283 = vunpack.c.l.b16 %v2266
      %v2284 = vunpack.c.l.b16 %v2267
      %v2285 = vunpack.c.l.b16 %v2268
      %v2286 = vunpack.c.l.b16 %v2269
      %v2287 = vunpack.c.l.b16 %v2270
      %v2288 = vunpack.c.l.b16 %v2271
      %v2289 = vpack.c.b16 %v2282, %v2281
      %v2290 = vpack.c.b16 %v2284, %v2283
      %v2291 = vpack.c.b16 %v2286, %v2285
      %v2292 = vpack.c.b16 %v2288, %v2287
      %vm2293 = vcmask 64512
      %v2295 = vsel %vm2293, %v2289, 0
      %v2298 = vsel %vm2293, %v2290, 0
      %v2301 = vsel %vm2293, %v2291, 0
      %v2304 = vsel %vm2293, %v2292, 0
      %vm2306 = vcmask 1043456
      %v2308 = vsel %vm2306, %v2272, 0
      %2310 = vmatprep.subr.bf16.mxu0 0
      %2311 = vmatpush1.bf16.msra.mxu0 %v2308
      %2312 = vmatprep.subr.bf16.mxu0 0
      %2313 = vmatpush1.bf16.msra.mxu0 0
      %2314 = vmatprep.subr.bf16.mxu0 0
      %2315 = vmatpush1.bf16.msra.mxu0 0
      %2316 = vmatprep.subr.bf16.mxu0 0
      %2317 = vmatpush1.bf16.msra.mxu0 0
      %2318 = vmatprep.subr.bf16.mxu0 0
      %2319 = vmatpush1.bf16.msra.mxu0 0
      %2320 = vmatprep.subr.bf16.mxu0 0
      %2321 = vmatpush1.bf16.msra.mxu0 0
      %2322 = vmatprep.subr.bf16.mxu0 0
      %2323 = vmatpush1.bf16.msra.mxu0 0
      %2324 = vmatprep.subr.bf16.mxu0 0
      %2325 = vmatpush1.bf16.msra.mxu0 0
      %2326 = vmatprep.subr.bf16.mxu0 0
      %2327 = vmatpush1.bf16.msra.mxu0 0
      %2328 = vmatprep.subr.bf16.mxu0 0
      %2329 = vmatpush1.bf16.msra.mxu0 0
      %2330 = vmatprep.subr.bf16.mxu0 0
      %2331 = vmatpush1.bf16.msra.mxu0 0
      %2332 = vmatprep.subr.bf16.mxu0 0
      %2333 = vmatpush1.bf16.msra.mxu0 0
      %2334 = vmatprep.subr.bf16.mxu0 0
      %2335 = vmatpush1.bf16.msra.mxu0 0
      %2336 = vmatprep.subr.bf16.mxu0 0
      %2337 = vmatpush1.bf16.msra.mxu0 0
      %2338 = vmatprep.subr.bf16.mxu0 0
      %2339 = vmatpush1.bf16.msra.mxu0 0
      %2340 = vmatprep.subr.bf16.mxu0 0
      %2341 = vmatpush1.bf16.msra.mxu0 0
      %2342 = vmatprep.mubr.bf16.mxu0 0
      %2343 = vmatmul.mubr.bf16.gmra.mrb[0].mxu0 %v2295
      %v2344 = vpop.f32.mrb[0].mxu0
      %v2345 = vadd.f32 0.0, %v2344
      %v2346 = vpop.f32.mrb[0].mxu0
      %v2347 = vpop.f32.mrb[0].mxu0
      %v2348 = vadd.f32 0.0, %v2347
      %v2349 = vpop.f32.mrb[0].mxu0
      %2350 = vmatprep.mubr.bf16.mxu0 0
      %2351 = vmatmul.mubr.bf16.gmra.mrb[0].mxu0 %v2298
      %v2352 = vpop.f32.mrb[0].mxu0
      %v2353 = vadd.f32 0.0, %v2352
      %v2354 = vpop.f32.mrb[0].mxu0
      %v2355 = vpop.f32.mrb[0].mxu0
      %v2356 = vadd.f32 0.0, %v2355
      %v2357 = vpop.f32.mrb[0].mxu0
      %2358 = vmatprep.mubr.bf16.mxu0 0
      %2359 = vmatmul.mubr.bf16.gmra.mrb[0].mxu0 %v2301
      %v2360 = vpop.f32.mrb[0].mxu0
      %v2361 = vadd.f32 0.0, %v2360
      %v2362 = vpop.f32.mrb[0].mxu0
      %v2363 = vpop.f32.mrb[0].mxu0
      %v2364 = vadd.f32 0.0, %v2363
      %v2365 = vpop.f32.mrb[0].mxu0
      %2366 = vmatprep.mubr.bf16.mxu0 0
      %2367 = vmatmul.mubr.bf16.gmra.mrb[0].mxu0 %v2304
      %v2368 = vpop.f32.mrb[0].mxu0
      %v2369 = vadd.f32 0.0, %v2368
      %v2370 = vpop.f32.mrb[0].mxu0
      %v2371 = vpop.f32.mrb[0].mxu0
      %v2372 = vadd.f32 0.0, %v2371
      %v2373 = vpop.f32.mrb[0].mxu0
      %2374 = vdwg.mxu0
      %v2375 = vadd.f32 %v2256, %v2345
      %v2376 = vadd.f32 %v2257, %v2348
      %v2377 = vadd.f32 %v2258, %v2353
      %v2378 = vadd.f32 %v2259, %v2356
      %v2379 = vadd.f32 %v2260, %v2361
      %v2380 = vadd.f32 %v2261, %v2364
      %v2381 = vadd.f32 %v2262, %v2369
      %v2382 = vadd.f32 %v2263, %v2372
      %v2383 = vld [vmem:[%s2] sm:$0x1]
      %v2385 = vlaneseq
      %v2386 = vshrl.u32 %v2385, 7
      %v2387 = vsub.s32 0, %v2386
      %v2388 = vrot.slane %v2383, %v2387
      %v2390 = vadd.f32 %v2375, %v2388
      %v2391 = vadd.f32 %v2376, %v2388
      %v2392 = vadd.f32 %v2377, %v2388
      %v2393 = vadd.f32 %v2378, %v2388
      %v2394 = vadd.f32 %v2379, %v2388
      %v2395 = vadd.f32 %v2380, %v2388
      %v2396 = vadd.f32 %v2381, %v2388
      %v2397 = vadd.f32 %v2382, %v2388
      %v2398 = vmax.f32 %v2390, 0.0
      %v2399 = vmax.f32 %v2391, 0.0
      %v2400 = vmax.f32 %v2392, 0.0
      %v2401 = vmax.f32 %v2393, 0.0
      %v2402 = vmax.f32 %v2394, 0.0
      %v2403 = vmax.f32 %v2395, 0.0
      %v2404 = vmax.f32 %v2396, 0.0
      %v2405 = vmax.f32 %v2397, 0.0
      %2406 = vst [vmem:[%s282] sm:$0xff] %v2398
      %2407 = vst [vmem:[%s282 + $0x8] sm:$0xff] %v2399
      %2408 = vst [vmem:[%s282 + $0x10] sm:$0xff] %v2400
      %2409 = vst [vmem:[%s282 + $0x18] sm:$0xff] %v2401
      %2410 = vst [vmem:[%s282 + $0x20] sm:$0xff] %v2402
      %2411 = vst [vmem:[%s282 + $0x28] sm:$0xff] %v2403
      %2412 = vst [vmem:[%s282 + $0x30] sm:$0xff] %v2404
      %2413 = vst [vmem:[%s282 + $0x38] sm:$0xff] %v2405
      %s2414 = smul.u32 8, %s21
      %p2415 = scmp.lt.s32.totalorder %s20, 1
      %s2416 = scalar_select %p2415, %s20, 1
      %p2417 = scmp.lt.s32.totalorder %s2414, 7
      %s2418 = scalar_select %p2417, %s2414, 7
      %s2419 = smul.addr %s2416, 8
      %s2420 = sadd.s32 %s2418, %s2419
      %s2421 = smul.addr %s2420, 8
      %s2422 = scalar_lea.vmem %s5, %s2421
      // Predicated region
      $region41: #{resnet_block_forward.3} parent=39 // pred_check
        %p2423 = pneg %p165
      $region42: #{resnet_block_forward.3} parent=39 // pred_check_branch
        %2425 = sbr.rel (%p2423) target = $region44
      $region43: #{resnet_block_forward.3} parent=39 // pred_region
        %s2426 = smul.u32 8, %s21
      $region44: #{resnet_block_forward.3} parent=39 // pred_fallthru
        _
    $region40: #{resnet_block_forward.3} parent=5 // pred_fallthru
      _
    %p2427 = scmp.le.s32.totalorder 2, %s11
    // Predicated region
    $region45: #{resnet_block_forward.3} parent=5 // pred_check
      %p2428 = pneg %p2427
    $region46: #{resnet_block_forward.3} parent=5 // pred_check_branch
      %2430 = sbr.rel (%p2428) target = $region48
    $region47: #{resnet_block_forward.3} parent=5 // pred_region
      %s2431 = ssub.s32 %s11, 2
      // Predicated region
      $region49: #{resnet_block_forward.3} parent=47 // pred_check
        %p2432 = pneg %p171
      $region50: #{resnet_block_forward.3} parent=47 // pred_check_branch
        %2434 = sbr.rel (%p2432) target = $region52
      $region51: #{resnet_block_forward.3} parent=47 // pred_region
        %s2435 = smul.u32 8, %s23
        %p2436 = scmp.lt.s32.totalorder %s22, 1
        %s2437 = scalar_select %p2436, %s22, 1
        %p2438 = scmp.lt.s32.totalorder %s2435, 7
        %s2439 = scalar_select %p2438, %s2435, 7
        %s2440 = smul.addr %s2437, 8
        %s2441 = sadd.s32 %s2439, %s2440
        %s2442 = smul.addr %s2441, 8
        %s2443 = scalar_lea.vmem %s5, %s2442
      $region52: #{resnet_block_forward.3} parent=47 // pred_fallthru
        _
    $region48: #{resnet_block_forward.3} parent=5 // pred_fallthru
      _
  $region6: #{resnet_block_forward.3} parent=0 // loop_footer
    %s15 = sadd.s32 1, %s11
  $region7: #{resnet_block_forward.3} parent=0 // loop_footer_branch
    %10 = sbr.rel target = $region3
  $region8: #{resnet_block_forward.3} parent=0 // loop_exit
    _

</llo_original>
